<compile_context>
chip_gen: v7x
topology: tpu7x:2x2x1
jax: 0.10.0
libtpu: 0.0.40
codegen_flags: <defaults>
</compile_context>

<pallas_src>
import jax
import jax.numpy as jnp
from jax.experimental import pallas as pl
from jax.experimental.pallas import tpu as pltpu

NODE_FEATURES = 5            # norm1 = GraphNorm(node_features + 4) must equal 9
HIDDEN = 2                   # GRU hidden size
SEQ = 4                      # x[:, :4] -> sequence length 4
GCN_IN = NODE_FEATURES + 4   # 9
GCN_OUT = 8
EPS = 1e-5
LEAKY_SLOPE = 0.01
N_PAD = 128                  # nodes padded to the 128-lane axis
GB = 8                       # graphs per grid step

# ---- scalar parameter vector layout (SMEM, f32[130]) ----
_OFF_WIH = 0                 # GRU W_ih[:, 0]          (6)
_OFF_WHH0 = 6                # GRU W_hh[:, 0]          (6)
_OFF_WHH1 = 12               # GRU W_hh[:, 1]          (6)
_OFF_BIH = 18                # GRU b_ih                (6)
_OFF_BHH = 24                # GRU b_hh                (6)
_OFF_GN1W = 30               # GraphNorm1 weight       (9)
_OFF_GN1B = 39               # GraphNorm1 bias         (9)
_OFF_GN1A = 48               # GraphNorm1 mean_scale   (9)
_OFF_WGCN = 57               # W_gcn row-major [9, 8]  (72)
_OFF_BFC = 129               # fc1 bias                (1)
N_SCALARS = 130

# ---- lane-replicated column-parameter slab rows (VMEM f32[40, 128]) ----
_ROW_BGCN = 0
_ROW_GN2W = 8
_ROW_GN2B = 16
_ROW_GN2A = 24
_ROW_WFC = 32
CP_ROWS = 40


def gru_gcn_kernel(sp_ref,                     # SMEM f32[130] scalar params
                   x_ref,                      # VMEM f32[5, GB, N_PAD] feature-major
                   adj_ref,                    # VMEM bf16[GB, N_PAD, N_PAD]  (A^T)
                   maskn_ref,                  # VMEM f32[GB, N_PAD]  (1/n on real lanes)
                   cp_ref,                     # VMEM f32[40, N_PAD] lane-replicated params
                   out_ref):                   # VMEM f32[GB, N_PAD]
    gb = out_ref.shape[0]
    npad = out_ref.shape[1]

    maskn = maskn_ref[...]                     # [GB, N_PAD]

    def sp(i):                                 # SMEM scalar read
        return sp_ref[i]

    def leaky(v):
        return jnp.where(v > 0, v, LEAKY_SLOPE * v)

    # ---- GRU over the first 4 features, vectorized over the GB graphs ----
    # gates ordered [r, z, n]; input_size=1, hidden_size=2 -> pure scalar FMAs.
    h0 = jnp.zeros((gb, npad), jnp.float32)
    h1 = jnp.zeros((gb, npad), jnp.float32)
    feats = []
    for t in range(SEQ):                       # static unrolled trip count
        xr = x_ref[t]                          # [GB, N_PAD]
        gi = [sp(_OFF_WIH + k) * xr + sp(_OFF_BIH + k) for k in range(6)]
        gh = [sp(_OFF_WHH0 + k) * h0 + sp(_OFF_WHH1 + k) * h1 + sp(_OFF_BHH + k)
              for k in range(6)]
        r0 = jax.nn.sigmoid(gi[0] + gh[0])
        r1 = jax.nn.sigmoid(gi[1] + gh[1])
        z0 = jax.nn.sigmoid(gi[2] + gh[2])
        z1 = jax.nn.sigmoid(gi[3] + gh[3])
        n0 = jnp.tanh(gi[4] + r0 * gh[4])
        n1 = jnp.tanh(gi[5] + r1 * gh[5])
        h0 = (1.0 - z0) * n0 + z0 * h0
        h1 = (1.0 - z1) * n1 + z1 * h1
        feats += [h0, h1]
    feats.append(x_ref[SEQ])                   # appended raw x[:, -1]
    # feats: 9 "feature rows", each [GB, N_PAD], kept in registers (no scratch).

    # ---- GraphNorm1 (masked to real nodes) + leaky_relu, vectorized over graphs ----
    x1n = []
    for f in range(GCN_IN):
        v = feats[f]
        mean = jnp.sum(v * maskn, axis=1, keepdims=True)       # [GB, 1]
        c = v - sp(_OFF_GN1A + f) * mean
        var = jnp.sum(c * c * maskn, axis=1, keepdims=True)
        vn = sp(_OFF_GN1W + f) * (c * jax.lax.rsqrt(var + EPS)) + sp(_OFF_GN1B + f)
        x1n.append(leaky(vn))

    # ---- GCN projection (K=9): scalar FMAs on the VPU, MXU reserved for adjacency ----
    hp = []
    for fo in range(GCN_OUT):
        acc = sp(_OFF_WGCN + fo) * x1n[0]
        for fi in range(1, GCN_IN):
            acc = acc + sp(_OFF_WGCN + fi * GCN_OUT + fo) * x1n[fi]
        hp.append(acc)                         # [GB, N_PAD]

    # lane-replicated per-output-feature params, loaded once per grid step
    bgcn_b = cp_ref[_ROW_BGCN:_ROW_BGCN + GCN_OUT, :]
    gn2w_b = cp_ref[_ROW_GN2W:_ROW_GN2W + GCN_OUT, :]
    gn2b_b = cp_ref[_ROW_GN2B:_ROW_GN2B + GCN_OUT, :]
    gn2a_b = cp_ref[_ROW_GN2A:_ROW_GN2A + GCN_OUT, :]
    wfc_b = cp_ref[_ROW_WFC:_ROW_WFC + GCN_OUT, :]
    bfc = sp(_OFF_BFC)

    # ---- per-graph adjacency aggregation (MXU, bf16 x bf16 -> f32) + tail ----
    rows = []
    for g in range(gb):                        # static unrolled
        hpg = jnp.concatenate([hp[f][g:g + 1, :] for f in range(GCN_OUT)],
                              axis=0)          # [8, N_PAD]
        h2 = jnp.dot(hpg.astype(jnp.bfloat16), adj_ref[g],
                     preferred_element_type=jnp.float32) + bgcn_b
        mg = maskn[g:g + 1, :]                 # [1, N_PAD]
        mean2 = jnp.sum(h2 * mg, axis=1, keepdims=True)        # [8, 1]
        c2 = h2 - gn2a_b * mean2
        var2 = jnp.sum(c2 * c2 * mg, axis=1, keepdims=True)
        h2n = gn2w_b * (c2 * jax.lax.rsqrt(var2 + EPS)) + gn2b_b
        h2n = leaky(h2n)
        # dropout(p=0.5) is identity in eval mode (training=False)
        rows.append(jnp.sum(h2n * wfc_b, axis=0, keepdims=True) + bfc)   # [1, N_PAD]

    out_ref[...] = jnp.concatenate(rows, axis=0)               # dense [GB, N_PAD] store


def gru_gcn_forward(scalars, x_fm, adj_t, maskn, cparams, *, gb=GB):
    """scalars: [130] f32; x_fm: [5, G, N_PAD] f32 (feature, graph, node);
    adj_t: [G, N_PAD, N_PAD] bf16 (A^T, GCN-normalized, self loops added);
    maskn: [G, N_PAD] f32 (1/num_nodes on real lanes, 0 elsewhere);
    cparams: [40, N_PAD] f32 lane-replicated slab.  Returns [G, N_PAD] f32."""
    g_total = x_fm.shape[1]
    npad = x_fm.shape[2]

    # pad the graph axis to a multiple of the per-step block (padded graphs have
    # maskn == 0 and a zero adjacency, so they stay finite and are sliced away)
    g_pad = ((g_total + gb - 1) // gb) * gb
    if g_pad != g_total:
        pad = g_pad - g_total
        x_fm = jnp.pad(x_fm, ((0, 0), (0, pad), (0, 0)))
        adj_t = jnp.pad(adj_t, ((0, pad), (0, 0), (0, 0)))
        maskn = jnp.pad(maskn, ((0, pad), (0, 0)))

    grid_spec = pltpu.PrefetchScalarGridSpec(
        num_scalar_prefetch=0,
        grid=(g_pad // gb,),
        in_specs=[
            pl.BlockSpec(memory_space=pltpu.MemorySpace.SMEM),          # scalar params
            pl.BlockSpec((SEQ + 1, gb, npad), lambda s: (0, s, 0)),     # x (feature-major)
            pl.BlockSpec((gb, npad, npad), lambda s: (s, 0, 0)),        # adj^T (bf16)
            pl.BlockSpec((gb, npad), lambda s: (s, 0)),                 # mask / n
            pl.BlockSpec((CP_ROWS, npad), lambda s: (0, 0)),            # replicated params
        ],
        out_specs=pl.BlockSpec((gb, npad), lambda s: (s, 0)),
    )
    out = pl.pallas_call(
        gru_gcn_kernel,
        out_shape=jax.ShapeDtypeStruct((g_pad, npad), jnp.float32),
        grid_spec=grid_spec,
        compiler_params=pltpu.CompilerParams(
            dimension_semantics=("parallel",)),
    )(scalars, x_fm, adj_t, maskn, cparams)
    return out[:g_total]


# ----------------------------------------------------------------------------
# Host-side helpers: parameter packing, GCN normalization, reference model.
# ----------------------------------------------------------------------------
def build_gcn_adj_t(edge_index, edge_weight, num_nodes):
    """Transposed dense GCN-normalized adjacency (with self loops): adj_t[src, dst]."""
    row, col = edge_index[0], edge_index[1]               # src, dst
    sl = jnp.arange(num_nodes, dtype=edge_index.dtype)
    row = jnp.concatenate([row, sl])
    col = jnp.concatenate([col, sl])
    ew = jnp.concatenate([edge_weight.astype(jnp.float32),
                          jnp.ones((num_nodes,), jnp.float32)])
    deg = jnp.zeros((num_nodes,), jnp.float32).at[col].add(ew)
    dinv = jnp.where(deg > 0, jax.lax.rsqrt(deg), 0.0)
    w = dinv[row] * ew * dinv[col]
    return jnp.zeros((num_nodes, num_nodes), jnp.float32).at[row, col].add(w)


def init_params(key):
    ks = jax.random.split(key, 8)
    s_gru = 1.0 / (HIDDEN ** 0.5)
    s_fc = 1.0 / (GCN_OUT ** 0.5)
    s_gcn = (6.0 / (GCN_IN + GCN_OUT)) ** 0.5
    u = lambda k, shape, s: jax.random.uniform(k, shape, jnp.float32, -s, s)
    return {
        "w_ih": u(ks[0], (3 * HIDDEN, 1), s_gru),
        "w_hh": u(ks[1], (3 * HIDDEN, HIDDEN), s_gru),
        "b_ih": u(ks[2], (3 * HIDDEN,), s_gru),
        "b_hh": u(ks[3], (3 * HIDDEN,), s_gru),
        "gn1_w": jnp.ones((GCN_IN,), jnp.float32),
        "gn1_b": jnp.zeros((GCN_IN,), jnp.float32),
        "gn1_a": jnp.ones((GCN_IN,), jnp.float32),
        "w_gcn": u(ks[4], (GCN_IN, GCN_OUT), s_gcn),
        "b_gcn": jnp.zeros((GCN_OUT,), jnp.float32),
        "gn2_w": jnp.ones((GCN_OUT,), jnp.float32),
        "gn2_b": jnp.zeros((GCN_OUT,), jnp.float32),
        "gn2_a": jnp.ones((GCN_OUT,), jnp.float32),
        "w_fc": u(ks[5], (1, GCN_OUT), s_fc),
        "b_fc": u(ks[6], (1,), s_fc),
    }


def pack_scalar_params(p):
    s = jnp.zeros((N_SCALARS,), jnp.float32)
    s = s.at[_OFF_WIH:_OFF_WIH + 6].set(p["w_ih"][:, 0])
    s = s.at[_OFF_WHH0:_OFF_WHH0 + 6].set(p["w_hh"][:, 0])
    s = s.at[_OFF_WHH1:_OFF_WHH1 + 6].set(p["w_hh"][:, 1])
    s = s.at[_OFF_BIH:_OFF_BIH + 6].set(p["b_ih"])
    s = s.at[_OFF_BHH:_OFF_BHH + 6].set(p["b_hh"])
    s = s.at[_OFF_GN1W:_OFF_GN1W + GCN_IN].set(p["gn1_w"])
    s = s.at[_OFF_GN1B:_OFF_GN1B + GCN_IN].set(p["gn1_b"])
    s = s.at[_OFF_GN1A:_OFF_GN1A + GCN_IN].set(p["gn1_a"])
    s = s.at[_OFF_WGCN:_OFF_WGCN + GCN_IN * GCN_OUT].set(p["w_gcn"].reshape(-1))
    s = s.at[_OFF_BFC].set(p["b_fc"][0])
    return s


def pack_column_params(p, npad=N_PAD):
    cp = jnp.zeros((CP_ROWS, npad), jnp.float32)
    cp = cp.at[_ROW_BGCN:_ROW_BGCN + GCN_OUT, :].set(p["b_gcn"][:, None])
    cp = cp.at[_ROW_GN2W:_ROW_GN2W + GCN_OUT, :].set(p["gn2_w"][:, None])
    cp = cp.at[_ROW_GN2B:_ROW_GN2B + GCN_OUT, :].set(p["gn2_b"][:, None])
    cp = cp.at[_ROW_GN2A:_ROW_GN2A + GCN_OUT, :].set(p["gn2_a"][:, None])
    cp = cp.at[_ROW_WFC:_ROW_WFC + GCN_OUT, :].set(p["w_fc"][0][:, None])
    return cp


def gru_gcn_reference(x, adj, p, *, mimic_bf16=True):
    """Plain-JAX node-major reference of the PyTorch module (eval mode).
    `adj` is the dense [dst, src] normalized adjacency.  With mimic_bf16 the
    reference applies the same bf16 rounding the kernel's MXU path uses."""
    n = x.shape[0]
    h = jnp.zeros((n, HIDDEN), jnp.float32)
    hs = []
    for _t in range(SEQ):
        x_t = x[:, _t:_t + 1]
        gi = x_t @ p["w_ih"].T + p["b_ih"]
        gh = h @ p["w_hh"].T + p["b_hh"]
        r = jax.nn.sigmoid(gi[:, 0:2] + gh[:, 0:2])
        z = jax.nn.sigmoid(gi[:, 2:4] + gh[:, 2:4])
        ng = jnp.tanh(gi[:, 4:6] + r * gh[:, 4:6])
        h = (1.0 - z) * ng + z * h
        hs.append(h)
    x1 = jnp.concatenate(hs + [x[:, -1:]], axis=1)

    def gnorm(v, w, b, a):
        m = jnp.mean(v, axis=0, keepdims=True)
        c = v - a * m
        var = jnp.mean(c * c, axis=0, keepdims=True)
        return w * (c * jax.lax.rsqrt(var + EPS)) + b

    x1 = gnorm(x1, p["gn1_w"], p["gn1_b"], p["gn1_a"])
    x1 = jnp.where(x1 > 0, x1, LEAKY_SLOPE * x1)
    hp = x1 @ p["w_gcn"]
    if mimic_bf16:
        hp = hp.astype(jnp.bfloat16).astype(jnp.float32)
    h2 = adj @ hp + p["b_gcn"]
    h2 = gnorm(h2, p["gn2_w"], p["gn2_b"], p["gn2_a"])
    h2 = jnp.where(h2 > 0, h2, LEAKY_SLOPE * h2)
    return h2 @ p["w_fc"].T + p["b_fc"]


if __name__ == "__main__":
    key = jax.random.PRNGKey(0)
    k_p, k_g = jax.random.split(key)
    params = init_params(k_p)
    scalars = pack_scalar_params(params)
    cparams = pack_column_params(params)

    num_graphs = 16                         # 2 grid steps at GB=8 (keeps v7x's 2 TCs busy)
    node_counts = [12 + 4 * (i % 4) for i in range(num_graphs)]   # 12..24 real nodes

    x_fm = jnp.zeros((SEQ + 1, num_graphs, N_PAD), jnp.float32)
    adj_b = jnp.zeros((num_graphs, N_PAD, N_PAD), jnp.float32)
    maskn = jnp.zeros((num_graphs, N_PAD), jnp.float32)
    refs = []
    gkeys = jax.random.split(k_g, num_graphs)
    for i in range(num_graphs):
        n = node_counts[i]
        kx, kw = jax.random.split(gkeys[i])
        # node features: [N, 5] (first 4 feed the GRU, last column appended raw)
        x = jax.random.normal(kx, (n, NODE_FEATURES), jnp.float32)
        # bidirectional ring graph, no pre-existing self loops
        src = jnp.arange(n, dtype=jnp.int32)
        dst = (src + 1) % n
        edge_index = jnp.stack([jnp.concatenate([src, dst]),
                                jnp.concatenate([dst, src])], axis=0)
        edge_weight = jax.random.uniform(kw, (edge_index.shape[1],),
                                         jnp.float32, 0.5, 1.5)
        adj_t = build_gcn_adj_t(edge_index, edge_weight, n)

        x_fm = x_fm.at[:, i, :n].set(x.T)
        adj_b = adj_b.at[i, :n, :n].set(adj_t)
        maskn = maskn.at[i, :n].set(1.0 / n)

        # reference sees the same bf16-rounded adjacency the kernel streams, so
        # the comparison validates the kernel logic tightly (vs. a pure-f32
        # reference the bf16 adjacency adds ~1e-2-level deviation, as expected).
        adj_bf = adj_t.astype(jnp.bfloat16).astype(jnp.float32)
        with jax.default_matmul_precision("highest"):
            refs.append(gru_gcn_reference(x, adj_bf.T, params, mimic_bf16=True))

    adj_b = adj_b.astype(jnp.bfloat16)      # adjacency is ~94% of HBM bytes -> halve it

    out = gru_gcn_forward(scalars, x_fm, adj_b, maskn, cparams)   # [G, N_PAD]
    out = jax.block_until_ready(out)

    max_err = 0.0
    for i in range(num_graphs):
        n = node_counts[i]
        got = out[i, :n]
        ref = refs[i][:, 0]
        max_err = max(max_err, float(jnp.max(jnp.abs(got - ref))))
    assert max_err < 5e-3, f"max abs err vs reference: {max_err}"
    print("KERNEL_OK")
</pallas_src>

<mosaic_0001>
module attributes {stable_mosaic.version = 11 : i64} {
  func.func @gru_gcn_kernel(%arg0: i32, %arg1: memref<130xf32, #tpu.memory_space<smem>>, %arg2: memref<5x8x128xf32, #tpu.memory_space<vmem>>, %arg3: memref<8x128x128xbf16, #tpu.memory_space<vmem>>, %arg4: memref<8x128xf32, #tpu.memory_space<vmem>>, %arg5: memref<40x128xf32, #tpu.memory_space<vmem>>, %arg6: memref<8x128xf32, #tpu.memory_space<vmem>>) attributes {dimension_semantics = [#tpu.dimension_semantics<parallel>], iteration_bounds = array<i64: 2>, scalar_prefetch = 0 : i64, scratch_operands = 0 : i64, tpu.core_type = #tpu.core_type<tc>, window_params = [{transform_indices = @transform_0, window_bounds = array<i64: 130>}, {transform_indices = @transform_1, window_bounds = array<i64: 5, 8, 128>}, {transform_indices = @transform_2, window_bounds = array<i64: 8, 128, 128>}, {transform_indices = @transform_3, window_bounds = array<i64: 8, 128>}, {pipeline_mode = #tpu.pipeline_mode<synchronous>, transform_indices = @transform_4, window_bounds = array<i64: 40, 128>}, {transform_indices = @transform_5, window_bounds = array<i64: 8, 128>}]} {
    %c0 = arith.constant 0 : index
    %c0_0 = arith.constant 0 : index
    %0 = vector.load %arg4[%c0, %c0_0] : memref<8x128xf32, #tpu.memory_space<vmem>>, vector<8x128xf32>
    %cst = arith.constant 0.000000e+00 : f32
    %1 = vector.broadcast %cst : f32 to vector<8x128xf32>
    %cst_1 = arith.constant 0.000000e+00 : f32
    %2 = vector.broadcast %cst_1 : f32 to vector<8x128xf32>
    %c0_2 = arith.constant 0 : index
    %c0_3 = arith.constant 0 : index
    %c0_4 = arith.constant 0 : index
    %3 = vector.load %arg2[%c0_2, %c0_3, %c0_4] : memref<5x8x128xf32, #tpu.memory_space<vmem>>, vector<1x8x128xf32>
    %4 = vector.shape_cast %3 : vector<1x8x128xf32> to vector<8x128xf32>
    %c0_5 = arith.constant 0 : index
    %5 = memref.load %arg1[%c0_5] : memref<130xf32, #tpu.memory_space<smem>>
    %6 = vector.broadcast %5 : f32 to vector<8x128xf32>
    %7 = arith.mulf %6, %4 : vector<8x128xf32>
    %c18 = arith.constant 18 : index
    %8 = memref.load %arg1[%c18] : memref<130xf32, #tpu.memory_space<smem>>
    %9 = vector.broadcast %8 : f32 to vector<8x128xf32>
    %10 = arith.addf %7, %9 : vector<8x128xf32>
    %c1 = arith.constant 1 : index
    %11 = memref.load %arg1[%c1] : memref<130xf32, #tpu.memory_space<smem>>
    %12 = vector.broadcast %11 : f32 to vector<8x128xf32>
    %13 = arith.mulf %12, %4 : vector<8x128xf32>
    %c19 = arith.constant 19 : index
    %14 = memref.load %arg1[%c19] : memref<130xf32, #tpu.memory_space<smem>>
    %15 = vector.broadcast %14 : f32 to vector<8x128xf32>
    %16 = arith.addf %13, %15 : vector<8x128xf32>
    %c2 = arith.constant 2 : index
    %17 = memref.load %arg1[%c2] : memref<130xf32, #tpu.memory_space<smem>>
    %18 = vector.broadcast %17 : f32 to vector<8x128xf32>
    %19 = arith.mulf %18, %4 : vector<8x128xf32>
    %c20 = arith.constant 20 : index
    %20 = memref.load %arg1[%c20] : memref<130xf32, #tpu.memory_space<smem>>
    %21 = vector.broadcast %20 : f32 to vector<8x128xf32>
    %22 = arith.addf %19, %21 : vector<8x128xf32>
    %c3 = arith.constant 3 : index
    %23 = memref.load %arg1[%c3] : memref<130xf32, #tpu.memory_space<smem>>
    %24 = vector.broadcast %23 : f32 to vector<8x128xf32>
    %25 = arith.mulf %24, %4 : vector<8x128xf32>
    %c21 = arith.constant 21 : index
    %26 = memref.load %arg1[%c21] : memref<130xf32, #tpu.memory_space<smem>>
    %27 = vector.broadcast %26 : f32 to vector<8x128xf32>
    %28 = arith.addf %25, %27 : vector<8x128xf32>
    %c4 = arith.constant 4 : index
    %29 = memref.load %arg1[%c4] : memref<130xf32, #tpu.memory_space<smem>>
    %30 = vector.broadcast %29 : f32 to vector<8x128xf32>
    %31 = arith.mulf %30, %4 : vector<8x128xf32>
    %c22 = arith.constant 22 : index
    %32 = memref.load %arg1[%c22] : memref<130xf32, #tpu.memory_space<smem>>
    %33 = vector.broadcast %32 : f32 to vector<8x128xf32>
    %34 = arith.addf %31, %33 : vector<8x128xf32>
    %c5 = arith.constant 5 : index
    %35 = memref.load %arg1[%c5] : memref<130xf32, #tpu.memory_space<smem>>
    %36 = vector.broadcast %35 : f32 to vector<8x128xf32>
    %37 = arith.mulf %36, %4 : vector<8x128xf32>
    %c23 = arith.constant 23 : index
    %38 = memref.load %arg1[%c23] : memref<130xf32, #tpu.memory_space<smem>>
    %39 = vector.broadcast %38 : f32 to vector<8x128xf32>
    %40 = arith.addf %37, %39 : vector<8x128xf32>
    %c6 = arith.constant 6 : index
    %41 = memref.load %arg1[%c6] : memref<130xf32, #tpu.memory_space<smem>>
    %42 = vector.broadcast %41 : f32 to vector<8x128xf32>
    %43 = arith.mulf %42, %1 : vector<8x128xf32>
    %c12 = arith.constant 12 : index
    %44 = memref.load %arg1[%c12] : memref<130xf32, #tpu.memory_space<smem>>
    %45 = vector.broadcast %44 : f32 to vector<8x128xf32>
    %46 = arith.mulf %45, %2 : vector<8x128xf32>
    %47 = arith.addf %43, %46 : vector<8x128xf32>
    %c24 = arith.constant 24 : index
    %48 = memref.load %arg1[%c24] : memref<130xf32, #tpu.memory_space<smem>>
    %49 = vector.broadcast %48 : f32 to vector<8x128xf32>
    %50 = arith.addf %47, %49 : vector<8x128xf32>
    %c7 = arith.constant 7 : index
    %51 = memref.load %arg1[%c7] : memref<130xf32, #tpu.memory_space<smem>>
    %52 = vector.broadcast %51 : f32 to vector<8x128xf32>
    %53 = arith.mulf %52, %1 : vector<8x128xf32>
    %c13 = arith.constant 13 : index
    %54 = memref.load %arg1[%c13] : memref<130xf32, #tpu.memory_space<smem>>
    %55 = vector.broadcast %54 : f32 to vector<8x128xf32>
    %56 = arith.mulf %55, %2 : vector<8x128xf32>
    %57 = arith.addf %53, %56 : vector<8x128xf32>
    %c25 = arith.constant 25 : index
    %58 = memref.load %arg1[%c25] : memref<130xf32, #tpu.memory_space<smem>>
    %59 = vector.broadcast %58 : f32 to vector<8x128xf32>
    %60 = arith.addf %57, %59 : vector<8x128xf32>
    %c8 = arith.constant 8 : index
    %61 = memref.load %arg1[%c8] : memref<130xf32, #tpu.memory_space<smem>>
    %62 = vector.broadcast %61 : f32 to vector<8x128xf32>
    %63 = arith.mulf %62, %1 : vector<8x128xf32>
    %c14 = arith.constant 14 : index
    %64 = memref.load %arg1[%c14] : memref<130xf32, #tpu.memory_space<smem>>
    %65 = vector.broadcast %64 : f32 to vector<8x128xf32>
    %66 = arith.mulf %65, %2 : vector<8x128xf32>
    %67 = arith.addf %63, %66 : vector<8x128xf32>
    %c26 = arith.constant 26 : index
    %68 = memref.load %arg1[%c26] : memref<130xf32, #tpu.memory_space<smem>>
    %69 = vector.broadcast %68 : f32 to vector<8x128xf32>
    %70 = arith.addf %67, %69 : vector<8x128xf32>
    %c9 = arith.constant 9 : index
    %71 = memref.load %arg1[%c9] : memref<130xf32, #tpu.memory_space<smem>>
    %72 = vector.broadcast %71 : f32 to vector<8x128xf32>
    %73 = arith.mulf %72, %1 : vector<8x128xf32>
    %c15 = arith.constant 15 : index
    %74 = memref.load %arg1[%c15] : memref<130xf32, #tpu.memory_space<smem>>
    %75 = vector.broadcast %74 : f32 to vector<8x128xf32>
    %76 = arith.mulf %75, %2 : vector<8x128xf32>
    %77 = arith.addf %73, %76 : vector<8x128xf32>
    %c27 = arith.constant 27 : index
    %78 = memref.load %arg1[%c27] : memref<130xf32, #tpu.memory_space<smem>>
    %79 = vector.broadcast %78 : f32 to vector<8x128xf32>
    %80 = arith.addf %77, %79 : vector<8x128xf32>
    %c10 = arith.constant 10 : index
    %81 = memref.load %arg1[%c10] : memref<130xf32, #tpu.memory_space<smem>>
    %82 = vector.broadcast %81 : f32 to vector<8x128xf32>
    %83 = arith.mulf %82, %1 : vector<8x128xf32>
    %c16 = arith.constant 16 : index
    %84 = memref.load %arg1[%c16] : memref<130xf32, #tpu.memory_space<smem>>
    %85 = vector.broadcast %84 : f32 to vector<8x128xf32>
    %86 = arith.mulf %85, %2 : vector<8x128xf32>
    %87 = arith.addf %83, %86 : vector<8x128xf32>
    %c28 = arith.constant 28 : index
    %88 = memref.load %arg1[%c28] : memref<130xf32, #tpu.memory_space<smem>>
    %89 = vector.broadcast %88 : f32 to vector<8x128xf32>
    %90 = arith.addf %87, %89 : vector<8x128xf32>
    %c11 = arith.constant 11 : index
    %91 = memref.load %arg1[%c11] : memref<130xf32, #tpu.memory_space<smem>>
    %92 = vector.broadcast %91 : f32 to vector<8x128xf32>
    %93 = arith.mulf %92, %1 : vector<8x128xf32>
    %c17 = arith.constant 17 : index
    %94 = memref.load %arg1[%c17] : memref<130xf32, #tpu.memory_space<smem>>
    %95 = vector.broadcast %94 : f32 to vector<8x128xf32>
    %96 = arith.mulf %95, %2 : vector<8x128xf32>
    %97 = arith.addf %93, %96 : vector<8x128xf32>
    %c29 = arith.constant 29 : index
    %98 = memref.load %arg1[%c29] : memref<130xf32, #tpu.memory_space<smem>>
    %99 = vector.broadcast %98 : f32 to vector<8x128xf32>
    %100 = arith.addf %97, %99 : vector<8x128xf32>
    %101 = arith.addf %10, %50 : vector<8x128xf32>
    %102 = arith.negf %101 : vector<8x128xf32>
    %103 = math.exp %102 : vector<8x128xf32>
    %cst_6 = arith.constant 1.000000e+00 : f32
    %104 = vector.broadcast %cst_6 : f32 to vector<8x128xf32>
    %105 = arith.addf %104, %103 : vector<8x128xf32>
    %106 = arith.divf %104, %105 : vector<8x128xf32>
    %107 = arith.addf %16, %60 : vector<8x128xf32>
    %108 = arith.negf %107 : vector<8x128xf32>
    %109 = math.exp %108 : vector<8x128xf32>
    %cst_7 = arith.constant 1.000000e+00 : f32
    %110 = vector.broadcast %cst_7 : f32 to vector<8x128xf32>
    %111 = arith.addf %110, %109 : vector<8x128xf32>
    %112 = arith.divf %110, %111 : vector<8x128xf32>
    %113 = arith.addf %22, %70 : vector<8x128xf32>
    %114 = arith.negf %113 : vector<8x128xf32>
    %115 = math.exp %114 : vector<8x128xf32>
    %cst_8 = arith.constant 1.000000e+00 : f32
    %116 = vector.broadcast %cst_8 : f32 to vector<8x128xf32>
    %117 = arith.addf %116, %115 : vector<8x128xf32>
    %118 = arith.divf %116, %117 : vector<8x128xf32>
    %119 = arith.addf %28, %80 : vector<8x128xf32>
    %120 = arith.negf %119 : vector<8x128xf32>
    %121 = math.exp %120 : vector<8x128xf32>
    %cst_9 = arith.constant 1.000000e+00 : f32
    %122 = vector.broadcast %cst_9 : f32 to vector<8x128xf32>
    %123 = arith.addf %122, %121 : vector<8x128xf32>
    %124 = arith.divf %122, %123 : vector<8x128xf32>
    %125 = arith.mulf %106, %90 : vector<8x128xf32>
    %126 = arith.addf %34, %125 : vector<8x128xf32>
    %127 = math.tanh %126 : vector<8x128xf32>
    %128 = arith.mulf %112, %100 : vector<8x128xf32>
    %129 = arith.addf %40, %128 : vector<8x128xf32>
    %130 = math.tanh %129 : vector<8x128xf32>
    %cst_10 = arith.constant 1.000000e+00 : f32
    %131 = vector.broadcast %cst_10 : f32 to vector<8x128xf32>
    %132 = arith.subf %131, %118 : vector<8x128xf32>
    %133 = arith.mulf %132, %127 : vector<8x128xf32>
    %134 = arith.mulf %118, %1 : vector<8x128xf32>
    %135 = arith.addf %133, %134 : vector<8x128xf32>
    %cst_11 = arith.constant 1.000000e+00 : f32
    %136 = vector.broadcast %cst_11 : f32 to vector<8x128xf32>
    %137 = arith.subf %136, %124 : vector<8x128xf32>
    %138 = arith.mulf %137, %130 : vector<8x128xf32>
    %139 = arith.mulf %124, %2 : vector<8x128xf32>
    %140 = arith.addf %138, %139 : vector<8x128xf32>
    %c1_12 = arith.constant 1 : index
    %c0_13 = arith.constant 0 : index
    %c0_14 = arith.constant 0 : index
    %141 = vector.load %arg2[%c1_12, %c0_13, %c0_14] : memref<5x8x128xf32, #tpu.memory_space<vmem>>, vector<1x8x128xf32>
    %142 = vector.shape_cast %141 : vector<1x8x128xf32> to vector<8x128xf32>
    %c0_15 = arith.constant 0 : index
    %143 = memref.load %arg1[%c0_15] : memref<130xf32, #tpu.memory_space<smem>>
    %144 = vector.broadcast %143 : f32 to vector<8x128xf32>
    %145 = arith.mulf %144, %142 : vector<8x128xf32>
    %c18_16 = arith.constant 18 : index
    %146 = memref.load %arg1[%c18_16] : memref<130xf32, #tpu.memory_space<smem>>
    %147 = vector.broadcast %146 : f32 to vector<8x128xf32>
    %148 = arith.addf %145, %147 : vector<8x128xf32>
    %c1_17 = arith.constant 1 : index
    %149 = memref.load %arg1[%c1_17] : memref<130xf32, #tpu.memory_space<smem>>
    %150 = vector.broadcast %149 : f32 to vector<8x128xf32>
    %151 = arith.mulf %150, %142 : vector<8x128xf32>
    %c19_18 = arith.constant 19 : index
    %152 = memref.load %arg1[%c19_18] : memref<130xf32, #tpu.memory_space<smem>>
    %153 = vector.broadcast %152 : f32 to vector<8x128xf32>
    %154 = arith.addf %151, %153 : vector<8x128xf32>
    %c2_19 = arith.constant 2 : index
    %155 = memref.load %arg1[%c2_19] : memref<130xf32, #tpu.memory_space<smem>>
    %156 = vector.broadcast %155 : f32 to vector<8x128xf32>
    %157 = arith.mulf %156, %142 : vector<8x128xf32>
    %c20_20 = arith.constant 20 : index
    %158 = memref.load %arg1[%c20_20] : memref<130xf32, #tpu.memory_space<smem>>
    %159 = vector.broadcast %158 : f32 to vector<8x128xf32>
    %160 = arith.addf %157, %159 : vector<8x128xf32>
    %c3_21 = arith.constant 3 : index
    %161 = memref.load %arg1[%c3_21] : memref<130xf32, #tpu.memory_space<smem>>
    %162 = vector.broadcast %161 : f32 to vector<8x128xf32>
    %163 = arith.mulf %162, %142 : vector<8x128xf32>
    %c21_22 = arith.constant 21 : index
    %164 = memref.load %arg1[%c21_22] : memref<130xf32, #tpu.memory_space<smem>>
    %165 = vector.broadcast %164 : f32 to vector<8x128xf32>
    %166 = arith.addf %163, %165 : vector<8x128xf32>
    %c4_23 = arith.constant 4 : index
    %167 = memref.load %arg1[%c4_23] : memref<130xf32, #tpu.memory_space<smem>>
    %168 = vector.broadcast %167 : f32 to vector<8x128xf32>
    %169 = arith.mulf %168, %142 : vector<8x128xf32>
    %c22_24 = arith.constant 22 : index
    %170 = memref.load %arg1[%c22_24] : memref<130xf32, #tpu.memory_space<smem>>
    %171 = vector.broadcast %170 : f32 to vector<8x128xf32>
    %172 = arith.addf %169, %171 : vector<8x128xf32>
    %c5_25 = arith.constant 5 : index
    %173 = memref.load %arg1[%c5_25] : memref<130xf32, #tpu.memory_space<smem>>
    %174 = vector.broadcast %173 : f32 to vector<8x128xf32>
    %175 = arith.mulf %174, %142 : vector<8x128xf32>
    %c23_26 = arith.constant 23 : index
    %176 = memref.load %arg1[%c23_26] : memref<130xf32, #tpu.memory_space<smem>>
    %177 = vector.broadcast %176 : f32 to vector<8x128xf32>
    %178 = arith.addf %175, %177 : vector<8x128xf32>
    %c6_27 = arith.constant 6 : index
    %179 = memref.load %arg1[%c6_27] : memref<130xf32, #tpu.memory_space<smem>>
    %180 = vector.broadcast %179 : f32 to vector<8x128xf32>
    %181 = arith.mulf %180, %135 : vector<8x128xf32>
    %c12_28 = arith.constant 12 : index
    %182 = memref.load %arg1[%c12_28] : memref<130xf32, #tpu.memory_space<smem>>
    %183 = vector.broadcast %182 : f32 to vector<8x128xf32>
    %184 = arith.mulf %183, %140 : vector<8x128xf32>
    %185 = arith.addf %181, %184 : vector<8x128xf32>
    %c24_29 = arith.constant 24 : index
    %186 = memref.load %arg1[%c24_29] : memref<130xf32, #tpu.memory_space<smem>>
    %187 = vector.broadcast %186 : f32 to vector<8x128xf32>
    %188 = arith.addf %185, %187 : vector<8x128xf32>
    %c7_30 = arith.constant 7 : index
    %189 = memref.load %arg1[%c7_30] : memref<130xf32, #tpu.memory_space<smem>>
    %190 = vector.broadcast %189 : f32 to vector<8x128xf32>
    %191 = arith.mulf %190, %135 : vector<8x128xf32>
    %c13_31 = arith.constant 13 : index
    %192 = memref.load %arg1[%c13_31] : memref<130xf32, #tpu.memory_space<smem>>
    %193 = vector.broadcast %192 : f32 to vector<8x128xf32>
    %194 = arith.mulf %193, %140 : vector<8x128xf32>
    %195 = arith.addf %191, %194 : vector<8x128xf32>
    %c25_32 = arith.constant 25 : index
    %196 = memref.load %arg1[%c25_32] : memref<130xf32, #tpu.memory_space<smem>>
    %197 = vector.broadcast %196 : f32 to vector<8x128xf32>
    %198 = arith.addf %195, %197 : vector<8x128xf32>
    %c8_33 = arith.constant 8 : index
    %199 = memref.load %arg1[%c8_33] : memref<130xf32, #tpu.memory_space<smem>>
    %200 = vector.broadcast %199 : f32 to vector<8x128xf32>
    %201 = arith.mulf %200, %135 : vector<8x128xf32>
    %c14_34 = arith.constant 14 : index
    %202 = memref.load %arg1[%c14_34] : memref<130xf32, #tpu.memory_space<smem>>
    %203 = vector.broadcast %202 : f32 to vector<8x128xf32>
    %204 = arith.mulf %203, %140 : vector<8x128xf32>
    %205 = arith.addf %201, %204 : vector<8x128xf32>
    %c26_35 = arith.constant 26 : index
    %206 = memref.load %arg1[%c26_35] : memref<130xf32, #tpu.memory_space<smem>>
    %207 = vector.broadcast %206 : f32 to vector<8x128xf32>
    %208 = arith.addf %205, %207 : vector<8x128xf32>
    %c9_36 = arith.constant 9 : index
    %209 = memref.load %arg1[%c9_36] : memref<130xf32, #tpu.memory_space<smem>>
    %210 = vector.broadcast %209 : f32 to vector<8x128xf32>
    %211 = arith.mulf %210, %135 : vector<8x128xf32>
    %c15_37 = arith.constant 15 : index
    %212 = memref.load %arg1[%c15_37] : memref<130xf32, #tpu.memory_space<smem>>
    %213 = vector.broadcast %212 : f32 to vector<8x128xf32>
    %214 = arith.mulf %213, %140 : vector<8x128xf32>
    %215 = arith.addf %211, %214 : vector<8x128xf32>
    %c27_38 = arith.constant 27 : index
    %216 = memref.load %arg1[%c27_38] : memref<130xf32, #tpu.memory_space<smem>>
    %217 = vector.broadcast %216 : f32 to vector<8x128xf32>
    %218 = arith.addf %215, %217 : vector<8x128xf32>
    %c10_39 = arith.constant 10 : index
    %219 = memref.load %arg1[%c10_39] : memref<130xf32, #tpu.memory_space<smem>>
    %220 = vector.broadcast %219 : f32 to vector<8x128xf32>
    %221 = arith.mulf %220, %135 : vector<8x128xf32>
    %c16_40 = arith.constant 16 : index
    %222 = memref.load %arg1[%c16_40] : memref<130xf32, #tpu.memory_space<smem>>
    %223 = vector.broadcast %222 : f32 to vector<8x128xf32>
    %224 = arith.mulf %223, %140 : vector<8x128xf32>
    %225 = arith.addf %221, %224 : vector<8x128xf32>
    %c28_41 = arith.constant 28 : index
    %226 = memref.load %arg1[%c28_41] : memref<130xf32, #tpu.memory_space<smem>>
    %227 = vector.broadcast %226 : f32 to vector<8x128xf32>
    %228 = arith.addf %225, %227 : vector<8x128xf32>
    %c11_42 = arith.constant 11 : index
    %229 = memref.load %arg1[%c11_42] : memref<130xf32, #tpu.memory_space<smem>>
    %230 = vector.broadcast %229 : f32 to vector<8x128xf32>
    %231 = arith.mulf %230, %135 : vector<8x128xf32>
    %c17_43 = arith.constant 17 : index
    %232 = memref.load %arg1[%c17_43] : memref<130xf32, #tpu.memory_space<smem>>
    %233 = vector.broadcast %232 : f32 to vector<8x128xf32>
    %234 = arith.mulf %233, %140 : vector<8x128xf32>
    %235 = arith.addf %231, %234 : vector<8x128xf32>
    %c29_44 = arith.constant 29 : index
    %236 = memref.load %arg1[%c29_44] : memref<130xf32, #tpu.memory_space<smem>>
    %237 = vector.broadcast %236 : f32 to vector<8x128xf32>
    %238 = arith.addf %235, %237 : vector<8x128xf32>
    %239 = arith.addf %148, %188 : vector<8x128xf32>
    %240 = arith.negf %239 : vector<8x128xf32>
    %241 = math.exp %240 : vector<8x128xf32>
    %cst_45 = arith.constant 1.000000e+00 : f32
    %242 = vector.broadcast %cst_45 : f32 to vector<8x128xf32>
    %243 = arith.addf %242, %241 : vector<8x128xf32>
    %244 = arith.divf %242, %243 : vector<8x128xf32>
    %245 = arith.addf %154, %198 : vector<8x128xf32>
    %246 = arith.negf %245 : vector<8x128xf32>
    %247 = math.exp %246 : vector<8x128xf32>
    %cst_46 = arith.constant 1.000000e+00 : f32
    %248 = vector.broadcast %cst_46 : f32 to vector<8x128xf32>
    %249 = arith.addf %248, %247 : vector<8x128xf32>
    %250 = arith.divf %248, %249 : vector<8x128xf32>
    %251 = arith.addf %160, %208 : vector<8x128xf32>
    %252 = arith.negf %251 : vector<8x128xf32>
    %253 = math.exp %252 : vector<8x128xf32>
    %cst_47 = arith.constant 1.000000e+00 : f32
    %254 = vector.broadcast %cst_47 : f32 to vector<8x128xf32>
    %255 = arith.addf %254, %253 : vector<8x128xf32>
    %256 = arith.divf %254, %255 : vector<8x128xf32>
    %257 = arith.addf %166, %218 : vector<8x128xf32>
    %258 = arith.negf %257 : vector<8x128xf32>
    %259 = math.exp %258 : vector<8x128xf32>
    %cst_48 = arith.constant 1.000000e+00 : f32
    %260 = vector.broadcast %cst_48 : f32 to vector<8x128xf32>
    %261 = arith.addf %260, %259 : vector<8x128xf32>
    %262 = arith.divf %260, %261 : vector<8x128xf32>
    %263 = arith.mulf %244, %228 : vector<8x128xf32>
    %264 = arith.addf %172, %263 : vector<8x128xf32>
    %265 = math.tanh %264 : vector<8x128xf32>
    %266 = arith.mulf %250, %238 : vector<8x128xf32>
    %267 = arith.addf %178, %266 : vector<8x128xf32>
    %268 = math.tanh %267 : vector<8x128xf32>
    %cst_49 = arith.constant 1.000000e+00 : f32
    %269 = vector.broadcast %cst_49 : f32 to vector<8x128xf32>
    %270 = arith.subf %269, %256 : vector<8x128xf32>
    %271 = arith.mulf %270, %265 : vector<8x128xf32>
    %272 = arith.mulf %256, %135 : vector<8x128xf32>
    %273 = arith.addf %271, %272 : vector<8x128xf32>
    %cst_50 = arith.constant 1.000000e+00 : f32
    %274 = vector.broadcast %cst_50 : f32 to vector<8x128xf32>
    %275 = arith.subf %274, %262 : vector<8x128xf32>
    %276 = arith.mulf %275, %268 : vector<8x128xf32>
    %277 = arith.mulf %262, %140 : vector<8x128xf32>
    %278 = arith.addf %276, %277 : vector<8x128xf32>
    %c2_51 = arith.constant 2 : index
    %c0_52 = arith.constant 0 : index
    %c0_53 = arith.constant 0 : index
    %279 = vector.load %arg2[%c2_51, %c0_52, %c0_53] : memref<5x8x128xf32, #tpu.memory_space<vmem>>, vector<1x8x128xf32>
    %280 = vector.shape_cast %279 : vector<1x8x128xf32> to vector<8x128xf32>
    %c0_54 = arith.constant 0 : index
    %281 = memref.load %arg1[%c0_54] : memref<130xf32, #tpu.memory_space<smem>>
    %282 = vector.broadcast %281 : f32 to vector<8x128xf32>
    %283 = arith.mulf %282, %280 : vector<8x128xf32>
    %c18_55 = arith.constant 18 : index
    %284 = memref.load %arg1[%c18_55] : memref<130xf32, #tpu.memory_space<smem>>
    %285 = vector.broadcast %284 : f32 to vector<8x128xf32>
    %286 = arith.addf %283, %285 : vector<8x128xf32>
    %c1_56 = arith.constant 1 : index
    %287 = memref.load %arg1[%c1_56] : memref<130xf32, #tpu.memory_space<smem>>
    %288 = vector.broadcast %287 : f32 to vector<8x128xf32>
    %289 = arith.mulf %288, %280 : vector<8x128xf32>
    %c19_57 = arith.constant 19 : index
    %290 = memref.load %arg1[%c19_57] : memref<130xf32, #tpu.memory_space<smem>>
    %291 = vector.broadcast %290 : f32 to vector<8x128xf32>
    %292 = arith.addf %289, %291 : vector<8x128xf32>
    %c2_58 = arith.constant 2 : index
    %293 = memref.load %arg1[%c2_58] : memref<130xf32, #tpu.memory_space<smem>>
    %294 = vector.broadcast %293 : f32 to vector<8x128xf32>
    %295 = arith.mulf %294, %280 : vector<8x128xf32>
    %c20_59 = arith.constant 20 : index
    %296 = memref.load %arg1[%c20_59] : memref<130xf32, #tpu.memory_space<smem>>
    %297 = vector.broadcast %296 : f32 to vector<8x128xf32>
    %298 = arith.addf %295, %297 : vector<8x128xf32>
    %c3_60 = arith.constant 3 : index
    %299 = memref.load %arg1[%c3_60] : memref<130xf32, #tpu.memory_space<smem>>
    %300 = vector.broadcast %299 : f32 to vector<8x128xf32>
    %301 = arith.mulf %300, %280 : vector<8x128xf32>
    %c21_61 = arith.constant 21 : index
    %302 = memref.load %arg1[%c21_61] : memref<130xf32, #tpu.memory_space<smem>>
    %303 = vector.broadcast %302 : f32 to vector<8x128xf32>
    %304 = arith.addf %301, %303 : vector<8x128xf32>
    %c4_62 = arith.constant 4 : index
    %305 = memref.load %arg1[%c4_62] : memref<130xf32, #tpu.memory_space<smem>>
    %306 = vector.broadcast %305 : f32 to vector<8x128xf32>
    %307 = arith.mulf %306, %280 : vector<8x128xf32>
    %c22_63 = arith.constant 22 : index
    %308 = memref.load %arg1[%c22_63] : memref<130xf32, #tpu.memory_space<smem>>
    %309 = vector.broadcast %308 : f32 to vector<8x128xf32>
    %310 = arith.addf %307, %309 : vector<8x128xf32>
    %c5_64 = arith.constant 5 : index
    %311 = memref.load %arg1[%c5_64] : memref<130xf32, #tpu.memory_space<smem>>
    %312 = vector.broadcast %311 : f32 to vector<8x128xf32>
    %313 = arith.mulf %312, %280 : vector<8x128xf32>
    %c23_65 = arith.constant 23 : index
    %314 = memref.load %arg1[%c23_65] : memref<130xf32, #tpu.memory_space<smem>>
    %315 = vector.broadcast %314 : f32 to vector<8x128xf32>
    %316 = arith.addf %313, %315 : vector<8x128xf32>
    %c6_66 = arith.constant 6 : index
    %317 = memref.load %arg1[%c6_66] : memref<130xf32, #tpu.memory_space<smem>>
    %318 = vector.broadcast %317 : f32 to vector<8x128xf32>
    %319 = arith.mulf %318, %273 : vector<8x128xf32>
    %c12_67 = arith.constant 12 : index
    %320 = memref.load %arg1[%c12_67] : memref<130xf32, #tpu.memory_space<smem>>
    %321 = vector.broadcast %320 : f32 to vector<8x128xf32>
    %322 = arith.mulf %321, %278 : vector<8x128xf32>
    %323 = arith.addf %319, %322 : vector<8x128xf32>
    %c24_68 = arith.constant 24 : index
    %324 = memref.load %arg1[%c24_68] : memref<130xf32, #tpu.memory_space<smem>>
    %325 = vector.broadcast %324 : f32 to vector<8x128xf32>
    %326 = arith.addf %323, %325 : vector<8x128xf32>
    %c7_69 = arith.constant 7 : index
    %327 = memref.load %arg1[%c7_69] : memref<130xf32, #tpu.memory_space<smem>>
    %328 = vector.broadcast %327 : f32 to vector<8x128xf32>
    %329 = arith.mulf %328, %273 : vector<8x128xf32>
    %c13_70 = arith.constant 13 : index
    %330 = memref.load %arg1[%c13_70] : memref<130xf32, #tpu.memory_space<smem>>
    %331 = vector.broadcast %330 : f32 to vector<8x128xf32>
    %332 = arith.mulf %331, %278 : vector<8x128xf32>
    %333 = arith.addf %329, %332 : vector<8x128xf32>
    %c25_71 = arith.constant 25 : index
    %334 = memref.load %arg1[%c25_71] : memref<130xf32, #tpu.memory_space<smem>>
    %335 = vector.broadcast %334 : f32 to vector<8x128xf32>
    %336 = arith.addf %333, %335 : vector<8x128xf32>
    %c8_72 = arith.constant 8 : index
    %337 = memref.load %arg1[%c8_72] : memref<130xf32, #tpu.memory_space<smem>>
    %338 = vector.broadcast %337 : f32 to vector<8x128xf32>
    %339 = arith.mulf %338, %273 : vector<8x128xf32>
    %c14_73 = arith.constant 14 : index
    %340 = memref.load %arg1[%c14_73] : memref<130xf32, #tpu.memory_space<smem>>
    %341 = vector.broadcast %340 : f32 to vector<8x128xf32>
    %342 = arith.mulf %341, %278 : vector<8x128xf32>
    %343 = arith.addf %339, %342 : vector<8x128xf32>
    %c26_74 = arith.constant 26 : index
    %344 = memref.load %arg1[%c26_74] : memref<130xf32, #tpu.memory_space<smem>>
    %345 = vector.broadcast %344 : f32 to vector<8x128xf32>
    %346 = arith.addf %343, %345 : vector<8x128xf32>
    %c9_75 = arith.constant 9 : index
    %347 = memref.load %arg1[%c9_75] : memref<130xf32, #tpu.memory_space<smem>>
    %348 = vector.broadcast %347 : f32 to vector<8x128xf32>
    %349 = arith.mulf %348, %273 : vector<8x128xf32>
    %c15_76 = arith.constant 15 : index
    %350 = memref.load %arg1[%c15_76] : memref<130xf32, #tpu.memory_space<smem>>
    %351 = vector.broadcast %350 : f32 to vector<8x128xf32>
    %352 = arith.mulf %351, %278 : vector<8x128xf32>
    %353 = arith.addf %349, %352 : vector<8x128xf32>
    %c27_77 = arith.constant 27 : index
    %354 = memref.load %arg1[%c27_77] : memref<130xf32, #tpu.memory_space<smem>>
    %355 = vector.broadcast %354 : f32 to vector<8x128xf32>
    %356 = arith.addf %353, %355 : vector<8x128xf32>
    %c10_78 = arith.constant 10 : index
    %357 = memref.load %arg1[%c10_78] : memref<130xf32, #tpu.memory_space<smem>>
    %358 = vector.broadcast %357 : f32 to vector<8x128xf32>
    %359 = arith.mulf %358, %273 : vector<8x128xf32>
    %c16_79 = arith.constant 16 : index
    %360 = memref.load %arg1[%c16_79] : memref<130xf32, #tpu.memory_space<smem>>
    %361 = vector.broadcast %360 : f32 to vector<8x128xf32>
    %362 = arith.mulf %361, %278 : vector<8x128xf32>
    %363 = arith.addf %359, %362 : vector<8x128xf32>
    %c28_80 = arith.constant 28 : index
    %364 = memref.load %arg1[%c28_80] : memref<130xf32, #tpu.memory_space<smem>>
    %365 = vector.broadcast %364 : f32 to vector<8x128xf32>
    %366 = arith.addf %363, %365 : vector<8x128xf32>
    %c11_81 = arith.constant 11 : index
    %367 = memref.load %arg1[%c11_81] : memref<130xf32, #tpu.memory_space<smem>>
    %368 = vector.broadcast %367 : f32 to vector<8x128xf32>
    %369 = arith.mulf %368, %273 : vector<8x128xf32>
    %c17_82 = arith.constant 17 : index
    %370 = memref.load %arg1[%c17_82] : memref<130xf32, #tpu.memory_space<smem>>
    %371 = vector.broadcast %370 : f32 to vector<8x128xf32>
    %372 = arith.mulf %371, %278 : vector<8x128xf32>
    %373 = arith.addf %369, %372 : vector<8x128xf32>
    %c29_83 = arith.constant 29 : index
    %374 = memref.load %arg1[%c29_83] : memref<130xf32, #tpu.memory_space<smem>>
    %375 = vector.broadcast %374 : f32 to vector<8x128xf32>
    %376 = arith.addf %373, %375 : vector<8x128xf32>
    %377 = arith.addf %286, %326 : vector<8x128xf32>
    %378 = arith.negf %377 : vector<8x128xf32>
    %379 = math.exp %378 : vector<8x128xf32>
    %cst_84 = arith.constant 1.000000e+00 : f32
    %380 = vector.broadcast %cst_84 : f32 to vector<8x128xf32>
    %381 = arith.addf %380, %379 : vector<8x128xf32>
    %382 = arith.divf %380, %381 : vector<8x128xf32>
    %383 = arith.addf %292, %336 : vector<8x128xf32>
    %384 = arith.negf %383 : vector<8x128xf32>
    %385 = math.exp %384 : vector<8x128xf32>
    %cst_85 = arith.constant 1.000000e+00 : f32
    %386 = vector.broadcast %cst_85 : f32 to vector<8x128xf32>
    %387 = arith.addf %386, %385 : vector<8x128xf32>
    %388 = arith.divf %386, %387 : vector<8x128xf32>
    %389 = arith.addf %298, %346 : vector<8x128xf32>
    %390 = arith.negf %389 : vector<8x128xf32>
    %391 = math.exp %390 : vector<8x128xf32>
    %cst_86 = arith.constant 1.000000e+00 : f32
    %392 = vector.broadcast %cst_86 : f32 to vector<8x128xf32>
    %393 = arith.addf %392, %391 : vector<8x128xf32>
    %394 = arith.divf %392, %393 : vector<8x128xf32>
    %395 = arith.addf %304, %356 : vector<8x128xf32>
    %396 = arith.negf %395 : vector<8x128xf32>
    %397 = math.exp %396 : vector<8x128xf32>
    %cst_87 = arith.constant 1.000000e+00 : f32
    %398 = vector.broadcast %cst_87 : f32 to vector<8x128xf32>
    %399 = arith.addf %398, %397 : vector<8x128xf32>
    %400 = arith.divf %398, %399 : vector<8x128xf32>
    %401 = arith.mulf %382, %366 : vector<8x128xf32>
    %402 = arith.addf %310, %401 : vector<8x128xf32>
    %403 = math.tanh %402 : vector<8x128xf32>
    %404 = arith.mulf %388, %376 : vector<8x128xf32>
    %405 = arith.addf %316, %404 : vector<8x128xf32>
    %406 = math.tanh %405 : vector<8x128xf32>
    %cst_88 = arith.constant 1.000000e+00 : f32
    %407 = vector.broadcast %cst_88 : f32 to vector<8x128xf32>
    %408 = arith.subf %407, %394 : vector<8x128xf32>
    %409 = arith.mulf %408, %403 : vector<8x128xf32>
    %410 = arith.mulf %394, %273 : vector<8x128xf32>
    %411 = arith.addf %409, %410 : vector<8x128xf32>
    %cst_89 = arith.constant 1.000000e+00 : f32
    %412 = vector.broadcast %cst_89 : f32 to vector<8x128xf32>
    %413 = arith.subf %412, %400 : vector<8x128xf32>
    %414 = arith.mulf %413, %406 : vector<8x128xf32>
    %415 = arith.mulf %400, %278 : vector<8x128xf32>
    %416 = arith.addf %414, %415 : vector<8x128xf32>
    %c3_90 = arith.constant 3 : index
    %c0_91 = arith.constant 0 : index
    %c0_92 = arith.constant 0 : index
    %417 = vector.load %arg2[%c3_90, %c0_91, %c0_92] : memref<5x8x128xf32, #tpu.memory_space<vmem>>, vector<1x8x128xf32>
    %418 = vector.shape_cast %417 : vector<1x8x128xf32> to vector<8x128xf32>
    %c0_93 = arith.constant 0 : index
    %419 = memref.load %arg1[%c0_93] : memref<130xf32, #tpu.memory_space<smem>>
    %420 = vector.broadcast %419 : f32 to vector<8x128xf32>
    %421 = arith.mulf %420, %418 : vector<8x128xf32>
    %c18_94 = arith.constant 18 : index
    %422 = memref.load %arg1[%c18_94] : memref<130xf32, #tpu.memory_space<smem>>
    %423 = vector.broadcast %422 : f32 to vector<8x128xf32>
    %424 = arith.addf %421, %423 : vector<8x128xf32>
    %c1_95 = arith.constant 1 : index
    %425 = memref.load %arg1[%c1_95] : memref<130xf32, #tpu.memory_space<smem>>
    %426 = vector.broadcast %425 : f32 to vector<8x128xf32>
    %427 = arith.mulf %426, %418 : vector<8x128xf32>
    %c19_96 = arith.constant 19 : index
    %428 = memref.load %arg1[%c19_96] : memref<130xf32, #tpu.memory_space<smem>>
    %429 = vector.broadcast %428 : f32 to vector<8x128xf32>
    %430 = arith.addf %427, %429 : vector<8x128xf32>
    %c2_97 = arith.constant 2 : index
    %431 = memref.load %arg1[%c2_97] : memref<130xf32, #tpu.memory_space<smem>>
    %432 = vector.broadcast %431 : f32 to vector<8x128xf32>
    %433 = arith.mulf %432, %418 : vector<8x128xf32>
    %c20_98 = arith.constant 20 : index
    %434 = memref.load %arg1[%c20_98] : memref<130xf32, #tpu.memory_space<smem>>
    %435 = vector.broadcast %434 : f32 to vector<8x128xf32>
    %436 = arith.addf %433, %435 : vector<8x128xf32>
    %c3_99 = arith.constant 3 : index
    %437 = memref.load %arg1[%c3_99] : memref<130xf32, #tpu.memory_space<smem>>
    %438 = vector.broadcast %437 : f32 to vector<8x128xf32>
    %439 = arith.mulf %438, %418 : vector<8x128xf32>
    %c21_100 = arith.constant 21 : index
    %440 = memref.load %arg1[%c21_100] : memref<130xf32, #tpu.memory_space<smem>>
    %441 = vector.broadcast %440 : f32 to vector<8x128xf32>
    %442 = arith.addf %439, %441 : vector<8x128xf32>
    %c4_101 = arith.constant 4 : index
    %443 = memref.load %arg1[%c4_101] : memref<130xf32, #tpu.memory_space<smem>>
    %444 = vector.broadcast %443 : f32 to vector<8x128xf32>
    %445 = arith.mulf %444, %418 : vector<8x128xf32>
    %c22_102 = arith.constant 22 : index
    %446 = memref.load %arg1[%c22_102] : memref<130xf32, #tpu.memory_space<smem>>
    %447 = vector.broadcast %446 : f32 to vector<8x128xf32>
    %448 = arith.addf %445, %447 : vector<8x128xf32>
    %c5_103 = arith.constant 5 : index
    %449 = memref.load %arg1[%c5_103] : memref<130xf32, #tpu.memory_space<smem>>
    %450 = vector.broadcast %449 : f32 to vector<8x128xf32>
    %451 = arith.mulf %450, %418 : vector<8x128xf32>
    %c23_104 = arith.constant 23 : index
    %452 = memref.load %arg1[%c23_104] : memref<130xf32, #tpu.memory_space<smem>>
    %453 = vector.broadcast %452 : f32 to vector<8x128xf32>
    %454 = arith.addf %451, %453 : vector<8x128xf32>
    %c6_105 = arith.constant 6 : index
    %455 = memref.load %arg1[%c6_105] : memref<130xf32, #tpu.memory_space<smem>>
    %456 = vector.broadcast %455 : f32 to vector<8x128xf32>
    %457 = arith.mulf %456, %411 : vector<8x128xf32>
    %c12_106 = arith.constant 12 : index
    %458 = memref.load %arg1[%c12_106] : memref<130xf32, #tpu.memory_space<smem>>
    %459 = vector.broadcast %458 : f32 to vector<8x128xf32>
    %460 = arith.mulf %459, %416 : vector<8x128xf32>
    %461 = arith.addf %457, %460 : vector<8x128xf32>
    %c24_107 = arith.constant 24 : index
    %462 = memref.load %arg1[%c24_107] : memref<130xf32, #tpu.memory_space<smem>>
    %463 = vector.broadcast %462 : f32 to vector<8x128xf32>
    %464 = arith.addf %461, %463 : vector<8x128xf32>
    %c7_108 = arith.constant 7 : index
    %465 = memref.load %arg1[%c7_108] : memref<130xf32, #tpu.memory_space<smem>>
    %466 = vector.broadcast %465 : f32 to vector<8x128xf32>
    %467 = arith.mulf %466, %411 : vector<8x128xf32>
    %c13_109 = arith.constant 13 : index
    %468 = memref.load %arg1[%c13_109] : memref<130xf32, #tpu.memory_space<smem>>
    %469 = vector.broadcast %468 : f32 to vector<8x128xf32>
    %470 = arith.mulf %469, %416 : vector<8x128xf32>
    %471 = arith.addf %467, %470 : vector<8x128xf32>
    %c25_110 = arith.constant 25 : index
    %472 = memref.load %arg1[%c25_110] : memref<130xf32, #tpu.memory_space<smem>>
    %473 = vector.broadcast %472 : f32 to vector<8x128xf32>
    %474 = arith.addf %471, %473 : vector<8x128xf32>
    %c8_111 = arith.constant 8 : index
    %475 = memref.load %arg1[%c8_111] : memref<130xf32, #tpu.memory_space<smem>>
    %476 = vector.broadcast %475 : f32 to vector<8x128xf32>
    %477 = arith.mulf %476, %411 : vector<8x128xf32>
    %c14_112 = arith.constant 14 : index
    %478 = memref.load %arg1[%c14_112] : memref<130xf32, #tpu.memory_space<smem>>
    %479 = vector.broadcast %478 : f32 to vector<8x128xf32>
    %480 = arith.mulf %479, %416 : vector<8x128xf32>
    %481 = arith.addf %477, %480 : vector<8x128xf32>
    %c26_113 = arith.constant 26 : index
    %482 = memref.load %arg1[%c26_113] : memref<130xf32, #tpu.memory_space<smem>>
    %483 = vector.broadcast %482 : f32 to vector<8x128xf32>
    %484 = arith.addf %481, %483 : vector<8x128xf32>
    %c9_114 = arith.constant 9 : index
    %485 = memref.load %arg1[%c9_114] : memref<130xf32, #tpu.memory_space<smem>>
    %486 = vector.broadcast %485 : f32 to vector<8x128xf32>
    %487 = arith.mulf %486, %411 : vector<8x128xf32>
    %c15_115 = arith.constant 15 : index
    %488 = memref.load %arg1[%c15_115] : memref<130xf32, #tpu.memory_space<smem>>
    %489 = vector.broadcast %488 : f32 to vector<8x128xf32>
    %490 = arith.mulf %489, %416 : vector<8x128xf32>
    %491 = arith.addf %487, %490 : vector<8x128xf32>
    %c27_116 = arith.constant 27 : index
    %492 = memref.load %arg1[%c27_116] : memref<130xf32, #tpu.memory_space<smem>>
    %493 = vector.broadcast %492 : f32 to vector<8x128xf32>
    %494 = arith.addf %491, %493 : vector<8x128xf32>
    %c10_117 = arith.constant 10 : index
    %495 = memref.load %arg1[%c10_117] : memref<130xf32, #tpu.memory_space<smem>>
    %496 = vector.broadcast %495 : f32 to vector<8x128xf32>
    %497 = arith.mulf %496, %411 : vector<8x128xf32>
    %c16_118 = arith.constant 16 : index
    %498 = memref.load %arg1[%c16_118] : memref<130xf32, #tpu.memory_space<smem>>
    %499 = vector.broadcast %498 : f32 to vector<8x128xf32>
    %500 = arith.mulf %499, %416 : vector<8x128xf32>
    %501 = arith.addf %497, %500 : vector<8x128xf32>
    %c28_119 = arith.constant 28 : index
    %502 = memref.load %arg1[%c28_119] : memref<130xf32, #tpu.memory_space<smem>>
    %503 = vector.broadcast %502 : f32 to vector<8x128xf32>
    %504 = arith.addf %501, %503 : vector<8x128xf32>
    %c11_120 = arith.constant 11 : index
    %505 = memref.load %arg1[%c11_120] : memref<130xf32, #tpu.memory_space<smem>>
    %506 = vector.broadcast %505 : f32 to vector<8x128xf32>
    %507 = arith.mulf %506, %411 : vector<8x128xf32>
    %c17_121 = arith.constant 17 : index
    %508 = memref.load %arg1[%c17_121] : memref<130xf32, #tpu.memory_space<smem>>
    %509 = vector.broadcast %508 : f32 to vector<8x128xf32>
    %510 = arith.mulf %509, %416 : vector<8x128xf32>
    %511 = arith.addf %507, %510 : vector<8x128xf32>
    %c29_122 = arith.constant 29 : index
    %512 = memref.load %arg1[%c29_122] : memref<130xf32, #tpu.memory_space<smem>>
    %513 = vector.broadcast %512 : f32 to vector<8x128xf32>
    %514 = arith.addf %511, %513 : vector<8x128xf32>
    %515 = arith.addf %424, %464 : vector<8x128xf32>
    %516 = arith.negf %515 : vector<8x128xf32>
    %517 = math.exp %516 : vector<8x128xf32>
    %cst_123 = arith.constant 1.000000e+00 : f32
    %518 = vector.broadcast %cst_123 : f32 to vector<8x128xf32>
    %519 = arith.addf %518, %517 : vector<8x128xf32>
    %520 = arith.divf %518, %519 : vector<8x128xf32>
    %521 = arith.addf %430, %474 : vector<8x128xf32>
    %522 = arith.negf %521 : vector<8x128xf32>
    %523 = math.exp %522 : vector<8x128xf32>
    %cst_124 = arith.constant 1.000000e+00 : f32
    %524 = vector.broadcast %cst_124 : f32 to vector<8x128xf32>
    %525 = arith.addf %524, %523 : vector<8x128xf32>
    %526 = arith.divf %524, %525 : vector<8x128xf32>
    %527 = arith.addf %436, %484 : vector<8x128xf32>
    %528 = arith.negf %527 : vector<8x128xf32>
    %529 = math.exp %528 : vector<8x128xf32>
    %cst_125 = arith.constant 1.000000e+00 : f32
    %530 = vector.broadcast %cst_125 : f32 to vector<8x128xf32>
    %531 = arith.addf %530, %529 : vector<8x128xf32>
    %532 = arith.divf %530, %531 : vector<8x128xf32>
    %533 = arith.addf %442, %494 : vector<8x128xf32>
    %534 = arith.negf %533 : vector<8x128xf32>
    %535 = math.exp %534 : vector<8x128xf32>
    %cst_126 = arith.constant 1.000000e+00 : f32
    %536 = vector.broadcast %cst_126 : f32 to vector<8x128xf32>
    %537 = arith.addf %536, %535 : vector<8x128xf32>
    %538 = arith.divf %536, %537 : vector<8x128xf32>
    %539 = arith.mulf %520, %504 : vector<8x128xf32>
    %540 = arith.addf %448, %539 : vector<8x128xf32>
    %541 = math.tanh %540 : vector<8x128xf32>
    %542 = arith.mulf %526, %514 : vector<8x128xf32>
    %543 = arith.addf %454, %542 : vector<8x128xf32>
    %544 = math.tanh %543 : vector<8x128xf32>
    %cst_127 = arith.constant 1.000000e+00 : f32
    %545 = vector.broadcast %cst_127 : f32 to vector<8x128xf32>
    %546 = arith.subf %545, %532 : vector<8x128xf32>
    %547 = arith.mulf %546, %541 : vector<8x128xf32>
    %548 = arith.mulf %532, %411 : vector<8x128xf32>
    %549 = arith.addf %547, %548 : vector<8x128xf32>
    %cst_128 = arith.constant 1.000000e+00 : f32
    %550 = vector.broadcast %cst_128 : f32 to vector<8x128xf32>
    %551 = arith.subf %550, %538 : vector<8x128xf32>
    %552 = arith.mulf %551, %544 : vector<8x128xf32>
    %553 = arith.mulf %538, %416 : vector<8x128xf32>
    %554 = arith.addf %552, %553 : vector<8x128xf32>
    %c4_129 = arith.constant 4 : index
    %c0_130 = arith.constant 0 : index
    %c0_131 = arith.constant 0 : index
    %555 = vector.load %arg2[%c4_129, %c0_130, %c0_131] : memref<5x8x128xf32, #tpu.memory_space<vmem>>, vector<1x8x128xf32>
    %556 = vector.shape_cast %555 : vector<1x8x128xf32> to vector<8x128xf32>
    %557 = arith.mulf %135, %0 : vector<8x128xf32>
    %cst_132 = arith.constant dense<0.000000e+00> : vector<8xf32>
    %558 = vector.multi_reduction <add>, %557, %cst_132 [1] : vector<8x128xf32> to vector<8xf32>
    %559 = vector.shape_cast %558 : vector<8xf32> to vector<8x1xf32>
    %c48 = arith.constant 48 : index
    %560 = memref.load %arg1[%c48] : memref<130xf32, #tpu.memory_space<smem>>
    %561 = vector.broadcast %560 : f32 to vector<8x1xf32>
    %562 = arith.mulf %561, %559 : vector<8x1xf32>
    %563 = vector.broadcast %562 : vector<8x1xf32> to vector<8x128xf32>
    %564 = arith.subf %135, %563 : vector<8x128xf32>
    %565 = arith.mulf %564, %564 : vector<8x128xf32>
    %566 = arith.mulf %565, %0 : vector<8x128xf32>
    %cst_133 = arith.constant dense<0.000000e+00> : vector<8xf32>
    %567 = vector.multi_reduction <add>, %566, %cst_133 [1] : vector<8x128xf32> to vector<8xf32>
    %568 = vector.shape_cast %567 : vector<8xf32> to vector<8x1xf32>
    %c30 = arith.constant 30 : index
    %569 = memref.load %arg1[%c30] : memref<130xf32, #tpu.memory_space<smem>>
    %cst_134 = arith.constant 9.99999974E-6 : f32
    %570 = vector.broadcast %cst_134 : f32 to vector<8x1xf32>
    %571 = arith.addf %568, %570 : vector<8x1xf32>
    %572 = math.rsqrt %571 : vector<8x1xf32>
    %573 = vector.broadcast %572 : vector<8x1xf32> to vector<8x128xf32>
    %574 = arith.mulf %564, %573 : vector<8x128xf32>
    %575 = vector.broadcast %569 : f32 to vector<8x128xf32>
    %576 = arith.mulf %575, %574 : vector<8x128xf32>
    %c39 = arith.constant 39 : index
    %577 = memref.load %arg1[%c39] : memref<130xf32, #tpu.memory_space<smem>>
    %578 = vector.broadcast %577 : f32 to vector<8x128xf32>
    %579 = arith.addf %576, %578 : vector<8x128xf32>
    %cst_135 = arith.constant 0.000000e+00 : f32
    %580 = vector.broadcast %cst_135 : f32 to vector<8x128xf32>
    %581 = arith.cmpf ogt, %579, %580 : vector<8x128xf32>
    %cst_136 = arith.constant 0.00999999977 : f32
    %582 = vector.broadcast %cst_136 : f32 to vector<8x128xf32>
    %583 = arith.mulf %582, %579 : vector<8x128xf32>
    %584 = arith.select %581, %579, %583 : vector<8x128xi1>, vector<8x128xf32>
    %585 = arith.mulf %140, %0 : vector<8x128xf32>
    %cst_137 = arith.constant dense<0.000000e+00> : vector<8xf32>
    %586 = vector.multi_reduction <add>, %585, %cst_137 [1] : vector<8x128xf32> to vector<8xf32>
    %587 = vector.shape_cast %586 : vector<8xf32> to vector<8x1xf32>
    %c49 = arith.constant 49 : index
    %588 = memref.load %arg1[%c49] : memref<130xf32, #tpu.memory_space<smem>>
    %589 = vector.broadcast %588 : f32 to vector<8x1xf32>
    %590 = arith.mulf %589, %587 : vector<8x1xf32>
    %591 = vector.broadcast %590 : vector<8x1xf32> to vector<8x128xf32>
    %592 = arith.subf %140, %591 : vector<8x128xf32>
    %593 = arith.mulf %592, %592 : vector<8x128xf32>
    %594 = arith.mulf %593, %0 : vector<8x128xf32>
    %cst_138 = arith.constant dense<0.000000e+00> : vector<8xf32>
    %595 = vector.multi_reduction <add>, %594, %cst_138 [1] : vector<8x128xf32> to vector<8xf32>
    %596 = vector.shape_cast %595 : vector<8xf32> to vector<8x1xf32>
    %c31 = arith.constant 31 : index
    %597 = memref.load %arg1[%c31] : memref<130xf32, #tpu.memory_space<smem>>
    %cst_139 = arith.constant 9.99999974E-6 : f32
    %598 = vector.broadcast %cst_139 : f32 to vector<8x1xf32>
    %599 = arith.addf %596, %598 : vector<8x1xf32>
    %600 = math.rsqrt %599 : vector<8x1xf32>
    %601 = vector.broadcast %600 : vector<8x1xf32> to vector<8x128xf32>
    %602 = arith.mulf %592, %601 : vector<8x128xf32>
    %603 = vector.broadcast %597 : f32 to vector<8x128xf32>
    %604 = arith.mulf %603, %602 : vector<8x128xf32>
    %c40 = arith.constant 40 : index
    %605 = memref.load %arg1[%c40] : memref<130xf32, #tpu.memory_space<smem>>
    %606 = vector.broadcast %605 : f32 to vector<8x128xf32>
    %607 = arith.addf %604, %606 : vector<8x128xf32>
    %cst_140 = arith.constant 0.000000e+00 : f32
    %608 = vector.broadcast %cst_140 : f32 to vector<8x128xf32>
    %609 = arith.cmpf ogt, %607, %608 : vector<8x128xf32>
    %cst_141 = arith.constant 0.00999999977 : f32
    %610 = vector.broadcast %cst_141 : f32 to vector<8x128xf32>
    %611 = arith.mulf %610, %607 : vector<8x128xf32>
    %612 = arith.select %609, %607, %611 : vector<8x128xi1>, vector<8x128xf32>
    %613 = arith.mulf %273, %0 : vector<8x128xf32>
    %cst_142 = arith.constant dense<0.000000e+00> : vector<8xf32>
    %614 = vector.multi_reduction <add>, %613, %cst_142 [1] : vector<8x128xf32> to vector<8xf32>
    %615 = vector.shape_cast %614 : vector<8xf32> to vector<8x1xf32>
    %c50 = arith.constant 50 : index
    %616 = memref.load %arg1[%c50] : memref<130xf32, #tpu.memory_space<smem>>
    %617 = vector.broadcast %616 : f32 to vector<8x1xf32>
    %618 = arith.mulf %617, %615 : vector<8x1xf32>
    %619 = vector.broadcast %618 : vector<8x1xf32> to vector<8x128xf32>
    %620 = arith.subf %273, %619 : vector<8x128xf32>
    %621 = arith.mulf %620, %620 : vector<8x128xf32>
    %622 = arith.mulf %621, %0 : vector<8x128xf32>
    %cst_143 = arith.constant dense<0.000000e+00> : vector<8xf32>
    %623 = vector.multi_reduction <add>, %622, %cst_143 [1] : vector<8x128xf32> to vector<8xf32>
    %624 = vector.shape_cast %623 : vector<8xf32> to vector<8x1xf32>
    %c32 = arith.constant 32 : index
    %625 = memref.load %arg1[%c32] : memref<130xf32, #tpu.memory_space<smem>>
    %cst_144 = arith.constant 9.99999974E-6 : f32
    %626 = vector.broadcast %cst_144 : f32 to vector<8x1xf32>
    %627 = arith.addf %624, %626 : vector<8x1xf32>
    %628 = math.rsqrt %627 : vector<8x1xf32>
    %629 = vector.broadcast %628 : vector<8x1xf32> to vector<8x128xf32>
    %630 = arith.mulf %620, %629 : vector<8x128xf32>
    %631 = vector.broadcast %625 : f32 to vector<8x128xf32>
    %632 = arith.mulf %631, %630 : vector<8x128xf32>
    %c41 = arith.constant 41 : index
    %633 = memref.load %arg1[%c41] : memref<130xf32, #tpu.memory_space<smem>>
    %634 = vector.broadcast %633 : f32 to vector<8x128xf32>
    %635 = arith.addf %632, %634 : vector<8x128xf32>
    %cst_145 = arith.constant 0.000000e+00 : f32
    %636 = vector.broadcast %cst_145 : f32 to vector<8x128xf32>
    %637 = arith.cmpf ogt, %635, %636 : vector<8x128xf32>
    %cst_146 = arith.constant 0.00999999977 : f32
    %638 = vector.broadcast %cst_146 : f32 to vector<8x128xf32>
    %639 = arith.mulf %638, %635 : vector<8x128xf32>
    %640 = arith.select %637, %635, %639 : vector<8x128xi1>, vector<8x128xf32>
    %641 = arith.mulf %278, %0 : vector<8x128xf32>
    %cst_147 = arith.constant dense<0.000000e+00> : vector<8xf32>
    %642 = vector.multi_reduction <add>, %641, %cst_147 [1] : vector<8x128xf32> to vector<8xf32>
    %643 = vector.shape_cast %642 : vector<8xf32> to vector<8x1xf32>
    %c51 = arith.constant 51 : index
    %644 = memref.load %arg1[%c51] : memref<130xf32, #tpu.memory_space<smem>>
    %645 = vector.broadcast %644 : f32 to vector<8x1xf32>
    %646 = arith.mulf %645, %643 : vector<8x1xf32>
    %647 = vector.broadcast %646 : vector<8x1xf32> to vector<8x128xf32>
    %648 = arith.subf %278, %647 : vector<8x128xf32>
    %649 = arith.mulf %648, %648 : vector<8x128xf32>
    %650 = arith.mulf %649, %0 : vector<8x128xf32>
    %cst_148 = arith.constant dense<0.000000e+00> : vector<8xf32>
    %651 = vector.multi_reduction <add>, %650, %cst_148 [1] : vector<8x128xf32> to vector<8xf32>
    %652 = vector.shape_cast %651 : vector<8xf32> to vector<8x1xf32>
    %c33 = arith.constant 33 : index
    %653 = memref.load %arg1[%c33] : memref<130xf32, #tpu.memory_space<smem>>
    %cst_149 = arith.constant 9.99999974E-6 : f32
    %654 = vector.broadcast %cst_149 : f32 to vector<8x1xf32>
    %655 = arith.addf %652, %654 : vector<8x1xf32>
    %656 = math.rsqrt %655 : vector<8x1xf32>
    %657 = vector.broadcast %656 : vector<8x1xf32> to vector<8x128xf32>
    %658 = arith.mulf %648, %657 : vector<8x128xf32>
    %659 = vector.broadcast %653 : f32 to vector<8x128xf32>
    %660 = arith.mulf %659, %658 : vector<8x128xf32>
    %c42 = arith.constant 42 : index
    %661 = memref.load %arg1[%c42] : memref<130xf32, #tpu.memory_space<smem>>
    %662 = vector.broadcast %661 : f32 to vector<8x128xf32>
    %663 = arith.addf %660, %662 : vector<8x128xf32>
    %cst_150 = arith.constant 0.000000e+00 : f32
    %664 = vector.broadcast %cst_150 : f32 to vector<8x128xf32>
    %665 = arith.cmpf ogt, %663, %664 : vector<8x128xf32>
    %cst_151 = arith.constant 0.00999999977 : f32
    %666 = vector.broadcast %cst_151 : f32 to vector<8x128xf32>
    %667 = arith.mulf %666, %663 : vector<8x128xf32>
    %668 = arith.select %665, %663, %667 : vector<8x128xi1>, vector<8x128xf32>
    %669 = arith.mulf %411, %0 : vector<8x128xf32>
    %cst_152 = arith.constant dense<0.000000e+00> : vector<8xf32>
    %670 = vector.multi_reduction <add>, %669, %cst_152 [1] : vector<8x128xf32> to vector<8xf32>
    %671 = vector.shape_cast %670 : vector<8xf32> to vector<8x1xf32>
    %c52 = arith.constant 52 : index
    %672 = memref.load %arg1[%c52] : memref<130xf32, #tpu.memory_space<smem>>
    %673 = vector.broadcast %672 : f32 to vector<8x1xf32>
    %674 = arith.mulf %673, %671 : vector<8x1xf32>
    %675 = vector.broadcast %674 : vector<8x1xf32> to vector<8x128xf32>
    %676 = arith.subf %411, %675 : vector<8x128xf32>
    %677 = arith.mulf %676, %676 : vector<8x128xf32>
    %678 = arith.mulf %677, %0 : vector<8x128xf32>
    %cst_153 = arith.constant dense<0.000000e+00> : vector<8xf32>
    %679 = vector.multi_reduction <add>, %678, %cst_153 [1] : vector<8x128xf32> to vector<8xf32>
    %680 = vector.shape_cast %679 : vector<8xf32> to vector<8x1xf32>
    %c34 = arith.constant 34 : index
    %681 = memref.load %arg1[%c34] : memref<130xf32, #tpu.memory_space<smem>>
    %cst_154 = arith.constant 9.99999974E-6 : f32
    %682 = vector.broadcast %cst_154 : f32 to vector<8x1xf32>
    %683 = arith.addf %680, %682 : vector<8x1xf32>
    %684 = math.rsqrt %683 : vector<8x1xf32>
    %685 = vector.broadcast %684 : vector<8x1xf32> to vector<8x128xf32>
    %686 = arith.mulf %676, %685 : vector<8x128xf32>
    %687 = vector.broadcast %681 : f32 to vector<8x128xf32>
    %688 = arith.mulf %687, %686 : vector<8x128xf32>
    %c43 = arith.constant 43 : index
    %689 = memref.load %arg1[%c43] : memref<130xf32, #tpu.memory_space<smem>>
    %690 = vector.broadcast %689 : f32 to vector<8x128xf32>
    %691 = arith.addf %688, %690 : vector<8x128xf32>
    %cst_155 = arith.constant 0.000000e+00 : f32
    %692 = vector.broadcast %cst_155 : f32 to vector<8x128xf32>
    %693 = arith.cmpf ogt, %691, %692 : vector<8x128xf32>
    %cst_156 = arith.constant 0.00999999977 : f32
    %694 = vector.broadcast %cst_156 : f32 to vector<8x128xf32>
    %695 = arith.mulf %694, %691 : vector<8x128xf32>
    %696 = arith.select %693, %691, %695 : vector<8x128xi1>, vector<8x128xf32>
    %697 = arith.mulf %416, %0 : vector<8x128xf32>
    %cst_157 = arith.constant dense<0.000000e+00> : vector<8xf32>
    %698 = vector.multi_reduction <add>, %697, %cst_157 [1] : vector<8x128xf32> to vector<8xf32>
    %699 = vector.shape_cast %698 : vector<8xf32> to vector<8x1xf32>
    %c53 = arith.constant 53 : index
    %700 = memref.load %arg1[%c53] : memref<130xf32, #tpu.memory_space<smem>>
    %701 = vector.broadcast %700 : f32 to vector<8x1xf32>
    %702 = arith.mulf %701, %699 : vector<8x1xf32>
    %703 = vector.broadcast %702 : vector<8x1xf32> to vector<8x128xf32>
    %704 = arith.subf %416, %703 : vector<8x128xf32>
    %705 = arith.mulf %704, %704 : vector<8x128xf32>
    %706 = arith.mulf %705, %0 : vector<8x128xf32>
    %cst_158 = arith.constant dense<0.000000e+00> : vector<8xf32>
    %707 = vector.multi_reduction <add>, %706, %cst_158 [1] : vector<8x128xf32> to vector<8xf32>
    %708 = vector.shape_cast %707 : vector<8xf32> to vector<8x1xf32>
    %c35 = arith.constant 35 : index
    %709 = memref.load %arg1[%c35] : memref<130xf32, #tpu.memory_space<smem>>
    %cst_159 = arith.constant 9.99999974E-6 : f32
    %710 = vector.broadcast %cst_159 : f32 to vector<8x1xf32>
    %711 = arith.addf %708, %710 : vector<8x1xf32>
    %712 = math.rsqrt %711 : vector<8x1xf32>
    %713 = vector.broadcast %712 : vector<8x1xf32> to vector<8x128xf32>
    %714 = arith.mulf %704, %713 : vector<8x128xf32>
    %715 = vector.broadcast %709 : f32 to vector<8x128xf32>
    %716 = arith.mulf %715, %714 : vector<8x128xf32>
    %c44 = arith.constant 44 : index
    %717 = memref.load %arg1[%c44] : memref<130xf32, #tpu.memory_space<smem>>
    %718 = vector.broadcast %717 : f32 to vector<8x128xf32>
    %719 = arith.addf %716, %718 : vector<8x128xf32>
    %cst_160 = arith.constant 0.000000e+00 : f32
    %720 = vector.broadcast %cst_160 : f32 to vector<8x128xf32>
    %721 = arith.cmpf ogt, %719, %720 : vector<8x128xf32>
    %cst_161 = arith.constant 0.00999999977 : f32
    %722 = vector.broadcast %cst_161 : f32 to vector<8x128xf32>
    %723 = arith.mulf %722, %719 : vector<8x128xf32>
    %724 = arith.select %721, %719, %723 : vector<8x128xi1>, vector<8x128xf32>
    %725 = arith.mulf %549, %0 : vector<8x128xf32>
    %cst_162 = arith.constant dense<0.000000e+00> : vector<8xf32>
    %726 = vector.multi_reduction <add>, %725, %cst_162 [1] : vector<8x128xf32> to vector<8xf32>
    %727 = vector.shape_cast %726 : vector<8xf32> to vector<8x1xf32>
    %c54 = arith.constant 54 : index
    %728 = memref.load %arg1[%c54] : memref<130xf32, #tpu.memory_space<smem>>
    %729 = vector.broadcast %728 : f32 to vector<8x1xf32>
    %730 = arith.mulf %729, %727 : vector<8x1xf32>
    %731 = vector.broadcast %730 : vector<8x1xf32> to vector<8x128xf32>
    %732 = arith.subf %549, %731 : vector<8x128xf32>
    %733 = arith.mulf %732, %732 : vector<8x128xf32>
    %734 = arith.mulf %733, %0 : vector<8x128xf32>
    %cst_163 = arith.constant dense<0.000000e+00> : vector<8xf32>
    %735 = vector.multi_reduction <add>, %734, %cst_163 [1] : vector<8x128xf32> to vector<8xf32>
    %736 = vector.shape_cast %735 : vector<8xf32> to vector<8x1xf32>
    %c36 = arith.constant 36 : index
    %737 = memref.load %arg1[%c36] : memref<130xf32, #tpu.memory_space<smem>>
    %cst_164 = arith.constant 9.99999974E-6 : f32
    %738 = vector.broadcast %cst_164 : f32 to vector<8x1xf32>
    %739 = arith.addf %736, %738 : vector<8x1xf32>
    %740 = math.rsqrt %739 : vector<8x1xf32>
    %741 = vector.broadcast %740 : vector<8x1xf32> to vector<8x128xf32>
    %742 = arith.mulf %732, %741 : vector<8x128xf32>
    %743 = vector.broadcast %737 : f32 to vector<8x128xf32>
    %744 = arith.mulf %743, %742 : vector<8x128xf32>
    %c45 = arith.constant 45 : index
    %745 = memref.load %arg1[%c45] : memref<130xf32, #tpu.memory_space<smem>>
    %746 = vector.broadcast %745 : f32 to vector<8x128xf32>
    %747 = arith.addf %744, %746 : vector<8x128xf32>
    %cst_165 = arith.constant 0.000000e+00 : f32
    %748 = vector.broadcast %cst_165 : f32 to vector<8x128xf32>
    %749 = arith.cmpf ogt, %747, %748 : vector<8x128xf32>
    %cst_166 = arith.constant 0.00999999977 : f32
    %750 = vector.broadcast %cst_166 : f32 to vector<8x128xf32>
    %751 = arith.mulf %750, %747 : vector<8x128xf32>
    %752 = arith.select %749, %747, %751 : vector<8x128xi1>, vector<8x128xf32>
    %753 = arith.mulf %554, %0 : vector<8x128xf32>
    %cst_167 = arith.constant dense<0.000000e+00> : vector<8xf32>
    %754 = vector.multi_reduction <add>, %753, %cst_167 [1] : vector<8x128xf32> to vector<8xf32>
    %755 = vector.shape_cast %754 : vector<8xf32> to vector<8x1xf32>
    %c55 = arith.constant 55 : index
    %756 = memref.load %arg1[%c55] : memref<130xf32, #tpu.memory_space<smem>>
    %757 = vector.broadcast %756 : f32 to vector<8x1xf32>
    %758 = arith.mulf %757, %755 : vector<8x1xf32>
    %759 = vector.broadcast %758 : vector<8x1xf32> to vector<8x128xf32>
    %760 = arith.subf %554, %759 : vector<8x128xf32>
    %761 = arith.mulf %760, %760 : vector<8x128xf32>
    %762 = arith.mulf %761, %0 : vector<8x128xf32>
    %cst_168 = arith.constant dense<0.000000e+00> : vector<8xf32>
    %763 = vector.multi_reduction <add>, %762, %cst_168 [1] : vector<8x128xf32> to vector<8xf32>
    %764 = vector.shape_cast %763 : vector<8xf32> to vector<8x1xf32>
    %c37 = arith.constant 37 : index
    %765 = memref.load %arg1[%c37] : memref<130xf32, #tpu.memory_space<smem>>
    %cst_169 = arith.constant 9.99999974E-6 : f32
    %766 = vector.broadcast %cst_169 : f32 to vector<8x1xf32>
    %767 = arith.addf %764, %766 : vector<8x1xf32>
    %768 = math.rsqrt %767 : vector<8x1xf32>
    %769 = vector.broadcast %768 : vector<8x1xf32> to vector<8x128xf32>
    %770 = arith.mulf %760, %769 : vector<8x128xf32>
    %771 = vector.broadcast %765 : f32 to vector<8x128xf32>
    %772 = arith.mulf %771, %770 : vector<8x128xf32>
    %c46 = arith.constant 46 : index
    %773 = memref.load %arg1[%c46] : memref<130xf32, #tpu.memory_space<smem>>
    %774 = vector.broadcast %773 : f32 to vector<8x128xf32>
    %775 = arith.addf %772, %774 : vector<8x128xf32>
    %cst_170 = arith.constant 0.000000e+00 : f32
    %776 = vector.broadcast %cst_170 : f32 to vector<8x128xf32>
    %777 = arith.cmpf ogt, %775, %776 : vector<8x128xf32>
    %cst_171 = arith.constant 0.00999999977 : f32
    %778 = vector.broadcast %cst_171 : f32 to vector<8x128xf32>
    %779 = arith.mulf %778, %775 : vector<8x128xf32>
    %780 = arith.select %777, %775, %779 : vector<8x128xi1>, vector<8x128xf32>
    %781 = arith.mulf %556, %0 : vector<8x128xf32>
    %cst_172 = arith.constant dense<0.000000e+00> : vector<8xf32>
    %782 = vector.multi_reduction <add>, %781, %cst_172 [1] : vector<8x128xf32> to vector<8xf32>
    %783 = vector.shape_cast %782 : vector<8xf32> to vector<8x1xf32>
    %c56 = arith.constant 56 : index
    %784 = memref.load %arg1[%c56] : memref<130xf32, #tpu.memory_space<smem>>
    %785 = vector.broadcast %784 : f32 to vector<8x1xf32>
    %786 = arith.mulf %785, %783 : vector<8x1xf32>
    %787 = vector.broadcast %786 : vector<8x1xf32> to vector<8x128xf32>
    %788 = arith.subf %556, %787 : vector<8x128xf32>
    %789 = arith.mulf %788, %788 : vector<8x128xf32>
    %790 = arith.mulf %789, %0 : vector<8x128xf32>
    %cst_173 = arith.constant dense<0.000000e+00> : vector<8xf32>
    %791 = vector.multi_reduction <add>, %790, %cst_173 [1] : vector<8x128xf32> to vector<8xf32>
    %792 = vector.shape_cast %791 : vector<8xf32> to vector<8x1xf32>
    %c38 = arith.constant 38 : index
    %793 = memref.load %arg1[%c38] : memref<130xf32, #tpu.memory_space<smem>>
    %cst_174 = arith.constant 9.99999974E-6 : f32
    %794 = vector.broadcast %cst_174 : f32 to vector<8x1xf32>
    %795 = arith.addf %792, %794 : vector<8x1xf32>
    %796 = math.rsqrt %795 : vector<8x1xf32>
    %797 = vector.broadcast %796 : vector<8x1xf32> to vector<8x128xf32>
    %798 = arith.mulf %788, %797 : vector<8x128xf32>
    %799 = vector.broadcast %793 : f32 to vector<8x128xf32>
    %800 = arith.mulf %799, %798 : vector<8x128xf32>
    %c47 = arith.constant 47 : index
    %801 = memref.load %arg1[%c47] : memref<130xf32, #tpu.memory_space<smem>>
    %802 = vector.broadcast %801 : f32 to vector<8x128xf32>
    %803 = arith.addf %800, %802 : vector<8x128xf32>
    %cst_175 = arith.constant 0.000000e+00 : f32
    %804 = vector.broadcast %cst_175 : f32 to vector<8x128xf32>
    %805 = arith.cmpf ogt, %803, %804 : vector<8x128xf32>
    %cst_176 = arith.constant 0.00999999977 : f32
    %806 = vector.broadcast %cst_176 : f32 to vector<8x128xf32>
    %807 = arith.mulf %806, %803 : vector<8x128xf32>
    %808 = arith.select %805, %803, %807 : vector<8x128xi1>, vector<8x128xf32>
    %c57 = arith.constant 57 : index
    %809 = memref.load %arg1[%c57] : memref<130xf32, #tpu.memory_space<smem>>
    %810 = vector.broadcast %809 : f32 to vector<8x128xf32>
    %811 = arith.mulf %810, %584 : vector<8x128xf32>
    %c65 = arith.constant 65 : index
    %812 = memref.load %arg1[%c65] : memref<130xf32, #tpu.memory_space<smem>>
    %813 = vector.broadcast %812 : f32 to vector<8x128xf32>
    %814 = arith.mulf %813, %612 : vector<8x128xf32>
    %815 = arith.addf %811, %814 : vector<8x128xf32>
    %c73 = arith.constant 73 : index
    %816 = memref.load %arg1[%c73] : memref<130xf32, #tpu.memory_space<smem>>
    %817 = vector.broadcast %816 : f32 to vector<8x128xf32>
    %818 = arith.mulf %817, %640 : vector<8x128xf32>
    %819 = arith.addf %815, %818 : vector<8x128xf32>
    %c81 = arith.constant 81 : index
    %820 = memref.load %arg1[%c81] : memref<130xf32, #tpu.memory_space<smem>>
    %821 = vector.broadcast %820 : f32 to vector<8x128xf32>
    %822 = arith.mulf %821, %668 : vector<8x128xf32>
    %823 = arith.addf %819, %822 : vector<8x128xf32>
    %c89 = arith.constant 89 : index
    %824 = memref.load %arg1[%c89] : memref<130xf32, #tpu.memory_space<smem>>
    %825 = vector.broadcast %824 : f32 to vector<8x128xf32>
    %826 = arith.mulf %825, %696 : vector<8x128xf32>
    %827 = arith.addf %823, %826 : vector<8x128xf32>
    %c97 = arith.constant 97 : index
    %828 = memref.load %arg1[%c97] : memref<130xf32, #tpu.memory_space<smem>>
    %829 = vector.broadcast %828 : f32 to vector<8x128xf32>
    %830 = arith.mulf %829, %724 : vector<8x128xf32>
    %831 = arith.addf %827, %830 : vector<8x128xf32>
    %c105 = arith.constant 105 : index
    %832 = memref.load %arg1[%c105] : memref<130xf32, #tpu.memory_space<smem>>
    %833 = vector.broadcast %832 : f32 to vector<8x128xf32>
    %834 = arith.mulf %833, %752 : vector<8x128xf32>
    %835 = arith.addf %831, %834 : vector<8x128xf32>
    %c113 = arith.constant 113 : index
    %836 = memref.load %arg1[%c113] : memref<130xf32, #tpu.memory_space<smem>>
    %837 = vector.broadcast %836 : f32 to vector<8x128xf32>
    %838 = arith.mulf %837, %780 : vector<8x128xf32>
    %839 = arith.addf %835, %838 : vector<8x128xf32>
    %c121 = arith.constant 121 : index
    %840 = memref.load %arg1[%c121] : memref<130xf32, #tpu.memory_space<smem>>
    %841 = vector.broadcast %840 : f32 to vector<8x128xf32>
    %842 = arith.mulf %841, %808 : vector<8x128xf32>
    %843 = arith.addf %839, %842 : vector<8x128xf32>
    %c58 = arith.constant 58 : index
    %844 = memref.load %arg1[%c58] : memref<130xf32, #tpu.memory_space<smem>>
    %845 = vector.broadcast %844 : f32 to vector<8x128xf32>
    %846 = arith.mulf %845, %584 : vector<8x128xf32>
    %c66 = arith.constant 66 : index
    %847 = memref.load %arg1[%c66] : memref<130xf32, #tpu.memory_space<smem>>
    %848 = vector.broadcast %847 : f32 to vector<8x128xf32>
    %849 = arith.mulf %848, %612 : vector<8x128xf32>
    %850 = arith.addf %846, %849 : vector<8x128xf32>
    %c74 = arith.constant 74 : index
    %851 = memref.load %arg1[%c74] : memref<130xf32, #tpu.memory_space<smem>>
    %852 = vector.broadcast %851 : f32 to vector<8x128xf32>
    %853 = arith.mulf %852, %640 : vector<8x128xf32>
    %854 = arith.addf %850, %853 : vector<8x128xf32>
    %c82 = arith.constant 82 : index
    %855 = memref.load %arg1[%c82] : memref<130xf32, #tpu.memory_space<smem>>
    %856 = vector.broadcast %855 : f32 to vector<8x128xf32>
    %857 = arith.mulf %856, %668 : vector<8x128xf32>
    %858 = arith.addf %854, %857 : vector<8x128xf32>
    %c90 = arith.constant 90 : index
    %859 = memref.load %arg1[%c90] : memref<130xf32, #tpu.memory_space<smem>>
    %860 = vector.broadcast %859 : f32 to vector<8x128xf32>
    %861 = arith.mulf %860, %696 : vector<8x128xf32>
    %862 = arith.addf %858, %861 : vector<8x128xf32>
    %c98 = arith.constant 98 : index
    %863 = memref.load %arg1[%c98] : memref<130xf32, #tpu.memory_space<smem>>
    %864 = vector.broadcast %863 : f32 to vector<8x128xf32>
    %865 = arith.mulf %864, %724 : vector<8x128xf32>
    %866 = arith.addf %862, %865 : vector<8x128xf32>
    %c106 = arith.constant 106 : index
    %867 = memref.load %arg1[%c106] : memref<130xf32, #tpu.memory_space<smem>>
    %868 = vector.broadcast %867 : f32 to vector<8x128xf32>
    %869 = arith.mulf %868, %752 : vector<8x128xf32>
    %870 = arith.addf %866, %869 : vector<8x128xf32>
    %c114 = arith.constant 114 : index
    %871 = memref.load %arg1[%c114] : memref<130xf32, #tpu.memory_space<smem>>
    %872 = vector.broadcast %871 : f32 to vector<8x128xf32>
    %873 = arith.mulf %872, %780 : vector<8x128xf32>
    %874 = arith.addf %870, %873 : vector<8x128xf32>
    %c122 = arith.constant 122 : index
    %875 = memref.load %arg1[%c122] : memref<130xf32, #tpu.memory_space<smem>>
    %876 = vector.broadcast %875 : f32 to vector<8x128xf32>
    %877 = arith.mulf %876, %808 : vector<8x128xf32>
    %878 = arith.addf %874, %877 : vector<8x128xf32>
    %c59 = arith.constant 59 : index
    %879 = memref.load %arg1[%c59] : memref<130xf32, #tpu.memory_space<smem>>
    %880 = vector.broadcast %879 : f32 to vector<8x128xf32>
    %881 = arith.mulf %880, %584 : vector<8x128xf32>
    %c67 = arith.constant 67 : index
    %882 = memref.load %arg1[%c67] : memref<130xf32, #tpu.memory_space<smem>>
    %883 = vector.broadcast %882 : f32 to vector<8x128xf32>
    %884 = arith.mulf %883, %612 : vector<8x128xf32>
    %885 = arith.addf %881, %884 : vector<8x128xf32>
    %c75 = arith.constant 75 : index
    %886 = memref.load %arg1[%c75] : memref<130xf32, #tpu.memory_space<smem>>
    %887 = vector.broadcast %886 : f32 to vector<8x128xf32>
    %888 = arith.mulf %887, %640 : vector<8x128xf32>
    %889 = arith.addf %885, %888 : vector<8x128xf32>
    %c83 = arith.constant 83 : index
    %890 = memref.load %arg1[%c83] : memref<130xf32, #tpu.memory_space<smem>>
    %891 = vector.broadcast %890 : f32 to vector<8x128xf32>
    %892 = arith.mulf %891, %668 : vector<8x128xf32>
    %893 = arith.addf %889, %892 : vector<8x128xf32>
    %c91 = arith.constant 91 : index
    %894 = memref.load %arg1[%c91] : memref<130xf32, #tpu.memory_space<smem>>
    %895 = vector.broadcast %894 : f32 to vector<8x128xf32>
    %896 = arith.mulf %895, %696 : vector<8x128xf32>
    %897 = arith.addf %893, %896 : vector<8x128xf32>
    %c99 = arith.constant 99 : index
    %898 = memref.load %arg1[%c99] : memref<130xf32, #tpu.memory_space<smem>>
    %899 = vector.broadcast %898 : f32 to vector<8x128xf32>
    %900 = arith.mulf %899, %724 : vector<8x128xf32>
    %901 = arith.addf %897, %900 : vector<8x128xf32>
    %c107 = arith.constant 107 : index
    %902 = memref.load %arg1[%c107] : memref<130xf32, #tpu.memory_space<smem>>
    %903 = vector.broadcast %902 : f32 to vector<8x128xf32>
    %904 = arith.mulf %903, %752 : vector<8x128xf32>
    %905 = arith.addf %901, %904 : vector<8x128xf32>
    %c115 = arith.constant 115 : index
    %906 = memref.load %arg1[%c115] : memref<130xf32, #tpu.memory_space<smem>>
    %907 = vector.broadcast %906 : f32 to vector<8x128xf32>
    %908 = arith.mulf %907, %780 : vector<8x128xf32>
    %909 = arith.addf %905, %908 : vector<8x128xf32>
    %c123 = arith.constant 123 : index
    %910 = memref.load %arg1[%c123] : memref<130xf32, #tpu.memory_space<smem>>
    %911 = vector.broadcast %910 : f32 to vector<8x128xf32>
    %912 = arith.mulf %911, %808 : vector<8x128xf32>
    %913 = arith.addf %909, %912 : vector<8x128xf32>
    %c60 = arith.constant 60 : index
    %914 = memref.load %arg1[%c60] : memref<130xf32, #tpu.memory_space<smem>>
    %915 = vector.broadcast %914 : f32 to vector<8x128xf32>
    %916 = arith.mulf %915, %584 : vector<8x128xf32>
    %c68 = arith.constant 68 : index
    %917 = memref.load %arg1[%c68] : memref<130xf32, #tpu.memory_space<smem>>
    %918 = vector.broadcast %917 : f32 to vector<8x128xf32>
    %919 = arith.mulf %918, %612 : vector<8x128xf32>
    %920 = arith.addf %916, %919 : vector<8x128xf32>
    %c76 = arith.constant 76 : index
    %921 = memref.load %arg1[%c76] : memref<130xf32, #tpu.memory_space<smem>>
    %922 = vector.broadcast %921 : f32 to vector<8x128xf32>
    %923 = arith.mulf %922, %640 : vector<8x128xf32>
    %924 = arith.addf %920, %923 : vector<8x128xf32>
    %c84 = arith.constant 84 : index
    %925 = memref.load %arg1[%c84] : memref<130xf32, #tpu.memory_space<smem>>
    %926 = vector.broadcast %925 : f32 to vector<8x128xf32>
    %927 = arith.mulf %926, %668 : vector<8x128xf32>
    %928 = arith.addf %924, %927 : vector<8x128xf32>
    %c92 = arith.constant 92 : index
    %929 = memref.load %arg1[%c92] : memref<130xf32, #tpu.memory_space<smem>>
    %930 = vector.broadcast %929 : f32 to vector<8x128xf32>
    %931 = arith.mulf %930, %696 : vector<8x128xf32>
    %932 = arith.addf %928, %931 : vector<8x128xf32>
    %c100 = arith.constant 100 : index
    %933 = memref.load %arg1[%c100] : memref<130xf32, #tpu.memory_space<smem>>
    %934 = vector.broadcast %933 : f32 to vector<8x128xf32>
    %935 = arith.mulf %934, %724 : vector<8x128xf32>
    %936 = arith.addf %932, %935 : vector<8x128xf32>
    %c108 = arith.constant 108 : index
    %937 = memref.load %arg1[%c108] : memref<130xf32, #tpu.memory_space<smem>>
    %938 = vector.broadcast %937 : f32 to vector<8x128xf32>
    %939 = arith.mulf %938, %752 : vector<8x128xf32>
    %940 = arith.addf %936, %939 : vector<8x128xf32>
    %c116 = arith.constant 116 : index
    %941 = memref.load %arg1[%c116] : memref<130xf32, #tpu.memory_space<smem>>
    %942 = vector.broadcast %941 : f32 to vector<8x128xf32>
    %943 = arith.mulf %942, %780 : vector<8x128xf32>
    %944 = arith.addf %940, %943 : vector<8x128xf32>
    %c124 = arith.constant 124 : index
    %945 = memref.load %arg1[%c124] : memref<130xf32, #tpu.memory_space<smem>>
    %946 = vector.broadcast %945 : f32 to vector<8x128xf32>
    %947 = arith.mulf %946, %808 : vector<8x128xf32>
    %948 = arith.addf %944, %947 : vector<8x128xf32>
    %c61 = arith.constant 61 : index
    %949 = memref.load %arg1[%c61] : memref<130xf32, #tpu.memory_space<smem>>
    %950 = vector.broadcast %949 : f32 to vector<8x128xf32>
    %951 = arith.mulf %950, %584 : vector<8x128xf32>
    %c69 = arith.constant 69 : index
    %952 = memref.load %arg1[%c69] : memref<130xf32, #tpu.memory_space<smem>>
    %953 = vector.broadcast %952 : f32 to vector<8x128xf32>
    %954 = arith.mulf %953, %612 : vector<8x128xf32>
    %955 = arith.addf %951, %954 : vector<8x128xf32>
    %c77 = arith.constant 77 : index
    %956 = memref.load %arg1[%c77] : memref<130xf32, #tpu.memory_space<smem>>
    %957 = vector.broadcast %956 : f32 to vector<8x128xf32>
    %958 = arith.mulf %957, %640 : vector<8x128xf32>
    %959 = arith.addf %955, %958 : vector<8x128xf32>
    %c85 = arith.constant 85 : index
    %960 = memref.load %arg1[%c85] : memref<130xf32, #tpu.memory_space<smem>>
    %961 = vector.broadcast %960 : f32 to vector<8x128xf32>
    %962 = arith.mulf %961, %668 : vector<8x128xf32>
    %963 = arith.addf %959, %962 : vector<8x128xf32>
    %c93 = arith.constant 93 : index
    %964 = memref.load %arg1[%c93] : memref<130xf32, #tpu.memory_space<smem>>
    %965 = vector.broadcast %964 : f32 to vector<8x128xf32>
    %966 = arith.mulf %965, %696 : vector<8x128xf32>
    %967 = arith.addf %963, %966 : vector<8x128xf32>
    %c101 = arith.constant 101 : index
    %968 = memref.load %arg1[%c101] : memref<130xf32, #tpu.memory_space<smem>>
    %969 = vector.broadcast %968 : f32 to vector<8x128xf32>
    %970 = arith.mulf %969, %724 : vector<8x128xf32>
    %971 = arith.addf %967, %970 : vector<8x128xf32>
    %c109 = arith.constant 109 : index
    %972 = memref.load %arg1[%c109] : memref<130xf32, #tpu.memory_space<smem>>
    %973 = vector.broadcast %972 : f32 to vector<8x128xf32>
    %974 = arith.mulf %973, %752 : vector<8x128xf32>
    %975 = arith.addf %971, %974 : vector<8x128xf32>
    %c117 = arith.constant 117 : index
    %976 = memref.load %arg1[%c117] : memref<130xf32, #tpu.memory_space<smem>>
    %977 = vector.broadcast %976 : f32 to vector<8x128xf32>
    %978 = arith.mulf %977, %780 : vector<8x128xf32>
    %979 = arith.addf %975, %978 : vector<8x128xf32>
    %c125 = arith.constant 125 : index
    %980 = memref.load %arg1[%c125] : memref<130xf32, #tpu.memory_space<smem>>
    %981 = vector.broadcast %980 : f32 to vector<8x128xf32>
    %982 = arith.mulf %981, %808 : vector<8x128xf32>
    %983 = arith.addf %979, %982 : vector<8x128xf32>
    %c62 = arith.constant 62 : index
    %984 = memref.load %arg1[%c62] : memref<130xf32, #tpu.memory_space<smem>>
    %985 = vector.broadcast %984 : f32 to vector<8x128xf32>
    %986 = arith.mulf %985, %584 : vector<8x128xf32>
    %c70 = arith.constant 70 : index
    %987 = memref.load %arg1[%c70] : memref<130xf32, #tpu.memory_space<smem>>
    %988 = vector.broadcast %987 : f32 to vector<8x128xf32>
    %989 = arith.mulf %988, %612 : vector<8x128xf32>
    %990 = arith.addf %986, %989 : vector<8x128xf32>
    %c78 = arith.constant 78 : index
    %991 = memref.load %arg1[%c78] : memref<130xf32, #tpu.memory_space<smem>>
    %992 = vector.broadcast %991 : f32 to vector<8x128xf32>
    %993 = arith.mulf %992, %640 : vector<8x128xf32>
    %994 = arith.addf %990, %993 : vector<8x128xf32>
    %c86 = arith.constant 86 : index
    %995 = memref.load %arg1[%c86] : memref<130xf32, #tpu.memory_space<smem>>
    %996 = vector.broadcast %995 : f32 to vector<8x128xf32>
    %997 = arith.mulf %996, %668 : vector<8x128xf32>
    %998 = arith.addf %994, %997 : vector<8x128xf32>
    %c94 = arith.constant 94 : index
    %999 = memref.load %arg1[%c94] : memref<130xf32, #tpu.memory_space<smem>>
    %1000 = vector.broadcast %999 : f32 to vector<8x128xf32>
    %1001 = arith.mulf %1000, %696 : vector<8x128xf32>
    %1002 = arith.addf %998, %1001 : vector<8x128xf32>
    %c102 = arith.constant 102 : index
    %1003 = memref.load %arg1[%c102] : memref<130xf32, #tpu.memory_space<smem>>
    %1004 = vector.broadcast %1003 : f32 to vector<8x128xf32>
    %1005 = arith.mulf %1004, %724 : vector<8x128xf32>
    %1006 = arith.addf %1002, %1005 : vector<8x128xf32>
    %c110 = arith.constant 110 : index
    %1007 = memref.load %arg1[%c110] : memref<130xf32, #tpu.memory_space<smem>>
    %1008 = vector.broadcast %1007 : f32 to vector<8x128xf32>
    %1009 = arith.mulf %1008, %752 : vector<8x128xf32>
    %1010 = arith.addf %1006, %1009 : vector<8x128xf32>
    %c118 = arith.constant 118 : index
    %1011 = memref.load %arg1[%c118] : memref<130xf32, #tpu.memory_space<smem>>
    %1012 = vector.broadcast %1011 : f32 to vector<8x128xf32>
    %1013 = arith.mulf %1012, %780 : vector<8x128xf32>
    %1014 = arith.addf %1010, %1013 : vector<8x128xf32>
    %c126 = arith.constant 126 : index
    %1015 = memref.load %arg1[%c126] : memref<130xf32, #tpu.memory_space<smem>>
    %1016 = vector.broadcast %1015 : f32 to vector<8x128xf32>
    %1017 = arith.mulf %1016, %808 : vector<8x128xf32>
    %1018 = arith.addf %1014, %1017 : vector<8x128xf32>
    %c63 = arith.constant 63 : index
    %1019 = memref.load %arg1[%c63] : memref<130xf32, #tpu.memory_space<smem>>
    %1020 = vector.broadcast %1019 : f32 to vector<8x128xf32>
    %1021 = arith.mulf %1020, %584 : vector<8x128xf32>
    %c71 = arith.constant 71 : index
    %1022 = memref.load %arg1[%c71] : memref<130xf32, #tpu.memory_space<smem>>
    %1023 = vector.broadcast %1022 : f32 to vector<8x128xf32>
    %1024 = arith.mulf %1023, %612 : vector<8x128xf32>
    %1025 = arith.addf %1021, %1024 : vector<8x128xf32>
    %c79 = arith.constant 79 : index
    %1026 = memref.load %arg1[%c79] : memref<130xf32, #tpu.memory_space<smem>>
    %1027 = vector.broadcast %1026 : f32 to vector<8x128xf32>
    %1028 = arith.mulf %1027, %640 : vector<8x128xf32>
    %1029 = arith.addf %1025, %1028 : vector<8x128xf32>
    %c87 = arith.constant 87 : index
    %1030 = memref.load %arg1[%c87] : memref<130xf32, #tpu.memory_space<smem>>
    %1031 = vector.broadcast %1030 : f32 to vector<8x128xf32>
    %1032 = arith.mulf %1031, %668 : vector<8x128xf32>
    %1033 = arith.addf %1029, %1032 : vector<8x128xf32>
    %c95 = arith.constant 95 : index
    %1034 = memref.load %arg1[%c95] : memref<130xf32, #tpu.memory_space<smem>>
    %1035 = vector.broadcast %1034 : f32 to vector<8x128xf32>
    %1036 = arith.mulf %1035, %696 : vector<8x128xf32>
    %1037 = arith.addf %1033, %1036 : vector<8x128xf32>
    %c103 = arith.constant 103 : index
    %1038 = memref.load %arg1[%c103] : memref<130xf32, #tpu.memory_space<smem>>
    %1039 = vector.broadcast %1038 : f32 to vector<8x128xf32>
    %1040 = arith.mulf %1039, %724 : vector<8x128xf32>
    %1041 = arith.addf %1037, %1040 : vector<8x128xf32>
    %c111 = arith.constant 111 : index
    %1042 = memref.load %arg1[%c111] : memref<130xf32, #tpu.memory_space<smem>>
    %1043 = vector.broadcast %1042 : f32 to vector<8x128xf32>
    %1044 = arith.mulf %1043, %752 : vector<8x128xf32>
    %1045 = arith.addf %1041, %1044 : vector<8x128xf32>
    %c119 = arith.constant 119 : index
    %1046 = memref.load %arg1[%c119] : memref<130xf32, #tpu.memory_space<smem>>
    %1047 = vector.broadcast %1046 : f32 to vector<8x128xf32>
    %1048 = arith.mulf %1047, %780 : vector<8x128xf32>
    %1049 = arith.addf %1045, %1048 : vector<8x128xf32>
    %c127 = arith.constant 127 : index
    %1050 = memref.load %arg1[%c127] : memref<130xf32, #tpu.memory_space<smem>>
    %1051 = vector.broadcast %1050 : f32 to vector<8x128xf32>
    %1052 = arith.mulf %1051, %808 : vector<8x128xf32>
    %1053 = arith.addf %1049, %1052 : vector<8x128xf32>
    %c64 = arith.constant 64 : index
    %1054 = memref.load %arg1[%c64] : memref<130xf32, #tpu.memory_space<smem>>
    %1055 = vector.broadcast %1054 : f32 to vector<8x128xf32>
    %1056 = arith.mulf %1055, %584 : vector<8x128xf32>
    %c72 = arith.constant 72 : index
    %1057 = memref.load %arg1[%c72] : memref<130xf32, #tpu.memory_space<smem>>
    %1058 = vector.broadcast %1057 : f32 to vector<8x128xf32>
    %1059 = arith.mulf %1058, %612 : vector<8x128xf32>
    %1060 = arith.addf %1056, %1059 : vector<8x128xf32>
    %c80 = arith.constant 80 : index
    %1061 = memref.load %arg1[%c80] : memref<130xf32, #tpu.memory_space<smem>>
    %1062 = vector.broadcast %1061 : f32 to vector<8x128xf32>
    %1063 = arith.mulf %1062, %640 : vector<8x128xf32>
    %1064 = arith.addf %1060, %1063 : vector<8x128xf32>
    %c88 = arith.constant 88 : index
    %1065 = memref.load %arg1[%c88] : memref<130xf32, #tpu.memory_space<smem>>
    %1066 = vector.broadcast %1065 : f32 to vector<8x128xf32>
    %1067 = arith.mulf %1066, %668 : vector<8x128xf32>
    %1068 = arith.addf %1064, %1067 : vector<8x128xf32>
    %c96 = arith.constant 96 : index
    %1069 = memref.load %arg1[%c96] : memref<130xf32, #tpu.memory_space<smem>>
    %1070 = vector.broadcast %1069 : f32 to vector<8x128xf32>
    %1071 = arith.mulf %1070, %696 : vector<8x128xf32>
    %1072 = arith.addf %1068, %1071 : vector<8x128xf32>
    %c104 = arith.constant 104 : index
    %1073 = memref.load %arg1[%c104] : memref<130xf32, #tpu.memory_space<smem>>
    %1074 = vector.broadcast %1073 : f32 to vector<8x128xf32>
    %1075 = arith.mulf %1074, %724 : vector<8x128xf32>
    %1076 = arith.addf %1072, %1075 : vector<8x128xf32>
    %c112 = arith.constant 112 : index
    %1077 = memref.load %arg1[%c112] : memref<130xf32, #tpu.memory_space<smem>>
    %1078 = vector.broadcast %1077 : f32 to vector<8x128xf32>
    %1079 = arith.mulf %1078, %752 : vector<8x128xf32>
    %1080 = arith.addf %1076, %1079 : vector<8x128xf32>
    %c120 = arith.constant 120 : index
    %1081 = memref.load %arg1[%c120] : memref<130xf32, #tpu.memory_space<smem>>
    %1082 = vector.broadcast %1081 : f32 to vector<8x128xf32>
    %1083 = arith.mulf %1082, %780 : vector<8x128xf32>
    %1084 = arith.addf %1080, %1083 : vector<8x128xf32>
    %c128 = arith.constant 128 : index
    %1085 = memref.load %arg1[%c128] : memref<130xf32, #tpu.memory_space<smem>>
    %1086 = vector.broadcast %1085 : f32 to vector<8x128xf32>
    %1087 = arith.mulf %1086, %808 : vector<8x128xf32>
    %1088 = arith.addf %1084, %1087 : vector<8x128xf32>
    %c0_177 = arith.constant 0 : index
    %c0_178 = arith.constant 0 : index
    %1089 = vector.load %arg5[%c0_177, %c0_178] : memref<40x128xf32, #tpu.memory_space<vmem>>, vector<8x128xf32>
    %c8_179 = arith.constant 8 : index
    %c0_180 = arith.constant 0 : index
    %1090 = vector.load %arg5[%c8_179, %c0_180] : memref<40x128xf32, #tpu.memory_space<vmem>>, vector<8x128xf32>
    %c16_181 = arith.constant 16 : index
    %c0_182 = arith.constant 0 : index
    %1091 = vector.load %arg5[%c16_181, %c0_182] : memref<40x128xf32, #tpu.memory_space<vmem>>, vector<8x128xf32>
    %c24_183 = arith.constant 24 : index
    %c0_184 = arith.constant 0 : index
    %1092 = vector.load %arg5[%c24_183, %c0_184] : memref<40x128xf32, #tpu.memory_space<vmem>>, vector<8x128xf32>
    %c32_185 = arith.constant 32 : index
    %c0_186 = arith.constant 0 : index
    %1093 = vector.load %arg5[%c32_185, %c0_186] : memref<40x128xf32, #tpu.memory_space<vmem>>, vector<8x128xf32>
    %c129 = arith.constant 129 : index
    %1094 = memref.load %arg1[%c129] : memref<130xf32, #tpu.memory_space<smem>>
    %1095 = vector.extract_strided_slice %843 {offsets = [0, 0], sizes = [1, 128], strides = [1, 1]} : vector<8x128xf32> to vector<1x128xf32>
    %1096 = vector.extract_strided_slice %878 {offsets = [0, 0], sizes = [1, 128], strides = [1, 1]} : vector<8x128xf32> to vector<1x128xf32>
    %1097 = vector.extract_strided_slice %913 {offsets = [0, 0], sizes = [1, 128], strides = [1, 1]} : vector<8x128xf32> to vector<1x128xf32>
    %1098 = vector.extract_strided_slice %948 {offsets = [0, 0], sizes = [1, 128], strides = [1, 1]} : vector<8x128xf32> to vector<1x128xf32>
    %1099 = vector.extract_strided_slice %983 {offsets = [0, 0], sizes = [1, 128], strides = [1, 1]} : vector<8x128xf32> to vector<1x128xf32>
    %1100 = vector.extract_strided_slice %1018 {offsets = [0, 0], sizes = [1, 128], strides = [1, 1]} : vector<8x128xf32> to vector<1x128xf32>
    %1101 = vector.extract_strided_slice %1053 {offsets = [0, 0], sizes = [1, 128], strides = [1, 1]} : vector<8x128xf32> to vector<1x128xf32>
    %1102 = vector.extract_strided_slice %1088 {offsets = [0, 0], sizes = [1, 128], strides = [1, 1]} : vector<8x128xf32> to vector<1x128xf32>
    %1103 = tpu.concatenate %1095, %1096, %1097, %1098, %1099, %1100, %1101, %1102 in 0 : vector<1x128xf32>, vector<1x128xf32>, vector<1x128xf32>, vector<1x128xf32>, vector<1x128xf32>, vector<1x128xf32>, vector<1x128xf32>, vector<1x128xf32> -> vector<8x128xf32>
    %1104 = arith.truncf %1103 : vector<8x128xf32> to vector<8x128xbf16>
    %c0_187 = arith.constant 0 : index
    %c0_188 = arith.constant 0 : index
    %c0_189 = arith.constant 0 : index
    %1105 = vector.load %arg3[%c0_187, %c0_188, %c0_189] : memref<8x128x128xbf16, #tpu.memory_space<vmem>>, vector<1x128x128xbf16>
    %1106 = vector.shape_cast %1105 : vector<1x128x128xbf16> to vector<128x128xbf16>
    %cst_190 = arith.constant dense<0.000000e+00> : vector<8x128xf32>
    %1107 = tpu.matmul %1104, %1106, %cst_190 {dimension_numbers = #tpu.dot_dimension_numbers<[1], [0], [0], [1], [0, 0, 1, 1], [], []>} : vector<8x128xbf16>, vector<128x128xbf16>, vector<8x128xf32> -> vector<8x128xf32>
    %1108 = arith.addf %1107, %1089 : vector<8x128xf32>
    %1109 = vector.extract_strided_slice %0 {offsets = [0, 0], sizes = [1, 128], strides = [1, 1]} : vector<8x128xf32> to vector<1x128xf32>
    %1110 = vector.broadcast %1109 : vector<1x128xf32> to vector<8x128xf32>
    %1111 = arith.mulf %1108, %1110 : vector<8x128xf32>
    %cst_191 = arith.constant dense<0.000000e+00> : vector<8xf32>
    %1112 = vector.multi_reduction <add>, %1111, %cst_191 [1] : vector<8x128xf32> to vector<8xf32>
    %1113 = vector.shape_cast %1112 : vector<8xf32> to vector<8x1xf32>
    %1114 = vector.broadcast %1113 : vector<8x1xf32> to vector<8x128xf32>
    %1115 = arith.mulf %1092, %1114 : vector<8x128xf32>
    %1116 = arith.subf %1108, %1115 : vector<8x128xf32>
    %1117 = arith.mulf %1116, %1116 : vector<8x128xf32>
    %1118 = vector.broadcast %1109 : vector<1x128xf32> to vector<8x128xf32>
    %1119 = arith.mulf %1117, %1118 : vector<8x128xf32>
    %cst_192 = arith.constant dense<0.000000e+00> : vector<8xf32>
    %1120 = vector.multi_reduction <add>, %1119, %cst_192 [1] : vector<8x128xf32> to vector<8xf32>
    %1121 = vector.shape_cast %1120 : vector<8xf32> to vector<8x1xf32>
    %cst_193 = arith.constant 9.99999974E-6 : f32
    %1122 = vector.broadcast %cst_193 : f32 to vector<8x1xf32>
    %1123 = arith.addf %1121, %1122 : vector<8x1xf32>
    %1124 = math.rsqrt %1123 : vector<8x1xf32>
    %1125 = vector.broadcast %1124 : vector<8x1xf32> to vector<8x128xf32>
    %1126 = arith.mulf %1116, %1125 : vector<8x128xf32>
    %1127 = arith.mulf %1090, %1126 : vector<8x128xf32>
    %1128 = arith.addf %1127, %1091 : vector<8x128xf32>
    %cst_194 = arith.constant 0.000000e+00 : f32
    %1129 = vector.broadcast %cst_194 : f32 to vector<8x128xf32>
    %1130 = arith.cmpf ogt, %1128, %1129 : vector<8x128xf32>
    %cst_195 = arith.constant 0.00999999977 : f32
    %1131 = vector.broadcast %cst_195 : f32 to vector<8x128xf32>
    %1132 = arith.mulf %1131, %1128 : vector<8x128xf32>
    %1133 = arith.select %1130, %1128, %1132 : vector<8x128xi1>, vector<8x128xf32>
    %1134 = arith.mulf %1133, %1093 : vector<8x128xf32>
    %cst_196 = arith.constant dense<0.000000e+00> : vector<128xf32>
    %1135 = vector.multi_reduction <add>, %1134, %cst_196 [0] : vector<8x128xf32> to vector<128xf32>
    %1136 = vector.shape_cast %1135 : vector<128xf32> to vector<1x128xf32>
    %1137 = vector.broadcast %1094 : f32 to vector<1x128xf32>
    %1138 = arith.addf %1136, %1137 : vector<1x128xf32>
    %1139 = vector.extract_strided_slice %843 {offsets = [1, 0], sizes = [1, 128], strides = [1, 1]} : vector<8x128xf32> to vector<1x128xf32>
    %1140 = vector.extract_strided_slice %878 {offsets = [1, 0], sizes = [1, 128], strides = [1, 1]} : vector<8x128xf32> to vector<1x128xf32>
    %1141 = vector.extract_strided_slice %913 {offsets = [1, 0], sizes = [1, 128], strides = [1, 1]} : vector<8x128xf32> to vector<1x128xf32>
    %1142 = vector.extract_strided_slice %948 {offsets = [1, 0], sizes = [1, 128], strides = [1, 1]} : vector<8x128xf32> to vector<1x128xf32>
    %1143 = vector.extract_strided_slice %983 {offsets = [1, 0], sizes = [1, 128], strides = [1, 1]} : vector<8x128xf32> to vector<1x128xf32>
    %1144 = vector.extract_strided_slice %1018 {offsets = [1, 0], sizes = [1, 128], strides = [1, 1]} : vector<8x128xf32> to vector<1x128xf32>
    %1145 = vector.extract_strided_slice %1053 {offsets = [1, 0], sizes = [1, 128], strides = [1, 1]} : vector<8x128xf32> to vector<1x128xf32>
    %1146 = vector.extract_strided_slice %1088 {offsets = [1, 0], sizes = [1, 128], strides = [1, 1]} : vector<8x128xf32> to vector<1x128xf32>
    %1147 = tpu.concatenate %1139, %1140, %1141, %1142, %1143, %1144, %1145, %1146 in 0 : vector<1x128xf32>, vector<1x128xf32>, vector<1x128xf32>, vector<1x128xf32>, vector<1x128xf32>, vector<1x128xf32>, vector<1x128xf32>, vector<1x128xf32> -> vector<8x128xf32>
    %1148 = arith.truncf %1147 : vector<8x128xf32> to vector<8x128xbf16>
    %c1_197 = arith.constant 1 : index
    %c0_198 = arith.constant 0 : index
    %c0_199 = arith.constant 0 : index
    %1149 = vector.load %arg3[%c1_197, %c0_198, %c0_199] : memref<8x128x128xbf16, #tpu.memory_space<vmem>>, vector<1x128x128xbf16>
    %1150 = vector.shape_cast %1149 : vector<1x128x128xbf16> to vector<128x128xbf16>
    %cst_200 = arith.constant dense<0.000000e+00> : vector<8x128xf32>
    %1151 = tpu.matmul %1148, %1150, %cst_200 {dimension_numbers = #tpu.dot_dimension_numbers<[1], [0], [0], [1], [0, 0, 1, 1], [], []>} : vector<8x128xbf16>, vector<128x128xbf16>, vector<8x128xf32> -> vector<8x128xf32>
    %1152 = arith.addf %1151, %1089 : vector<8x128xf32>
    %1153 = vector.extract_strided_slice %0 {offsets = [1, 0], sizes = [1, 128], strides = [1, 1]} : vector<8x128xf32> to vector<1x128xf32>
    %1154 = vector.broadcast %1153 : vector<1x128xf32> to vector<8x128xf32>
    %1155 = arith.mulf %1152, %1154 : vector<8x128xf32>
    %cst_201 = arith.constant dense<0.000000e+00> : vector<8xf32>
    %1156 = vector.multi_reduction <add>, %1155, %cst_201 [1] : vector<8x128xf32> to vector<8xf32>
    %1157 = vector.shape_cast %1156 : vector<8xf32> to vector<8x1xf32>
    %1158 = vector.broadcast %1157 : vector<8x1xf32> to vector<8x128xf32>
    %1159 = arith.mulf %1092, %1158 : vector<8x128xf32>
    %1160 = arith.subf %1152, %1159 : vector<8x128xf32>
    %1161 = arith.mulf %1160, %1160 : vector<8x128xf32>
    %1162 = vector.broadcast %1153 : vector<1x128xf32> to vector<8x128xf32>
    %1163 = arith.mulf %1161, %1162 : vector<8x128xf32>
    %cst_202 = arith.constant dense<0.000000e+00> : vector<8xf32>
    %1164 = vector.multi_reduction <add>, %1163, %cst_202 [1] : vector<8x128xf32> to vector<8xf32>
    %1165 = vector.shape_cast %1164 : vector<8xf32> to vector<8x1xf32>
    %cst_203 = arith.constant 9.99999974E-6 : f32
    %1166 = vector.broadcast %cst_203 : f32 to vector<8x1xf32>
    %1167 = arith.addf %1165, %1166 : vector<8x1xf32>
    %1168 = math.rsqrt %1167 : vector<8x1xf32>
    %1169 = vector.broadcast %1168 : vector<8x1xf32> to vector<8x128xf32>
    %1170 = arith.mulf %1160, %1169 : vector<8x128xf32>
    %1171 = arith.mulf %1090, %1170 : vector<8x128xf32>
    %1172 = arith.addf %1171, %1091 : vector<8x128xf32>
    %cst_204 = arith.constant 0.000000e+00 : f32
    %1173 = vector.broadcast %cst_204 : f32 to vector<8x128xf32>
    %1174 = arith.cmpf ogt, %1172, %1173 : vector<8x128xf32>
    %cst_205 = arith.constant 0.00999999977 : f32
    %1175 = vector.broadcast %cst_205 : f32 to vector<8x128xf32>
    %1176 = arith.mulf %1175, %1172 : vector<8x128xf32>
    %1177 = arith.select %1174, %1172, %1176 : vector<8x128xi1>, vector<8x128xf32>
    %1178 = arith.mulf %1177, %1093 : vector<8x128xf32>
    %cst_206 = arith.constant dense<0.000000e+00> : vector<128xf32>
    %1179 = vector.multi_reduction <add>, %1178, %cst_206 [0] : vector<8x128xf32> to vector<128xf32>
    %1180 = vector.shape_cast %1179 : vector<128xf32> to vector<1x128xf32>
    %1181 = vector.broadcast %1094 : f32 to vector<1x128xf32>
    %1182 = arith.addf %1180, %1181 : vector<1x128xf32>
    %1183 = vector.extract_strided_slice %843 {offsets = [2, 0], sizes = [1, 128], strides = [1, 1]} : vector<8x128xf32> to vector<1x128xf32>
    %1184 = vector.extract_strided_slice %878 {offsets = [2, 0], sizes = [1, 128], strides = [1, 1]} : vector<8x128xf32> to vector<1x128xf32>
    %1185 = vector.extract_strided_slice %913 {offsets = [2, 0], sizes = [1, 128], strides = [1, 1]} : vector<8x128xf32> to vector<1x128xf32>
    %1186 = vector.extract_strided_slice %948 {offsets = [2, 0], sizes = [1, 128], strides = [1, 1]} : vector<8x128xf32> to vector<1x128xf32>
    %1187 = vector.extract_strided_slice %983 {offsets = [2, 0], sizes = [1, 128], strides = [1, 1]} : vector<8x128xf32> to vector<1x128xf32>
    %1188 = vector.extract_strided_slice %1018 {offsets = [2, 0], sizes = [1, 128], strides = [1, 1]} : vector<8x128xf32> to vector<1x128xf32>
    %1189 = vector.extract_strided_slice %1053 {offsets = [2, 0], sizes = [1, 128], strides = [1, 1]} : vector<8x128xf32> to vector<1x128xf32>
    %1190 = vector.extract_strided_slice %1088 {offsets = [2, 0], sizes = [1, 128], strides = [1, 1]} : vector<8x128xf32> to vector<1x128xf32>
    %1191 = tpu.concatenate %1183, %1184, %1185, %1186, %1187, %1188, %1189, %1190 in 0 : vector<1x128xf32>, vector<1x128xf32>, vector<1x128xf32>, vector<1x128xf32>, vector<1x128xf32>, vector<1x128xf32>, vector<1x128xf32>, vector<1x128xf32> -> vector<8x128xf32>
    %1192 = arith.truncf %1191 : vector<8x128xf32> to vector<8x128xbf16>
    %c2_207 = arith.constant 2 : index
    %c0_208 = arith.constant 0 : index
    %c0_209 = arith.constant 0 : index
    %1193 = vector.load %arg3[%c2_207, %c0_208, %c0_209] : memref<8x128x128xbf16, #tpu.memory_space<vmem>>, vector<1x128x128xbf16>
    %1194 = vector.shape_cast %1193 : vector<1x128x128xbf16> to vector<128x128xbf16>
    %cst_210 = arith.constant dense<0.000000e+00> : vector<8x128xf32>
    %1195 = tpu.matmul %1192, %1194, %cst_210 {dimension_numbers = #tpu.dot_dimension_numbers<[1], [0], [0], [1], [0, 0, 1, 1], [], []>} : vector<8x128xbf16>, vector<128x128xbf16>, vector<8x128xf32> -> vector<8x128xf32>
    %1196 = arith.addf %1195, %1089 : vector<8x128xf32>
    %1197 = vector.extract_strided_slice %0 {offsets = [2, 0], sizes = [1, 128], strides = [1, 1]} : vector<8x128xf32> to vector<1x128xf32>
    %1198 = vector.broadcast %1197 : vector<1x128xf32> to vector<8x128xf32>
    %1199 = arith.mulf %1196, %1198 : vector<8x128xf32>
    %cst_211 = arith.constant dense<0.000000e+00> : vector<8xf32>
    %1200 = vector.multi_reduction <add>, %1199, %cst_211 [1] : vector<8x128xf32> to vector<8xf32>
    %1201 = vector.shape_cast %1200 : vector<8xf32> to vector<8x1xf32>
    %1202 = vector.broadcast %1201 : vector<8x1xf32> to vector<8x128xf32>
    %1203 = arith.mulf %1092, %1202 : vector<8x128xf32>
    %1204 = arith.subf %1196, %1203 : vector<8x128xf32>
    %1205 = arith.mulf %1204, %1204 : vector<8x128xf32>
    %1206 = vector.broadcast %1197 : vector<1x128xf32> to vector<8x128xf32>
    %1207 = arith.mulf %1205, %1206 : vector<8x128xf32>
    %cst_212 = arith.constant dense<0.000000e+00> : vector<8xf32>
    %1208 = vector.multi_reduction <add>, %1207, %cst_212 [1] : vector<8x128xf32> to vector<8xf32>
    %1209 = vector.shape_cast %1208 : vector<8xf32> to vector<8x1xf32>
    %cst_213 = arith.constant 9.99999974E-6 : f32
    %1210 = vector.broadcast %cst_213 : f32 to vector<8x1xf32>
    %1211 = arith.addf %1209, %1210 : vector<8x1xf32>
    %1212 = math.rsqrt %1211 : vector<8x1xf32>
    %1213 = vector.broadcast %1212 : vector<8x1xf32> to vector<8x128xf32>
    %1214 = arith.mulf %1204, %1213 : vector<8x128xf32>
    %1215 = arith.mulf %1090, %1214 : vector<8x128xf32>
    %1216 = arith.addf %1215, %1091 : vector<8x128xf32>
    %cst_214 = arith.constant 0.000000e+00 : f32
    %1217 = vector.broadcast %cst_214 : f32 to vector<8x128xf32>
    %1218 = arith.cmpf ogt, %1216, %1217 : vector<8x128xf32>
    %cst_215 = arith.constant 0.00999999977 : f32
    %1219 = vector.broadcast %cst_215 : f32 to vector<8x128xf32>
    %1220 = arith.mulf %1219, %1216 : vector<8x128xf32>
    %1221 = arith.select %1218, %1216, %1220 : vector<8x128xi1>, vector<8x128xf32>
    %1222 = arith.mulf %1221, %1093 : vector<8x128xf32>
    %cst_216 = arith.constant dense<0.000000e+00> : vector<128xf32>
    %1223 = vector.multi_reduction <add>, %1222, %cst_216 [0] : vector<8x128xf32> to vector<128xf32>
    %1224 = vector.shape_cast %1223 : vector<128xf32> to vector<1x128xf32>
    %1225 = vector.broadcast %1094 : f32 to vector<1x128xf32>
    %1226 = arith.addf %1224, %1225 : vector<1x128xf32>
    %1227 = vector.extract_strided_slice %843 {offsets = [3, 0], sizes = [1, 128], strides = [1, 1]} : vector<8x128xf32> to vector<1x128xf32>
    %1228 = vector.extract_strided_slice %878 {offsets = [3, 0], sizes = [1, 128], strides = [1, 1]} : vector<8x128xf32> to vector<1x128xf32>
    %1229 = vector.extract_strided_slice %913 {offsets = [3, 0], sizes = [1, 128], strides = [1, 1]} : vector<8x128xf32> to vector<1x128xf32>
    %1230 = vector.extract_strided_slice %948 {offsets = [3, 0], sizes = [1, 128], strides = [1, 1]} : vector<8x128xf32> to vector<1x128xf32>
    %1231 = vector.extract_strided_slice %983 {offsets = [3, 0], sizes = [1, 128], strides = [1, 1]} : vector<8x128xf32> to vector<1x128xf32>
    %1232 = vector.extract_strided_slice %1018 {offsets = [3, 0], sizes = [1, 128], strides = [1, 1]} : vector<8x128xf32> to vector<1x128xf32>
    %1233 = vector.extract_strided_slice %1053 {offsets = [3, 0], sizes = [1, 128], strides = [1, 1]} : vector<8x128xf32> to vector<1x128xf32>
    %1234 = vector.extract_strided_slice %1088 {offsets = [3, 0], sizes = [1, 128], strides = [1, 1]} : vector<8x128xf32> to vector<1x128xf32>
    %1235 = tpu.concatenate %1227, %1228, %1229, %1230, %1231, %1232, %1233, %1234 in 0 : vector<1x128xf32>, vector<1x128xf32>, vector<1x128xf32>, vector<1x128xf32>, vector<1x128xf32>, vector<1x128xf32>, vector<1x128xf32>, vector<1x128xf32> -> vector<8x128xf32>
    %1236 = arith.truncf %1235 : vector<8x128xf32> to vector<8x128xbf16>
    %c3_217 = arith.constant 3 : index
    %c0_218 = arith.constant 0 : index
    %c0_219 = arith.constant 0 : index
    %1237 = vector.load %arg3[%c3_217, %c0_218, %c0_219] : memref<8x128x128xbf16, #tpu.memory_space<vmem>>, vector<1x128x128xbf16>
    %1238 = vector.shape_cast %1237 : vector<1x128x128xbf16> to vector<128x128xbf16>
    %cst_220 = arith.constant dense<0.000000e+00> : vector<8x128xf32>
    %1239 = tpu.matmul %1236, %1238, %cst_220 {dimension_numbers = #tpu.dot_dimension_numbers<[1], [0], [0], [1], [0, 0, 1, 1], [], []>} : vector<8x128xbf16>, vector<128x128xbf16>, vector<8x128xf32> -> vector<8x128xf32>
    %1240 = arith.addf %1239, %1089 : vector<8x128xf32>
    %1241 = vector.extract_strided_slice %0 {offsets = [3, 0], sizes = [1, 128], strides = [1, 1]} : vector<8x128xf32> to vector<1x128xf32>
    %1242 = vector.broadcast %1241 : vector<1x128xf32> to vector<8x128xf32>
    %1243 = arith.mulf %1240, %1242 : vector<8x128xf32>
    %cst_221 = arith.constant dense<0.000000e+00> : vector<8xf32>
    %1244 = vector.multi_reduction <add>, %1243, %cst_221 [1] : vector<8x128xf32> to vector<8xf32>
    %1245 = vector.shape_cast %1244 : vector<8xf32> to vector<8x1xf32>
    %1246 = vector.broadcast %1245 : vector<8x1xf32> to vector<8x128xf32>
    %1247 = arith.mulf %1092, %1246 : vector<8x128xf32>
    %1248 = arith.subf %1240, %1247 : vector<8x128xf32>
    %1249 = arith.mulf %1248, %1248 : vector<8x128xf32>
    %1250 = vector.broadcast %1241 : vector<1x128xf32> to vector<8x128xf32>
    %1251 = arith.mulf %1249, %1250 : vector<8x128xf32>
    %cst_222 = arith.constant dense<0.000000e+00> : vector<8xf32>
    %1252 = vector.multi_reduction <add>, %1251, %cst_222 [1] : vector<8x128xf32> to vector<8xf32>
    %1253 = vector.shape_cast %1252 : vector<8xf32> to vector<8x1xf32>
    %cst_223 = arith.constant 9.99999974E-6 : f32
    %1254 = vector.broadcast %cst_223 : f32 to vector<8x1xf32>
    %1255 = arith.addf %1253, %1254 : vector<8x1xf32>
    %1256 = math.rsqrt %1255 : vector<8x1xf32>
    %1257 = vector.broadcast %1256 : vector<8x1xf32> to vector<8x128xf32>
    %1258 = arith.mulf %1248, %1257 : vector<8x128xf32>
    %1259 = arith.mulf %1090, %1258 : vector<8x128xf32>
    %1260 = arith.addf %1259, %1091 : vector<8x128xf32>
    %cst_224 = arith.constant 0.000000e+00 : f32
    %1261 = vector.broadcast %cst_224 : f32 to vector<8x128xf32>
    %1262 = arith.cmpf ogt, %1260, %1261 : vector<8x128xf32>
    %cst_225 = arith.constant 0.00999999977 : f32
    %1263 = vector.broadcast %cst_225 : f32 to vector<8x128xf32>
    %1264 = arith.mulf %1263, %1260 : vector<8x128xf32>
    %1265 = arith.select %1262, %1260, %1264 : vector<8x128xi1>, vector<8x128xf32>
    %1266 = arith.mulf %1265, %1093 : vector<8x128xf32>
    %cst_226 = arith.constant dense<0.000000e+00> : vector<128xf32>
    %1267 = vector.multi_reduction <add>, %1266, %cst_226 [0] : vector<8x128xf32> to vector<128xf32>
    %1268 = vector.shape_cast %1267 : vector<128xf32> to vector<1x128xf32>
    %1269 = vector.broadcast %1094 : f32 to vector<1x128xf32>
    %1270 = arith.addf %1268, %1269 : vector<1x128xf32>
    %1271 = vector.extract_strided_slice %843 {offsets = [4, 0], sizes = [1, 128], strides = [1, 1]} : vector<8x128xf32> to vector<1x128xf32>
    %1272 = vector.extract_strided_slice %878 {offsets = [4, 0], sizes = [1, 128], strides = [1, 1]} : vector<8x128xf32> to vector<1x128xf32>
    %1273 = vector.extract_strided_slice %913 {offsets = [4, 0], sizes = [1, 128], strides = [1, 1]} : vector<8x128xf32> to vector<1x128xf32>
    %1274 = vector.extract_strided_slice %948 {offsets = [4, 0], sizes = [1, 128], strides = [1, 1]} : vector<8x128xf32> to vector<1x128xf32>
    %1275 = vector.extract_strided_slice %983 {offsets = [4, 0], sizes = [1, 128], strides = [1, 1]} : vector<8x128xf32> to vector<1x128xf32>
    %1276 = vector.extract_strided_slice %1018 {offsets = [4, 0], sizes = [1, 128], strides = [1, 1]} : vector<8x128xf32> to vector<1x128xf32>
    %1277 = vector.extract_strided_slice %1053 {offsets = [4, 0], sizes = [1, 128], strides = [1, 1]} : vector<8x128xf32> to vector<1x128xf32>
    %1278 = vector.extract_strided_slice %1088 {offsets = [4, 0], sizes = [1, 128], strides = [1, 1]} : vector<8x128xf32> to vector<1x128xf32>
    %1279 = tpu.concatenate %1271, %1272, %1273, %1274, %1275, %1276, %1277, %1278 in 0 : vector<1x128xf32>, vector<1x128xf32>, vector<1x128xf32>, vector<1x128xf32>, vector<1x128xf32>, vector<1x128xf32>, vector<1x128xf32>, vector<1x128xf32> -> vector<8x128xf32>
    %1280 = arith.truncf %1279 : vector<8x128xf32> to vector<8x128xbf16>
    %c4_227 = arith.constant 4 : index
    %c0_228 = arith.constant 0 : index
    %c0_229 = arith.constant 0 : index
    %1281 = vector.load %arg3[%c4_227, %c0_228, %c0_229] : memref<8x128x128xbf16, #tpu.memory_space<vmem>>, vector<1x128x128xbf16>
    %1282 = vector.shape_cast %1281 : vector<1x128x128xbf16> to vector<128x128xbf16>
    %cst_230 = arith.constant dense<0.000000e+00> : vector<8x128xf32>
    %1283 = tpu.matmul %1280, %1282, %cst_230 {dimension_numbers = #tpu.dot_dimension_numbers<[1], [0], [0], [1], [0, 0, 1, 1], [], []>} : vector<8x128xbf16>, vector<128x128xbf16>, vector<8x128xf32> -> vector<8x128xf32>
    %1284 = arith.addf %1283, %1089 : vector<8x128xf32>
    %1285 = vector.extract_strided_slice %0 {offsets = [4, 0], sizes = [1, 128], strides = [1, 1]} : vector<8x128xf32> to vector<1x128xf32>
    %1286 = vector.broadcast %1285 : vector<1x128xf32> to vector<8x128xf32>
    %1287 = arith.mulf %1284, %1286 : vector<8x128xf32>
    %cst_231 = arith.constant dense<0.000000e+00> : vector<8xf32>
    %1288 = vector.multi_reduction <add>, %1287, %cst_231 [1] : vector<8x128xf32> to vector<8xf32>
    %1289 = vector.shape_cast %1288 : vector<8xf32> to vector<8x1xf32>
    %1290 = vector.broadcast %1289 : vector<8x1xf32> to vector<8x128xf32>
    %1291 = arith.mulf %1092, %1290 : vector<8x128xf32>
    %1292 = arith.subf %1284, %1291 : vector<8x128xf32>
    %1293 = arith.mulf %1292, %1292 : vector<8x128xf32>
    %1294 = vector.broadcast %1285 : vector<1x128xf32> to vector<8x128xf32>
    %1295 = arith.mulf %1293, %1294 : vector<8x128xf32>
    %cst_232 = arith.constant dense<0.000000e+00> : vector<8xf32>
    %1296 = vector.multi_reduction <add>, %1295, %cst_232 [1] : vector<8x128xf32> to vector<8xf32>
    %1297 = vector.shape_cast %1296 : vector<8xf32> to vector<8x1xf32>
    %cst_233 = arith.constant 9.99999974E-6 : f32
    %1298 = vector.broadcast %cst_233 : f32 to vector<8x1xf32>
    %1299 = arith.addf %1297, %1298 : vector<8x1xf32>
    %1300 = math.rsqrt %1299 : vector<8x1xf32>
    %1301 = vector.broadcast %1300 : vector<8x1xf32> to vector<8x128xf32>
    %1302 = arith.mulf %1292, %1301 : vector<8x128xf32>
    %1303 = arith.mulf %1090, %1302 : vector<8x128xf32>
    %1304 = arith.addf %1303, %1091 : vector<8x128xf32>
    %cst_234 = arith.constant 0.000000e+00 : f32
    %1305 = vector.broadcast %cst_234 : f32 to vector<8x128xf32>
    %1306 = arith.cmpf ogt, %1304, %1305 : vector<8x128xf32>
    %cst_235 = arith.constant 0.00999999977 : f32
    %1307 = vector.broadcast %cst_235 : f32 to vector<8x128xf32>
    %1308 = arith.mulf %1307, %1304 : vector<8x128xf32>
    %1309 = arith.select %1306, %1304, %1308 : vector<8x128xi1>, vector<8x128xf32>
    %1310 = arith.mulf %1309, %1093 : vector<8x128xf32>
    %cst_236 = arith.constant dense<0.000000e+00> : vector<128xf32>
    %1311 = vector.multi_reduction <add>, %1310, %cst_236 [0] : vector<8x128xf32> to vector<128xf32>
    %1312 = vector.shape_cast %1311 : vector<128xf32> to vector<1x128xf32>
    %1313 = vector.broadcast %1094 : f32 to vector<1x128xf32>
    %1314 = arith.addf %1312, %1313 : vector<1x128xf32>
    %1315 = vector.extract_strided_slice %843 {offsets = [5, 0], sizes = [1, 128], strides = [1, 1]} : vector<8x128xf32> to vector<1x128xf32>
    %1316 = vector.extract_strided_slice %878 {offsets = [5, 0], sizes = [1, 128], strides = [1, 1]} : vector<8x128xf32> to vector<1x128xf32>
    %1317 = vector.extract_strided_slice %913 {offsets = [5, 0], sizes = [1, 128], strides = [1, 1]} : vector<8x128xf32> to vector<1x128xf32>
    %1318 = vector.extract_strided_slice %948 {offsets = [5, 0], sizes = [1, 128], strides = [1, 1]} : vector<8x128xf32> to vector<1x128xf32>
    %1319 = vector.extract_strided_slice %983 {offsets = [5, 0], sizes = [1, 128], strides = [1, 1]} : vector<8x128xf32> to vector<1x128xf32>
    %1320 = vector.extract_strided_slice %1018 {offsets = [5, 0], sizes = [1, 128], strides = [1, 1]} : vector<8x128xf32> to vector<1x128xf32>
    %1321 = vector.extract_strided_slice %1053 {offsets = [5, 0], sizes = [1, 128], strides = [1, 1]} : vector<8x128xf32> to vector<1x128xf32>
    %1322 = vector.extract_strided_slice %1088 {offsets = [5, 0], sizes = [1, 128], strides = [1, 1]} : vector<8x128xf32> to vector<1x128xf32>
    %1323 = tpu.concatenate %1315, %1316, %1317, %1318, %1319, %1320, %1321, %1322 in 0 : vector<1x128xf32>, vector<1x128xf32>, vector<1x128xf32>, vector<1x128xf32>, vector<1x128xf32>, vector<1x128xf32>, vector<1x128xf32>, vector<1x128xf32> -> vector<8x128xf32>
    %1324 = arith.truncf %1323 : vector<8x128xf32> to vector<8x128xbf16>
    %c5_237 = arith.constant 5 : index
    %c0_238 = arith.constant 0 : index
    %c0_239 = arith.constant 0 : index
    %1325 = vector.load %arg3[%c5_237, %c0_238, %c0_239] : memref<8x128x128xbf16, #tpu.memory_space<vmem>>, vector<1x128x128xbf16>
    %1326 = vector.shape_cast %1325 : vector<1x128x128xbf16> to vector<128x128xbf16>
    %cst_240 = arith.constant dense<0.000000e+00> : vector<8x128xf32>
    %1327 = tpu.matmul %1324, %1326, %cst_240 {dimension_numbers = #tpu.dot_dimension_numbers<[1], [0], [0], [1], [0, 0, 1, 1], [], []>} : vector<8x128xbf16>, vector<128x128xbf16>, vector<8x128xf32> -> vector<8x128xf32>
    %1328 = arith.addf %1327, %1089 : vector<8x128xf32>
    %1329 = vector.extract_strided_slice %0 {offsets = [5, 0], sizes = [1, 128], strides = [1, 1]} : vector<8x128xf32> to vector<1x128xf32>
    %1330 = vector.broadcast %1329 : vector<1x128xf32> to vector<8x128xf32>
    %1331 = arith.mulf %1328, %1330 : vector<8x128xf32>
    %cst_241 = arith.constant dense<0.000000e+00> : vector<8xf32>
    %1332 = vector.multi_reduction <add>, %1331, %cst_241 [1] : vector<8x128xf32> to vector<8xf32>
    %1333 = vector.shape_cast %1332 : vector<8xf32> to vector<8x1xf32>
    %1334 = vector.broadcast %1333 : vector<8x1xf32> to vector<8x128xf32>
    %1335 = arith.mulf %1092, %1334 : vector<8x128xf32>
    %1336 = arith.subf %1328, %1335 : vector<8x128xf32>
    %1337 = arith.mulf %1336, %1336 : vector<8x128xf32>
    %1338 = vector.broadcast %1329 : vector<1x128xf32> to vector<8x128xf32>
    %1339 = arith.mulf %1337, %1338 : vector<8x128xf32>
    %cst_242 = arith.constant dense<0.000000e+00> : vector<8xf32>
    %1340 = vector.multi_reduction <add>, %1339, %cst_242 [1] : vector<8x128xf32> to vector<8xf32>
    %1341 = vector.shape_cast %1340 : vector<8xf32> to vector<8x1xf32>
    %cst_243 = arith.constant 9.99999974E-6 : f32
    %1342 = vector.broadcast %cst_243 : f32 to vector<8x1xf32>
    %1343 = arith.addf %1341, %1342 : vector<8x1xf32>
    %1344 = math.rsqrt %1343 : vector<8x1xf32>
    %1345 = vector.broadcast %1344 : vector<8x1xf32> to vector<8x128xf32>
    %1346 = arith.mulf %1336, %1345 : vector<8x128xf32>
    %1347 = arith.mulf %1090, %1346 : vector<8x128xf32>
    %1348 = arith.addf %1347, %1091 : vector<8x128xf32>
    %cst_244 = arith.constant 0.000000e+00 : f32
    %1349 = vector.broadcast %cst_244 : f32 to vector<8x128xf32>
    %1350 = arith.cmpf ogt, %1348, %1349 : vector<8x128xf32>
    %cst_245 = arith.constant 0.00999999977 : f32
    %1351 = vector.broadcast %cst_245 : f32 to vector<8x128xf32>
    %1352 = arith.mulf %1351, %1348 : vector<8x128xf32>
    %1353 = arith.select %1350, %1348, %1352 : vector<8x128xi1>, vector<8x128xf32>
    %1354 = arith.mulf %1353, %1093 : vector<8x128xf32>
    %cst_246 = arith.constant dense<0.000000e+00> : vector<128xf32>
    %1355 = vector.multi_reduction <add>, %1354, %cst_246 [0] : vector<8x128xf32> to vector<128xf32>
    %1356 = vector.shape_cast %1355 : vector<128xf32> to vector<1x128xf32>
    %1357 = vector.broadcast %1094 : f32 to vector<1x128xf32>
    %1358 = arith.addf %1356, %1357 : vector<1x128xf32>
    %1359 = vector.extract_strided_slice %843 {offsets = [6, 0], sizes = [1, 128], strides = [1, 1]} : vector<8x128xf32> to vector<1x128xf32>
    %1360 = vector.extract_strided_slice %878 {offsets = [6, 0], sizes = [1, 128], strides = [1, 1]} : vector<8x128xf32> to vector<1x128xf32>
    %1361 = vector.extract_strided_slice %913 {offsets = [6, 0], sizes = [1, 128], strides = [1, 1]} : vector<8x128xf32> to vector<1x128xf32>
    %1362 = vector.extract_strided_slice %948 {offsets = [6, 0], sizes = [1, 128], strides = [1, 1]} : vector<8x128xf32> to vector<1x128xf32>
    %1363 = vector.extract_strided_slice %983 {offsets = [6, 0], sizes = [1, 128], strides = [1, 1]} : vector<8x128xf32> to vector<1x128xf32>
    %1364 = vector.extract_strided_slice %1018 {offsets = [6, 0], sizes = [1, 128], strides = [1, 1]} : vector<8x128xf32> to vector<1x128xf32>
    %1365 = vector.extract_strided_slice %1053 {offsets = [6, 0], sizes = [1, 128], strides = [1, 1]} : vector<8x128xf32> to vector<1x128xf32>
    %1366 = vector.extract_strided_slice %1088 {offsets = [6, 0], sizes = [1, 128], strides = [1, 1]} : vector<8x128xf32> to vector<1x128xf32>
    %1367 = tpu.concatenate %1359, %1360, %1361, %1362, %1363, %1364, %1365, %1366 in 0 : vector<1x128xf32>, vector<1x128xf32>, vector<1x128xf32>, vector<1x128xf32>, vector<1x128xf32>, vector<1x128xf32>, vector<1x128xf32>, vector<1x128xf32> -> vector<8x128xf32>
    %1368 = arith.truncf %1367 : vector<8x128xf32> to vector<8x128xbf16>
    %c6_247 = arith.constant 6 : index
    %c0_248 = arith.constant 0 : index
    %c0_249 = arith.constant 0 : index
    %1369 = vector.load %arg3[%c6_247, %c0_248, %c0_249] : memref<8x128x128xbf16, #tpu.memory_space<vmem>>, vector<1x128x128xbf16>
    %1370 = vector.shape_cast %1369 : vector<1x128x128xbf16> to vector<128x128xbf16>
    %cst_250 = arith.constant dense<0.000000e+00> : vector<8x128xf32>
    %1371 = tpu.matmul %1368, %1370, %cst_250 {dimension_numbers = #tpu.dot_dimension_numbers<[1], [0], [0], [1], [0, 0, 1, 1], [], []>} : vector<8x128xbf16>, vector<128x128xbf16>, vector<8x128xf32> -> vector<8x128xf32>
    %1372 = arith.addf %1371, %1089 : vector<8x128xf32>
    %1373 = vector.extract_strided_slice %0 {offsets = [6, 0], sizes = [1, 128], strides = [1, 1]} : vector<8x128xf32> to vector<1x128xf32>
    %1374 = vector.broadcast %1373 : vector<1x128xf32> to vector<8x128xf32>
    %1375 = arith.mulf %1372, %1374 : vector<8x128xf32>
    %cst_251 = arith.constant dense<0.000000e+00> : vector<8xf32>
    %1376 = vector.multi_reduction <add>, %1375, %cst_251 [1] : vector<8x128xf32> to vector<8xf32>
    %1377 = vector.shape_cast %1376 : vector<8xf32> to vector<8x1xf32>
    %1378 = vector.broadcast %1377 : vector<8x1xf32> to vector<8x128xf32>
    %1379 = arith.mulf %1092, %1378 : vector<8x128xf32>
    %1380 = arith.subf %1372, %1379 : vector<8x128xf32>
    %1381 = arith.mulf %1380, %1380 : vector<8x128xf32>
    %1382 = vector.broadcast %1373 : vector<1x128xf32> to vector<8x128xf32>
    %1383 = arith.mulf %1381, %1382 : vector<8x128xf32>
    %cst_252 = arith.constant dense<0.000000e+00> : vector<8xf32>
    %1384 = vector.multi_reduction <add>, %1383, %cst_252 [1] : vector<8x128xf32> to vector<8xf32>
    %1385 = vector.shape_cast %1384 : vector<8xf32> to vector<8x1xf32>
    %cst_253 = arith.constant 9.99999974E-6 : f32
    %1386 = vector.broadcast %cst_253 : f32 to vector<8x1xf32>
    %1387 = arith.addf %1385, %1386 : vector<8x1xf32>
    %1388 = math.rsqrt %1387 : vector<8x1xf32>
    %1389 = vector.broadcast %1388 : vector<8x1xf32> to vector<8x128xf32>
    %1390 = arith.mulf %1380, %1389 : vector<8x128xf32>
    %1391 = arith.mulf %1090, %1390 : vector<8x128xf32>
    %1392 = arith.addf %1391, %1091 : vector<8x128xf32>
    %cst_254 = arith.constant 0.000000e+00 : f32
    %1393 = vector.broadcast %cst_254 : f32 to vector<8x128xf32>
    %1394 = arith.cmpf ogt, %1392, %1393 : vector<8x128xf32>
    %cst_255 = arith.constant 0.00999999977 : f32
    %1395 = vector.broadcast %cst_255 : f32 to vector<8x128xf32>
    %1396 = arith.mulf %1395, %1392 : vector<8x128xf32>
    %1397 = arith.select %1394, %1392, %1396 : vector<8x128xi1>, vector<8x128xf32>
    %1398 = arith.mulf %1397, %1093 : vector<8x128xf32>
    %cst_256 = arith.constant dense<0.000000e+00> : vector<128xf32>
    %1399 = vector.multi_reduction <add>, %1398, %cst_256 [0] : vector<8x128xf32> to vector<128xf32>
    %1400 = vector.shape_cast %1399 : vector<128xf32> to vector<1x128xf32>
    %1401 = vector.broadcast %1094 : f32 to vector<1x128xf32>
    %1402 = arith.addf %1400, %1401 : vector<1x128xf32>
    %1403 = vector.extract_strided_slice %843 {offsets = [7, 0], sizes = [1, 128], strides = [1, 1]} : vector<8x128xf32> to vector<1x128xf32>
    %1404 = vector.extract_strided_slice %878 {offsets = [7, 0], sizes = [1, 128], strides = [1, 1]} : vector<8x128xf32> to vector<1x128xf32>
    %1405 = vector.extract_strided_slice %913 {offsets = [7, 0], sizes = [1, 128], strides = [1, 1]} : vector<8x128xf32> to vector<1x128xf32>
    %1406 = vector.extract_strided_slice %948 {offsets = [7, 0], sizes = [1, 128], strides = [1, 1]} : vector<8x128xf32> to vector<1x128xf32>
    %1407 = vector.extract_strided_slice %983 {offsets = [7, 0], sizes = [1, 128], strides = [1, 1]} : vector<8x128xf32> to vector<1x128xf32>
    %1408 = vector.extract_strided_slice %1018 {offsets = [7, 0], sizes = [1, 128], strides = [1, 1]} : vector<8x128xf32> to vector<1x128xf32>
    %1409 = vector.extract_strided_slice %1053 {offsets = [7, 0], sizes = [1, 128], strides = [1, 1]} : vector<8x128xf32> to vector<1x128xf32>
    %1410 = vector.extract_strided_slice %1088 {offsets = [7, 0], sizes = [1, 128], strides = [1, 1]} : vector<8x128xf32> to vector<1x128xf32>
    %1411 = tpu.concatenate %1403, %1404, %1405, %1406, %1407, %1408, %1409, %1410 in 0 : vector<1x128xf32>, vector<1x128xf32>, vector<1x128xf32>, vector<1x128xf32>, vector<1x128xf32>, vector<1x128xf32>, vector<1x128xf32>, vector<1x128xf32> -> vector<8x128xf32>
    %1412 = arith.truncf %1411 : vector<8x128xf32> to vector<8x128xbf16>
    %c7_257 = arith.constant 7 : index
    %c0_258 = arith.constant 0 : index
    %c0_259 = arith.constant 0 : index
    %1413 = vector.load %arg3[%c7_257, %c0_258, %c0_259] : memref<8x128x128xbf16, #tpu.memory_space<vmem>>, vector<1x128x128xbf16>
    %1414 = vector.shape_cast %1413 : vector<1x128x128xbf16> to vector<128x128xbf16>
    %cst_260 = arith.constant dense<0.000000e+00> : vector<8x128xf32>
    %1415 = tpu.matmul %1412, %1414, %cst_260 {dimension_numbers = #tpu.dot_dimension_numbers<[1], [0], [0], [1], [0, 0, 1, 1], [], []>} : vector<8x128xbf16>, vector<128x128xbf16>, vector<8x128xf32> -> vector<8x128xf32>
    %1416 = arith.addf %1415, %1089 : vector<8x128xf32>
    %1417 = vector.extract_strided_slice %0 {offsets = [7, 0], sizes = [1, 128], strides = [1, 1]} : vector<8x128xf32> to vector<1x128xf32>
    %1418 = vector.broadcast %1417 : vector<1x128xf32> to vector<8x128xf32>
    %1419 = arith.mulf %1416, %1418 : vector<8x128xf32>
    %cst_261 = arith.constant dense<0.000000e+00> : vector<8xf32>
    %1420 = vector.multi_reduction <add>, %1419, %cst_261 [1] : vector<8x128xf32> to vector<8xf32>
    %1421 = vector.shape_cast %1420 : vector<8xf32> to vector<8x1xf32>
    %1422 = vector.broadcast %1421 : vector<8x1xf32> to vector<8x128xf32>
    %1423 = arith.mulf %1092, %1422 : vector<8x128xf32>
    %1424 = arith.subf %1416, %1423 : vector<8x128xf32>
    %1425 = arith.mulf %1424, %1424 : vector<8x128xf32>
    %1426 = vector.broadcast %1417 : vector<1x128xf32> to vector<8x128xf32>
    %1427 = arith.mulf %1425, %1426 : vector<8x128xf32>
    %cst_262 = arith.constant dense<0.000000e+00> : vector<8xf32>
    %1428 = vector.multi_reduction <add>, %1427, %cst_262 [1] : vector<8x128xf32> to vector<8xf32>
    %1429 = vector.shape_cast %1428 : vector<8xf32> to vector<8x1xf32>
    %cst_263 = arith.constant 9.99999974E-6 : f32
    %1430 = vector.broadcast %cst_263 : f32 to vector<8x1xf32>
    %1431 = arith.addf %1429, %1430 : vector<8x1xf32>
    %1432 = math.rsqrt %1431 : vector<8x1xf32>
    %1433 = vector.broadcast %1432 : vector<8x1xf32> to vector<8x128xf32>
    %1434 = arith.mulf %1424, %1433 : vector<8x128xf32>
    %1435 = arith.mulf %1090, %1434 : vector<8x128xf32>
    %1436 = arith.addf %1435, %1091 : vector<8x128xf32>
    %cst_264 = arith.constant 0.000000e+00 : f32
    %1437 = vector.broadcast %cst_264 : f32 to vector<8x128xf32>
    %1438 = arith.cmpf ogt, %1436, %1437 : vector<8x128xf32>
    %cst_265 = arith.constant 0.00999999977 : f32
    %1439 = vector.broadcast %cst_265 : f32 to vector<8x128xf32>
    %1440 = arith.mulf %1439, %1436 : vector<8x128xf32>
    %1441 = arith.select %1438, %1436, %1440 : vector<8x128xi1>, vector<8x128xf32>
    %1442 = arith.mulf %1441, %1093 : vector<8x128xf32>
    %cst_266 = arith.constant dense<0.000000e+00> : vector<128xf32>
    %1443 = vector.multi_reduction <add>, %1442, %cst_266 [0] : vector<8x128xf32> to vector<128xf32>
    %1444 = vector.shape_cast %1443 : vector<128xf32> to vector<1x128xf32>
    %1445 = vector.broadcast %1094 : f32 to vector<1x128xf32>
    %1446 = arith.addf %1444, %1445 : vector<1x128xf32>
    %1447 = tpu.concatenate %1138, %1182, %1226, %1270, %1314, %1358, %1402, %1446 in 0 : vector<1x128xf32>, vector<1x128xf32>, vector<1x128xf32>, vector<1x128xf32>, vector<1x128xf32>, vector<1x128xf32>, vector<1x128xf32>, vector<1x128xf32> -> vector<8x128xf32>
    %c0_267 = arith.constant 0 : index
    %c0_268 = arith.constant 0 : index
    %1448 = vector.load %arg6[%c0_267, %c0_268] : memref<8x128xf32, #tpu.memory_space<vmem>>, vector<8x128xf32>
    tpu.vector_store %arg6[%c0_267, %c0_268], %1447 {strides = array<i32>} : memref<8x128xf32, #tpu.memory_space<vmem>>, vector<8x128xf32>,
    return
  }
  func.func @transform_0(%arg0: i32) -> i32 {
    %c0_i32 = arith.constant 0 : i32
    %c0_i32_0 = arith.constant 0 : i32
    return %c0_i32 : i32
  }
  func.func @transform_1(%arg0: i32) -> (i32, i32, i32) {
    %c0_i32 = arith.constant 0 : i32
    %c0_i32_0 = arith.constant 0 : i32
    %c0_i32_1 = arith.constant 0 : i32
    return %c0_i32, %arg0, %c0_i32_0 : i32, i32, i32
  }
  func.func @transform_2(%arg0: i32) -> (i32, i32, i32) {
    %c0_i32 = arith.constant 0 : i32
    %c0_i32_0 = arith.constant 0 : i32
    %c0_i32_1 = arith.constant 0 : i32
    return %arg0, %c0_i32, %c0_i32_0 : i32, i32, i32
  }
  func.func @transform_3(%arg0: i32) -> (i32, i32) {
    %c0_i32 = arith.constant 0 : i32
    %c0_i32_0 = arith.constant 0 : i32
    return %arg0, %c0_i32 : i32, i32
  }
  func.func @transform_4(%arg0: i32) -> (i32, i32) {
    %c0_i32 = arith.constant 0 : i32
    %c0_i32_0 = arith.constant 0 : i32
    %c0_i32_1 = arith.constant 0 : i32
    return %c0_i32, %c0_i32_0 : i32, i32
  }
  func.func @transform_5(%arg0: i32) -> (i32, i32) {
    %c0_i32 = arith.constant 0 : i32
    %c0_i32_0 = arith.constant 0 : i32
    return %arg0, %c0_i32 : i32, i32
  }
}

</mosaic_0001>

<llo_original>
// kernel: tpu_custom_call.1
$region0: #{tpu_custom_call.1}
  #allocation0 [shape = 'u32[]', space=smem, size = 0x4, offset = 0x4, fixed_abs, tag = 'smem constant byte address 0x4 - core index']
  #allocation1 [shape = 'u32[144,128]{1,0:T(1,128)}', space=vmem, size = 0x12000, scoped, tag = 'internal scratch']
  %s0 = inlined_call_operand.hbm [shape: f32[130], index: 0, kind: input, shape index: {}]
  %s1 = inlined_call_operand.hbm [shape: f32[5,16,128], index: 1, kind: input, shape index: {}]
  %s2 = inlined_call_operand.hbm [shape: bf16[16,128,128], index: 2, kind: input, shape index: {}]
  %s3 = inlined_call_operand.hbm [shape: f32[16,128], index: 3, kind: input, shape index: {}]
  %s4 = inlined_call_operand.hbm [shape: f32[40,128], index: 4, kind: input, shape index: {}]
  %s5 = inlined_call_operand.hbm [shape: f32[16,128], index: 5, kind: output, shape index: {}]
  %s6 = sld [smem:[#allocation0]]
  $region73: #{tpu_custom_call.1} parent=0
    _
  %s8 = ssub.s32 1, %s6
  %s9 = scalar_select 0, %s8, %s6
  $region1: #{tpu_custom_call.1} parent=0
    #allocation2 [shape = 'u8[1024]{0}', space=smem, size = 0x400, scoped, tag = 'input window, operand 0, single buffered']
    #allocation3 [shape = 's32[2]{0}', space=sflag, size = 0x8, scoped, tag = 'scoped memory for tpu_custom_call.1']
    #allocation4 [shape = 's32[2]{0}', space=sflag, size = 0x8, scoped, tag = 'scoped memory for tpu_custom_call.1']
    #allocation5 [shape = 's32[2]{0}', space=sflag, size = 0x8, scoped, tag = 'scoped memory for tpu_custom_call.1']
    #allocation6 [shape = 'u8[40960]{0}', space=vmem, size = 0xa000, scoped, tag = 'input window, operand 1']
    #allocation7 [shape = 'u8[524288]{0}', space=vmem, size = 0x80000, scoped, tag = 'input window, operand 2']
    #allocation8 [shape = 's32[2]{0}', space=sflag, size = 0x8, scoped, tag = 'scoped memory for tpu_custom_call.1']
    #allocation9 [shape = 'u8[8192]{0}', space=vmem, size = 0x2000, scoped, tag = 'input window, operand 3']
    #allocation10 [shape = 'u8[20480]{0}', space=vmem, size = 0x5000, scoped, tag = 'input window, operand 4, single buffered']
    #allocation11 [shape = 's32[1]{0}', space=sflag, size = 0x4, scoped, tag = 'scoped memory for tpu_custom_call.1']
    #allocation12 [shape = 'u8[8192]{0}', space=vmem, size = 0x2000, scoped, tag = 'output window, operand 0']
    %10 = vsyncpa [#allocation5], 0
    %11 = vsyncpa [#allocation3], 0
    %s12 = scalar_lea.sflag [#allocation3], 1
    %13 = vsyncpa %s12, 0
    %14 = vsyncpa [#allocation8], 0
    %s15 = scalar_lea.sflag [#allocation8], 1
    %16 = vsyncpa %s15, 0
    %17 = vsyncpa [#allocation11], 0
    %18 = vsyncpa [#allocation4], 0
    %s19 = scalar_lea.sflag [#allocation4], 1
    %20 = vsyncpa %s19, 0
    loop: start=0, step=1, limit=4
    $region2: #{tpu_custom_call.1} parent=1 // loop_pre_header
      _
    $region3: #{tpu_custom_call.1} parent=1 // loop_header
      %s22 = sphi 0, %s26
      %p23 = scmp.ge.s32.totalorder %s22, 4
      %s30 = sphi 0, %s30
      %s32 = sphi 0, %s30
      %s33 = sphi 0, %s32
      %s47 = sphi 0, %s33
      %s53 = sphi 0, %s55
      %s56 = sphi 0, %s53
      %s57 = sphi 0, %s56
      %s73 = sphi 0, %s57
      %s79 = sphi 0, %s81
      %s82 = sphi 0, %s79
      %s83 = sphi 0, %s82
      %s99 = sphi 0, %s83
      %s105 = sphi 0, %s107
      %s108 = sphi 0, %s105
      %s109 = sphi 0, %s108
      %s125 = sphi 0, %s109
      %s129 = sphi 0, %s129
      %s131 = sphi 0, %s129
      %s132 = sphi 0, %s131
      %s146 = sphi 0, %s132
      %s152 = sphi 0, %s154
      %s155 = sphi 0, %s152
      %s156 = sphi 0, %s155
      %s172 = sphi 0, %s156
    $region4: #{tpu_custom_call.1} parent=1 // loop_header_branch
      %25 = sbr.rel (%p23) target = $region8
    $region5: #{tpu_custom_call.1} parent=1 // loop_body
      %s27 = ssub.s32 %s22, 1
      %s28 = ssub.s32 %s22, 2
      %s29 = sadd.s32 %s22, 1
      %s31 = sadd.s32 %s30, 1
      %p34 = scmp.eq.s32.totalorder %s22, 1
      %p35 = scmp.ne.s32.totalorder %s30, %s32
      %p36 = scmp.eq.s32.totalorder %s22, 0
      %p37 = por %p35, %p36
      %p38 = scmp.ne.s32.totalorder %s30, %s32
      %p39 = scmp.eq.s32.totalorder %s27, 1
      %p40 = por %p38, %p39
      %p41 = scmp.ne.s32.totalorder %s32, %s33
      %p42 = scmp.eq.s32.totalorder %s27, 0
      %p43 = por %p41, %p42
      %p44 = scmp.ne.s32.totalorder %s32, %s33
      %p45 = scmp.eq.s32.totalorder %s28, 1
      %p46 = por %p44, %p45
      %p48 = scmp.ne.s32.totalorder %s33, %s47
      %p49 = scmp.eq.s32.totalorder %s28, 0
      %p50 = por %p48, %p49
      %s51 = ssub.s32 %s22, %s29
      %p52 = scmp.eq.s32.totalorder %s51, 0
      %s54 = sadd.s32 %s53, 1
      %s55 = scalar_select %p52, %s53, %s54
      %p58 = pneg %p52
      %p59 = scmp.eq.s32.totalorder %s22, 1
      %p60 = por %p58, %p59
      %p61 = scmp.ne.s32.totalorder %s53, %s56
      %p62 = scmp.eq.s32.totalorder %s22, 0
      %p63 = por %p61, %p62
      %p64 = scmp.ne.s32.totalorder %s53, %s56
      %p65 = scmp.eq.s32.totalorder %s27, 1
      %p66 = por %p64, %p65
      %p67 = scmp.ne.s32.totalorder %s56, %s57
      %p68 = scmp.eq.s32.totalorder %s27, 0
      %p69 = por %p67, %p68
      %p70 = scmp.ne.s32.totalorder %s56, %s57
      %p71 = scmp.eq.s32.totalorder %s28, 1
      %p72 = por %p70, %p71
      %p74 = scmp.ne.s32.totalorder %s57, %s73
      %p75 = scmp.eq.s32.totalorder %s28, 0
      %p76 = por %p74, %p75
      %s77 = ssub.s32 %s22, %s29
      %p78 = scmp.eq.s32.totalorder %s77, 0
      %s80 = sadd.s32 %s79, 1
      %s81 = scalar_select %p78, %s79, %s80
      %p84 = pneg %p78
      %p85 = scmp.eq.s32.totalorder %s22, 1
      %p86 = por %p84, %p85
      %p87 = scmp.ne.s32.totalorder %s79, %s82
      %p88 = scmp.eq.s32.totalorder %s22, 0
      %p89 = por %p87, %p88
      %p90 = scmp.ne.s32.totalorder %s79, %s82
      %p91 = scmp.eq.s32.totalorder %s27, 1
      %p92 = por %p90, %p91
      %p93 = scmp.ne.s32.totalorder %s82, %s83
      %p94 = scmp.eq.s32.totalorder %s27, 0
      %p95 = por %p93, %p94
      %p96 = scmp.ne.s32.totalorder %s82, %s83
      %p97 = scmp.eq.s32.totalorder %s28, 1
      %p98 = por %p96, %p97
      %p100 = scmp.ne.s32.totalorder %s83, %s99
      %p101 = scmp.eq.s32.totalorder %s28, 0
      %p102 = por %p100, %p101
      %s103 = ssub.s32 %s22, %s29
      %p104 = scmp.eq.s32.totalorder %s103, 0
      %s106 = sadd.s32 %s105, 1
      %s107 = scalar_select %p104, %s105, %s106
      %p110 = pneg %p104
      %p111 = scmp.eq.s32.totalorder %s22, 1
      %p112 = por %p110, %p111
      %p113 = scmp.ne.s32.totalorder %s105, %s108
      %p114 = scmp.eq.s32.totalorder %s22, 0
      %p115 = por %p113, %p114
      %p116 = scmp.ne.s32.totalorder %s105, %s108
      %p117 = scmp.eq.s32.totalorder %s27, 1
      %p118 = por %p116, %p117
      %p119 = scmp.ne.s32.totalorder %s108, %s109
      %p120 = scmp.eq.s32.totalorder %s27, 0
      %p121 = por %p119, %p120
      %p122 = scmp.ne.s32.totalorder %s108, %s109
      %p123 = scmp.eq.s32.totalorder %s28, 1
      %p124 = por %p122, %p123
      %p126 = scmp.ne.s32.totalorder %s109, %s125
      %p127 = scmp.eq.s32.totalorder %s28, 0
      %p128 = por %p126, %p127
      %s130 = sadd.s32 %s129, 1
      %p133 = scmp.eq.s32.totalorder %s22, 1
      %p134 = scmp.ne.s32.totalorder %s129, %s131
      %p135 = scmp.eq.s32.totalorder %s22, 0
      %p136 = por %p134, %p135
      %p137 = scmp.ne.s32.totalorder %s129, %s131
      %p138 = scmp.eq.s32.totalorder %s27, 1
      %p139 = por %p137, %p138
      %p140 = scmp.ne.s32.totalorder %s131, %s132
      %p141 = scmp.eq.s32.totalorder %s27, 0
      %p142 = por %p140, %p141
      %p143 = scmp.ne.s32.totalorder %s131, %s132
      %p144 = scmp.eq.s32.totalorder %s28, 1
      %p145 = por %p143, %p144
      %p147 = scmp.ne.s32.totalorder %s132, %s146
      %p148 = scmp.eq.s32.totalorder %s28, 0
      %p149 = por %p147, %p148
      %s150 = ssub.s32 %s22, %s29
      %p151 = scmp.eq.s32.totalorder %s150, 0
      %s153 = sadd.s32 %s152, 1
      %s154 = scalar_select %p151, %s152, %s153
      %p157 = pneg %p151
      %p158 = scmp.eq.s32.totalorder %s22, 1
      %p159 = por %p157, %p158
      %p160 = scmp.ne.s32.totalorder %s152, %s155
      %p161 = scmp.eq.s32.totalorder %s22, 0
      %p162 = por %p160, %p161
      %p163 = scmp.ne.s32.totalorder %s152, %s155
      %p164 = scmp.eq.s32.totalorder %s27, 1
      %p165 = por %p163, %p164
      %p166 = scmp.ne.s32.totalorder %s155, %s156
      %p167 = scmp.eq.s32.totalorder %s27, 0
      %p168 = por %p166, %p167
      %p169 = scmp.ne.s32.totalorder %s155, %s156
      %p170 = scmp.eq.s32.totalorder %s28, 1
      %p171 = por %p169, %p170
      %p173 = scmp.ne.s32.totalorder %s156, %s172
      %p174 = scmp.eq.s32.totalorder %s28, 0
      %p175 = por %p173, %p174
      %p176 = scmp.le.s32.totalorder 1, %s22
      %p177 = scmp.lt.s32.totalorder %s22, 3
      %p178 = pnand %p176, %p177
      %p179 = pneg %p178
      // Predicated region
      $region9: #{tpu_custom_call.1} parent=5 // pred_check
        _
      $region10: #{tpu_custom_call.1} parent=5 // pred_check_branch
        %181 = sbr.rel (%p178) target = $region12
      $region11: #{tpu_custom_call.1} parent=5 // pred_region
        %s182 = ssub.s32 %s22, 1
        // Predicated region
        $region13: #{tpu_custom_call.1} parent=11 // pred_check
          %p183 = pneg %p43
        $region14: #{tpu_custom_call.1} parent=11 // pred_check_branch
          %185 = sbr.rel (%p183) target = $region16
        $region15: #{tpu_custom_call.1} parent=11 // pred_region
          %s187 = ssub.s32 32, 32
          %188 = vsyncadd [#allocation5], %s187
          %191 = dma.hbm_to_smem %s0, 32, [#allocation2], [#allocation5]
        $region16: #{tpu_custom_call.1} parent=11 // pred_fallthru
          _
        // Predicated region
        $region17: #{tpu_custom_call.1} parent=11 // pred_check
          %p192 = pneg %p142
        $region18: #{tpu_custom_call.1} parent=11 // pred_check_branch
          %194 = sbr.rel (%p192) target = $region20
        $region19: #{tpu_custom_call.1} parent=11 // pred_region
          %s196 = ssub.s32 640, 640
          %197 = vsyncadd [#allocation11], %s196
          %s198 = sshll.u32 [#allocation10], 4
          %s199 = int_to_ptr.vmem [resolvable:$true] %s198
          %204 = dma.hbm_to_vmem [thread:$0]  %s4, 640, %s199, [#allocation11], 128, 128, 8
        $region20: #{tpu_custom_call.1} parent=11 // pred_fallthru
          _
      $region12: #{tpu_custom_call.1} parent=5 // pred_fallthru
        _
      %p205 = scmp.lt.s32.totalorder %s22, 2
      // Predicated region
      $region21: #{tpu_custom_call.1} parent=5 // pred_check
        %p206 = pneg %p205
      $region22: #{tpu_custom_call.1} parent=5 // pred_check_branch
        %208 = sbr.rel (%p206) target = $region24
      $region23: #{tpu_custom_call.1} parent=5 // pred_region
        // Predicated region
        $region25: #{tpu_custom_call.1} parent=23 // pred_check
          %p209 = pneg %p63
        $region26: #{tpu_custom_call.1} parent=23 // pred_check_branch
          %211 = sbr.rel (%p209) target = $region28
        $region27: #{tpu_custom_call.1} parent=23 // pred_region
          %s212 = sand.u32 %s53, 1
          %s213 = scalar_lea.sflag [#allocation3], %s212
          %s214 = sand.u32 %s53, 1
          %s215 = smul.addr %s214, 40
          %s216 = scalar_lea.vmem [#allocation6], %s215
          %s218 = ssub.s32 640, 640
          %219 = vsyncadd %s213, %s218
          %s220 = smul.addr %s22, 128
          %s221 = scalar_lea.hbm %s1, %s220
          %s222 = sshll.u32 %s216, 4
          %s223 = int_to_ptr.vmem [resolvable:$true] %s222
          %228 = dma.hbm_to_vmem [thread:$0]  %s221, 640, %s223, %s213, 256, 128, 8
        $region28: #{tpu_custom_call.1} parent=23 // pred_fallthru
          _
        // Predicated region
        $region29: #{tpu_custom_call.1} parent=23 // pred_check
          %p229 = pneg %p89
        $region30: #{tpu_custom_call.1} parent=23 // pred_check_branch
          %231 = sbr.rel (%p229) target = $region32
        $region31: #{tpu_custom_call.1} parent=23 // pred_region
          %s232 = sand.u32 %s22, 1
          %s233 = scalar_lea.sflag [#allocation8], %s232
          %s234 = sand.u32 %s79, 1
          %s235 = smul.addr %s234, 512
          %s236 = scalar_lea.vmem [#allocation7], %s235
          %s237 = smul.u32 8, %s22
          %s239 = ssub.s32 8192, 8192
          %240 = vsyncadd %s233, %s239
          %s241 = smul.addr %s237, 16
          %s242 = smul.addr %s241, 64
          %s243 = scalar_lea.hbm %s2, %s242
          %s244 = sshll.u32 %s236, 4
          %s245 = int_to_ptr.vmem [resolvable:$true] %s244
          %250 = dma.hbm_to_vmem [thread:$0]  %s243, 8192, %s245, %s233, 64, 64, 4
        $region32: #{tpu_custom_call.1} parent=23 // pred_fallthru
          _
        // Predicated region
        $region33: #{tpu_custom_call.1} parent=23 // pred_check
          %p251 = pneg %p115
        $region34: #{tpu_custom_call.1} parent=23 // pred_check_branch
          %253 = sbr.rel (%p251) target = $region36
        $region35: #{tpu_custom_call.1} parent=23 // pred_region
          %s254 = sand.u32 %s22, 1
          %s255 = scalar_lea.sflag [#allocation8], %s254
          %s256 = sand.u32 %s105, 1
          %s257 = smul.addr %s256, 8
          %s258 = scalar_lea.vmem [#allocation9], %s257
          %s260 = ssub.s32 128, 128
          %261 = vsyncadd %s255, %s260
          %s262 = smul.addr %s22, 128
          %s263 = scalar_lea.hbm %s3, %s262
          %s265 = sshll.u32 %s258, 4
          %s266 = int_to_ptr.vmem [resolvable:$true] %s265
          %268 = dma.hbm_to_vmem [thread:$0]  %s263, 128, %s266, %s255
        $region36: #{tpu_custom_call.1} parent=23 // pred_fallthru
          _
      $region24: #{tpu_custom_call.1} parent=5 // pred_fallthru
        _
      %p269 = scmp.le.s32.totalorder 1, %s22
      %p270 = scmp.lt.s32.totalorder %s22, 3
      %p271 = pnand %p269, %p270
      %p272 = pneg %p271
      // Predicated region
      $region37: #{tpu_custom_call.1} parent=5 // pred_check
        _
      $region38: #{tpu_custom_call.1} parent=5 // pred_check_branch
        %274 = sbr.rel (%p271) target = $region40
      $region39: #{tpu_custom_call.1} parent=5 // pred_region
        %s275 = ssub.s32 %s22, 1
        // Predicated region
        $region41: #{tpu_custom_call.1} parent=39 // pred_check
          %p276 = pneg %p43
        $region42: #{tpu_custom_call.1} parent=39 // pred_check_branch
          %278 = sbr.rel (%p276) target = $region44
        $region43: #{tpu_custom_call.1} parent=39 // pred_region
          %279 = dma.done [#allocation5], 32
        $region44: #{tpu_custom_call.1} parent=39 // pred_fallthru
          _
        %s280 = sand.u32 %s56, 1
        %s281 = scalar_lea.sflag [#allocation3], %s280
        %s282 = sand.u32 %s56, 1
        %s283 = smul.addr %s282, 40
        %s284 = scalar_lea.vmem [#allocation6], %s283
        // Predicated region
        $region45: #{tpu_custom_call.1} parent=39 // pred_check
          %p285 = pneg %p69
        $region46: #{tpu_custom_call.1} parent=39 // pred_check_branch
          %287 = sbr.rel (%p285) target = $region48
        $region47: #{tpu_custom_call.1} parent=39 // pred_region
          %288 = dma.done %s281, 640
        $region48: #{tpu_custom_call.1} parent=39 // pred_fallthru
          _
        %s289 = sand.u32 %s27, 1
        %s290 = scalar_lea.sflag [#allocation8], %s289
        %s291 = sand.u32 %s82, 1
        %s292 = smul.addr %s291, 512
        %s293 = scalar_lea.vmem [#allocation7], %s292
        // Predicated region
        $region49: #{tpu_custom_call.1} parent=39 // pred_check
          %p294 = pneg %p95
        $region50: #{tpu_custom_call.1} parent=39 // pred_check_branch
          %296 = sbr.rel (%p294) target = $region52
        $region51: #{tpu_custom_call.1} parent=39 // pred_region
          %297 = dma.done %s290, 8192
        $region52: #{tpu_custom_call.1} parent=39 // pred_fallthru
          _
        %s298 = sand.u32 %s27, 1
        %s299 = scalar_lea.sflag [#allocation8], %s298
        %s300 = sand.u32 %s108, 1
        %s301 = smul.addr %s300, 8
        %s302 = scalar_lea.vmem [#allocation9], %s301
        // Predicated region
        $region53: #{tpu_custom_call.1} parent=39 // pred_check
          %p303 = pneg %p121
        $region54: #{tpu_custom_call.1} parent=39 // pred_check_branch
          %305 = sbr.rel (%p303) target = $region56
        $region55: #{tpu_custom_call.1} parent=39 // pred_region
          %306 = dma.done %s299, 128
        $region56: #{tpu_custom_call.1} parent=39 // pred_fallthru
          _
        // Predicated region
        $region57: #{tpu_custom_call.1} parent=39 // pred_check
          %p307 = pneg %p142
        $region58: #{tpu_custom_call.1} parent=39 // pred_check_branch
          %309 = sbr.rel (%p307) target = $region60
        $region59: #{tpu_custom_call.1} parent=39 // pred_region
          %310 = dma.done [#allocation11], 640
        $region60: #{tpu_custom_call.1} parent=39 // pred_fallthru
          _
        %311 = sfence
        %p312 = pneg %p43
        %p313 = pneg %p40
        %s314 = sand.u32 %s56, 1
        %s315 = scalar_lea.sflag [#allocation3], %s314
        %s316 = sand.u32 %s56, 1
        %s317 = smul.addr %s316, 40
        %s318 = scalar_lea.vmem [#allocation6], %s317
        %p319 = pneg %p69
        %p320 = pneg %p66
        %s321 = sand.u32 %s27, 1
        %s322 = scalar_lea.sflag [#allocation8], %s321
        %s323 = sand.u32 %s82, 1
        %s324 = smul.addr %s323, 512
        %s325 = scalar_lea.vmem [#allocation7], %s324
        %p326 = pneg %p95
        %p327 = pneg %p92
        %s328 = sand.u32 %s27, 1
        %s329 = scalar_lea.sflag [#allocation8], %s328
        %s330 = sand.u32 %s108, 1
        %s331 = smul.addr %s330, 8
        %s332 = scalar_lea.vmem [#allocation9], %s331
        %p333 = pneg %p121
        %p334 = pneg %p118
        %p335 = pneg %p142
        %p336 = pneg %p139
        %p337 = pneg %p168
        %p338 = pneg %p165
        %s339 = sand.u32 %s155, 1
        %s340 = scalar_lea.sflag [#allocation4], %s339
        %s341 = sand.u32 %s155, 1
        %s342 = smul.addr %s341, 8
        %s343 = scalar_lea.vmem [#allocation12], %s342
        %s344 = smul.u32 8, %s27
        %v346 = vld [vmem:[%s302] sm:$0xff]
        %v347 = vld [vmem:[%s284] sm:$0xff]
        %s348 = sld [smem:[#allocation2]]
        %v349 = vstv %s348
        %v350 = vmul.f32 %v349, %v347
        %s351 = sld [smem:[#allocation2 + $0x12]]
        %v352 = vstv %s351
        %v353 = vadd.f32 %v350, %v352
        %s354 = sld [smem:[#allocation2 + $0x1]]
        %v355 = vstv %s354
        %v356 = vmul.f32 %v355, %v347
        %s357 = sld [smem:[#allocation2 + $0x13]]
        %v358 = vstv %s357
        %v359 = vadd.f32 %v356, %v358
        %s360 = sld [smem:[#allocation2 + $0x2]]
        %v361 = vstv %s360
        %v362 = vmul.f32 %v361, %v347
        %s363 = sld [smem:[#allocation2 + $0x14]]
        %v364 = vstv %s363
        %v365 = vadd.f32 %v362, %v364
        %s366 = sld [smem:[#allocation2 + $0x3]]
        %v367 = vstv %s366
        %v368 = vmul.f32 %v367, %v347
        %s369 = sld [smem:[#allocation2 + $0x15]]
        %v370 = vstv %s369
        %v371 = vadd.f32 %v368, %v370
        %s372 = sld [smem:[#allocation2 + $0x4]]
        %v373 = vstv %s372
        %v374 = vmul.f32 %v373, %v347
        %s375 = sld [smem:[#allocation2 + $0x16]]
        %v376 = vstv %s375
        %v377 = vadd.f32 %v374, %v376
        %s378 = sld [smem:[#allocation2 + $0x5]]
        %v379 = vstv %s378
        %v380 = vmul.f32 %v379, %v347
        %s381 = sld [smem:[#allocation2 + $0x17]]
        %v382 = vstv %s381
        %v383 = vadd.f32 %v380, %v382
        %s384 = sld [smem:[#allocation2 + $0x6]]
        %v385 = vstv %s384
        %v386 = vmul.f32 %v385, 0.0
        %s387 = sld [smem:[#allocation2 + $0xc]]
        %v388 = vstv %s387
        %v389 = vmul.f32 %v388, 0.0
        %v390 = vadd.f32 %v386, %v389
        %s391 = sld [smem:[#allocation2 + $0x18]]
        %v392 = vstv %s391
        %v393 = vadd.f32 %v390, %v392
        %s394 = sld [smem:[#allocation2 + $0x7]]
        %v395 = vstv %s394
        %v396 = vmul.f32 %v395, 0.0
        %s397 = sld [smem:[#allocation2 + $0xd]]
        %v398 = vstv %s397
        %v399 = vmul.f32 %v398, 0.0
        %v400 = vadd.f32 %v396, %v399
        %s401 = sld [smem:[#allocation2 + $0x19]]
        %v402 = vstv %s401
        %v403 = vadd.f32 %v400, %v402
        %s404 = sld [smem:[#allocation2 + $0x8]]
        %v405 = vstv %s404
        %v406 = vmul.f32 %v405, 0.0
        %s407 = sld [smem:[#allocation2 + $0xe]]
        %v408 = vstv %s407
        %v409 = vmul.f32 %v408, 0.0
        %v410 = vadd.f32 %v406, %v409
        %s411 = sld [smem:[#allocation2 + $0x1a]]
        %v412 = vstv %s411
        %v413 = vadd.f32 %v410, %v412
        %s414 = sld [smem:[#allocation2 + $0x9]]
        %v415 = vstv %s414
        %v416 = vmul.f32 %v415, 0.0
        %s417 = sld [smem:[#allocation2 + $0xf]]
        %v418 = vstv %s417
        %v419 = vmul.f32 %v418, 0.0
        %v420 = vadd.f32 %v416, %v419
        %s421 = sld [smem:[#allocation2 + $0x1b]]
        %v422 = vstv %s421
        %v423 = vadd.f32 %v420, %v422
        %s424 = sld [smem:[#allocation2 + $0xa]]
        %v425 = vstv %s424
        %v426 = vmul.f32 %v425, 0.0
        %s427 = sld [smem:[#allocation2 + $0x10]]
        %v428 = vstv %s427
        %v429 = vmul.f32 %v428, 0.0
        %v430 = vadd.f32 %v426, %v429
        %s431 = sld [smem:[#allocation2 + $0x1c]]
        %v432 = vstv %s431
        %v433 = vadd.f32 %v430, %v432
        %s434 = sld [smem:[#allocation2 + $0xb]]
        %v435 = vstv %s434
        %v436 = vmul.f32 %v435, 0.0
        %s437 = sld [smem:[#allocation2 + $0x11]]
        %v438 = vstv %s437
        %v439 = vmul.f32 %v438, 0.0
        %v440 = vadd.f32 %v436, %v439
        %s441 = sld [smem:[#allocation2 + $0x1d]]
        %v442 = vstv %s441
        %v443 = vadd.f32 %v440, %v442
        %v444 = vadd.f32 %v353, %v393
        %v445 = vxor.u32 %v444, 2147483648
        %v446 = vmul.f32 %v445, 1.442695
        %v447 = vpow.pop %v446
        %v448 = vadd.f32 %v447, 1.0
        %v449 = vrcp.pop %v448
        %v450 = vmul.f32 1.0, %v449
        %v451 = vadd.f32 %v359, %v403
        %v452 = vxor.u32 %v451, 2147483648
        %v453 = vmul.f32 %v452, 1.442695
        %v454 = vpow.pop %v453
        %v455 = vadd.f32 %v454, 1.0
        %v456 = vrcp.pop %v455
        %v457 = vmul.f32 1.0, %v456
        %v458 = vadd.f32 %v365, %v413
        %v459 = vxor.u32 %v458, 2147483648
        %v460 = vmul.f32 %v459, 1.442695
        %v461 = vpow.pop %v460
        %v462 = vadd.f32 %v461, 1.0
        %v463 = vrcp.pop %v462
        %v464 = vmul.f32 1.0, %v463
        %v465 = vadd.f32 %v371, %v423
        %v466 = vxor.u32 %v465, 2147483648
        %v467 = vmul.f32 %v466, 1.442695
        %v468 = vpow.pop %v467
        %v469 = vadd.f32 %v468, 1.0
        %v470 = vrcp.pop %v469
        %v471 = vmul.f32 1.0, %v470
        %v472 = vmul.f32 %v450, %v433
        %v473 = vadd.f32 %v377, %v472
        %v474 = vtanh.pop %v473
        %v475 = vmul.f32 %v457, %v443
        %v476 = vadd.f32 %v383, %v475
        %v477 = vtanh.pop %v476
        %v478 = vsub.f32 1.0, %v464
        %v479 = vmul.f32 %v478, %v474
        %v480 = vmul.f32 %v464, 0.0
        %v481 = vadd.f32 %v479, %v480
        %v482 = vsub.f32 1.0, %v471
        %v483 = vmul.f32 %v482, %v477
        %v484 = vmul.f32 %v471, 0.0
        %v485 = vadd.f32 %v483, %v484
        %s486 = scalar_lea.vmem %s284, 8 [#allocation6]
        %v487 = vld [vmem:[%s486] sm:$0xff]
        %v488 = vmul.f32 %v349, %v487
        %v489 = vadd.f32 %v488, %v352
        %v490 = vmul.f32 %v355, %v487
        %v491 = vadd.f32 %v490, %v358
        %v492 = vmul.f32 %v361, %v487
        %v493 = vadd.f32 %v492, %v364
        %v494 = vmul.f32 %v367, %v487
        %v495 = vadd.f32 %v494, %v370
        %v496 = vmul.f32 %v373, %v487
        %v497 = vadd.f32 %v496, %v376
        %v498 = vmul.f32 %v379, %v487
        %v499 = vadd.f32 %v498, %v382
        %v500 = vmul.f32 %v385, %v481
        %v501 = vmul.f32 %v388, %v485
        %v502 = vadd.f32 %v500, %v501
        %v503 = vadd.f32 %v502, %v392
        %v504 = vmul.f32 %v395, %v481
        %v505 = vmul.f32 %v398, %v485
        %v506 = vadd.f32 %v504, %v505
        %v507 = vadd.f32 %v506, %v402
        %v508 = vmul.f32 %v405, %v481
        %v509 = vmul.f32 %v408, %v485
        %v510 = vadd.f32 %v508, %v509
        %v511 = vadd.f32 %v510, %v412
        %v512 = vmul.f32 %v415, %v481
        %v513 = vmul.f32 %v418, %v485
        %v514 = vadd.f32 %v512, %v513
        %v515 = vadd.f32 %v514, %v422
        %v516 = vmul.f32 %v425, %v481
        %v517 = vmul.f32 %v428, %v485
        %v518 = vadd.f32 %v516, %v517
        %v519 = vadd.f32 %v518, %v432
        %v520 = vmul.f32 %v435, %v481
        %v521 = vmul.f32 %v438, %v485
        %v522 = vadd.f32 %v520, %v521
        %v523 = vadd.f32 %v522, %v442
        %v524 = vadd.f32 %v489, %v503
        %v525 = vxor.u32 %v524, 2147483648
        %v526 = vmul.f32 %v525, 1.442695
        %v527 = vpow.pop %v526
        %v528 = vadd.f32 %v527, 1.0
        %v529 = vrcp.pop %v528
        %v530 = vmul.f32 1.0, %v529
        %v531 = vadd.f32 %v491, %v507
        %v532 = vxor.u32 %v531, 2147483648
        %v533 = vmul.f32 %v532, 1.442695
        %v534 = vpow.pop %v533
        %v535 = vadd.f32 %v534, 1.0
        %v536 = vrcp.pop %v535
        %v537 = vmul.f32 1.0, %v536
        %v538 = vadd.f32 %v493, %v511
        %v539 = vxor.u32 %v538, 2147483648
        %v540 = vmul.f32 %v539, 1.442695
        %v541 = vpow.pop %v540
        %v542 = vadd.f32 %v541, 1.0
        %v543 = vrcp.pop %v542
        %v544 = vmul.f32 1.0, %v543
        %v545 = vadd.f32 %v495, %v515
        %v546 = vxor.u32 %v545, 2147483648
        %v547 = vmul.f32 %v546, 1.442695
        %v548 = vpow.pop %v547
        %v549 = vadd.f32 %v548, 1.0
        %v550 = vrcp.pop %v549
        %v551 = vmul.f32 1.0, %v550
        %v552 = vmul.f32 %v530, %v519
        %v553 = vadd.f32 %v497, %v552
        %v554 = vtanh.pop %v553
        %v555 = vmul.f32 %v537, %v523
        %v556 = vadd.f32 %v499, %v555
        %v557 = vtanh.pop %v556
        %v558 = vsub.f32 1.0, %v544
        %v559 = vmul.f32 %v558, %v554
        %v560 = vmul.f32 %v544, %v481
        %v561 = vadd.f32 %v559, %v560
        %v562 = vsub.f32 1.0, %v551
        %v563 = vmul.f32 %v562, %v557
        %v564 = vmul.f32 %v551, %v485
        %v565 = vadd.f32 %v563, %v564
        %s566 = scalar_lea.vmem %s284, 16 [#allocation6]
        %v567 = vld [vmem:[%s566] sm:$0xff]
        %v568 = vmul.f32 %v349, %v567
        %v569 = vadd.f32 %v568, %v352
        %v570 = vmul.f32 %v355, %v567
        %v571 = vadd.f32 %v570, %v358
        %v572 = vmul.f32 %v361, %v567
        %v573 = vadd.f32 %v572, %v364
        %v574 = vmul.f32 %v367, %v567
        %v575 = vadd.f32 %v574, %v370
        %v576 = vmul.f32 %v373, %v567
        %v577 = vadd.f32 %v576, %v376
        %v578 = vmul.f32 %v379, %v567
        %v579 = vadd.f32 %v578, %v382
        %v580 = vmul.f32 %v385, %v561
        %v581 = vmul.f32 %v388, %v565
        %v582 = vadd.f32 %v580, %v581
        %v583 = vadd.f32 %v582, %v392
        %v584 = vmul.f32 %v395, %v561
        %v585 = vmul.f32 %v398, %v565
        %v586 = vadd.f32 %v584, %v585
        %v587 = vadd.f32 %v586, %v402
        %v588 = vmul.f32 %v405, %v561
        %v589 = vmul.f32 %v408, %v565
        %v590 = vadd.f32 %v588, %v589
        %v591 = vadd.f32 %v590, %v412
        %v592 = vmul.f32 %v415, %v561
        %v593 = vmul.f32 %v418, %v565
        %v594 = vadd.f32 %v592, %v593
        %v595 = vadd.f32 %v594, %v422
        %v596 = vmul.f32 %v425, %v561
        %v597 = vmul.f32 %v428, %v565
        %v598 = vadd.f32 %v596, %v597
        %v599 = vadd.f32 %v598, %v432
        %v600 = vmul.f32 %v435, %v561
        %v601 = vmul.f32 %v438, %v565
        %v602 = vadd.f32 %v600, %v601
        %v603 = vadd.f32 %v602, %v442
        %v604 = vadd.f32 %v569, %v583
        %v605 = vxor.u32 %v604, 2147483648
        %v606 = vmul.f32 %v605, 1.442695
        %v607 = vpow.pop %v606
        %v608 = vadd.f32 %v607, 1.0
        %v609 = vrcp.pop %v608
        %v610 = vmul.f32 1.0, %v609
        %v611 = vadd.f32 %v571, %v587
        %v612 = vxor.u32 %v611, 2147483648
        %v613 = vmul.f32 %v612, 1.442695
        %v614 = vpow.pop %v613
        %v615 = vadd.f32 %v614, 1.0
        %v616 = vrcp.pop %v615
        %v617 = vmul.f32 1.0, %v616
        %v618 = vadd.f32 %v573, %v591
        %v619 = vxor.u32 %v618, 2147483648
        %v620 = vmul.f32 %v619, 1.442695
        %v621 = vpow.pop %v620
        %v622 = vadd.f32 %v621, 1.0
        %v623 = vrcp.pop %v622
        %v624 = vmul.f32 1.0, %v623
        %v625 = vadd.f32 %v575, %v595
        %v626 = vxor.u32 %v625, 2147483648
        %v627 = vmul.f32 %v626, 1.442695
        %v628 = vpow.pop %v627
        %v629 = vadd.f32 %v628, 1.0
        %v630 = vrcp.pop %v629
        %v631 = vmul.f32 1.0, %v630
        %v632 = vmul.f32 %v610, %v599
        %v633 = vadd.f32 %v577, %v632
        %v634 = vtanh.pop %v633
        %v635 = vmul.f32 %v617, %v603
        %v636 = vadd.f32 %v579, %v635
        %v637 = vtanh.pop %v636
        %v638 = vsub.f32 1.0, %v624
        %v639 = vmul.f32 %v638, %v634
        %v640 = vmul.f32 %v624, %v561
        %v641 = vadd.f32 %v639, %v640
        %v642 = vsub.f32 1.0, %v631
        %v643 = vmul.f32 %v642, %v637
        %v644 = vmul.f32 %v631, %v565
        %v645 = vadd.f32 %v643, %v644
        %s646 = scalar_lea.vmem %s284, 24 [#allocation6]
        %v647 = vld [vmem:[%s646] sm:$0xff]
        %v648 = vmul.f32 %v349, %v647
        %v649 = vadd.f32 %v648, %v352
        %v650 = vmul.f32 %v355, %v647
        %v651 = vadd.f32 %v650, %v358
        %v652 = vmul.f32 %v361, %v647
        %v653 = vadd.f32 %v652, %v364
        %v654 = vmul.f32 %v367, %v647
        %v655 = vadd.f32 %v654, %v370
        %v656 = vmul.f32 %v373, %v647
        %v657 = vadd.f32 %v656, %v376
        %v658 = vmul.f32 %v379, %v647
        %v659 = vadd.f32 %v658, %v382
        %v660 = vmul.f32 %v385, %v641
        %v661 = vmul.f32 %v388, %v645
        %v662 = vadd.f32 %v660, %v661
        %v663 = vadd.f32 %v662, %v392
        %v664 = vmul.f32 %v395, %v641
        %v665 = vmul.f32 %v398, %v645
        %v666 = vadd.f32 %v664, %v665
        %v667 = vadd.f32 %v666, %v402
        %v668 = vmul.f32 %v405, %v641
        %v669 = vmul.f32 %v408, %v645
        %v670 = vadd.f32 %v668, %v669
        %v671 = vadd.f32 %v670, %v412
        %v672 = vmul.f32 %v415, %v641
        %v673 = vmul.f32 %v418, %v645
        %v674 = vadd.f32 %v672, %v673
        %v675 = vadd.f32 %v674, %v422
        %v676 = vmul.f32 %v425, %v641
        %v677 = vmul.f32 %v428, %v645
        %v678 = vadd.f32 %v676, %v677
        %v679 = vadd.f32 %v678, %v432
        %v680 = vmul.f32 %v435, %v641
        %v681 = vmul.f32 %v438, %v645
        %v682 = vadd.f32 %v680, %v681
        %v683 = vadd.f32 %v682, %v442
        %v684 = vadd.f32 %v649, %v663
        %v685 = vxor.u32 %v684, 2147483648
        %v686 = vmul.f32 %v685, 1.442695
        %v687 = vpow.pop %v686
        %v688 = vadd.f32 %v687, 1.0
        %v689 = vrcp.pop %v688
        %v690 = vmul.f32 1.0, %v689
        %v691 = vadd.f32 %v651, %v667
        %v692 = vxor.u32 %v691, 2147483648
        %v693 = vmul.f32 %v692, 1.442695
        %v694 = vpow.pop %v693
        %v695 = vadd.f32 %v694, 1.0
        %v696 = vrcp.pop %v695
        %v697 = vmul.f32 1.0, %v696
        %v698 = vadd.f32 %v653, %v671
        %v699 = vxor.u32 %v698, 2147483648
        %v700 = vmul.f32 %v699, 1.442695
        %v701 = vpow.pop %v700
        %v702 = vadd.f32 %v701, 1.0
        %v703 = vrcp.pop %v702
        %v704 = vmul.f32 1.0, %v703
        %v705 = vadd.f32 %v655, %v675
        %v706 = vxor.u32 %v705, 2147483648
        %v707 = vmul.f32 %v706, 1.442695
        %v708 = vpow.pop %v707
        %v709 = vadd.f32 %v708, 1.0
        %v710 = vrcp.pop %v709
        %v711 = vmul.f32 1.0, %v710
        %v712 = vmul.f32 %v690, %v679
        %v713 = vadd.f32 %v657, %v712
        %v714 = vtanh.pop %v713
        %v715 = vmul.f32 %v697, %v683
        %v716 = vadd.f32 %v659, %v715
        %v717 = vtanh.pop %v716
        %v718 = vsub.f32 1.0, %v704
        %v719 = vmul.f32 %v718, %v714
        %v720 = vmul.f32 %v704, %v641
        %v721 = vadd.f32 %v719, %v720
        %v722 = vsub.f32 1.0, %v711
        %v723 = vmul.f32 %v722, %v717
        %v724 = vmul.f32 %v711, %v645
        %v725 = vadd.f32 %v723, %v724
        %s726 = scalar_lea.vmem %s284, 32 [#allocation6]
        %v727 = vld [vmem:[%s726] sm:$0xff]
        %v728 = vmul.f32 %v481, %v346
        %729 = vadd.xlane.f32.xlu0 %v728
        %v730 = vpop.xlane.xlu0 %729
        %s731 = sld [smem:[#allocation2 + $0x30]]
        %v732 = vstv %s731
        %v733 = vmul.f32 %v732, %v730
        %v734 = vsub.f32 %v481, %v733
        %v735 = vmul.f32 %v734, %v734
        %v736 = vmul.f32 %v735, %v346
        %737 = vadd.xlane.f32.xlu0 %v736
        %v738 = vpop.xlane.xlu0 %737
        %s739 = sld [smem:[#allocation2 + $0x1e]]
        %v740 = vadd.f32 %v738, 1e-05
        %v741 = vrsqrt.pop %v740
        %v742 = vmul.f32 %v734, %v741
        %v743 = vstv %s739
        %v744 = vmul.f32 %v743, %v742
        %s745 = sld [smem:[#allocation2 + $0x27]]
        %v746 = vstv %s745
        %v747 = vadd.f32 %v744, %v746
        %vm748 = vcmp.gt.f32.partialorder %v747, 0.0
        %v749 = vmul.f32 %v747, 0.01
        %v750 = vsel %vm748, %v747, %v749
        %v751 = vmul.f32 %v485, %v346
        %752 = vadd.xlane.f32.xlu0 %v751
        %v753 = vpop.xlane.xlu0 %752
        %s754 = sld [smem:[#allocation2 + $0x31]]
        %v755 = vstv %s754
        %v756 = vmul.f32 %v755, %v753
        %v757 = vsub.f32 %v485, %v756
        %v758 = vmul.f32 %v757, %v757
        %v759 = vmul.f32 %v758, %v346
        %760 = vadd.xlane.f32.xlu0 %v759
        %v761 = vpop.xlane.xlu0 %760
        %s762 = sld [smem:[#allocation2 + $0x1f]]
        %v763 = vadd.f32 %v761, 1e-05
        %v764 = vrsqrt.pop %v763
        %v765 = vmul.f32 %v757, %v764
        %v766 = vstv %s762
        %v767 = vmul.f32 %v766, %v765
        %s768 = sld [smem:[#allocation2 + $0x28]]
        %v769 = vstv %s768
        %v770 = vadd.f32 %v767, %v769
        %vm771 = vcmp.gt.f32.partialorder %v770, 0.0
        %v772 = vmul.f32 %v770, 0.01
        %v773 = vsel %vm771, %v770, %v772
        %v774 = vmul.f32 %v561, %v346
        %775 = vadd.xlane.f32.xlu0 %v774
        %v776 = vpop.xlane.xlu0 %775
        %s777 = sld [smem:[#allocation2 + $0x32]]
        %v778 = vstv %s777
        %v779 = vmul.f32 %v778, %v776
        %v780 = vsub.f32 %v561, %v779
        %v781 = vmul.f32 %v780, %v780
        %v782 = vmul.f32 %v781, %v346
        %783 = vadd.xlane.f32.xlu0 %v782
        %v784 = vpop.xlane.xlu0 %783
        %s785 = sld [smem:[#allocation2 + $0x20]]
        %v786 = vadd.f32 %v784, 1e-05
        %v787 = vrsqrt.pop %v786
        %v788 = vmul.f32 %v780, %v787
        %v789 = vstv %s785
        %v790 = vmul.f32 %v789, %v788
        %s791 = sld [smem:[#allocation2 + $0x29]]
        %v792 = vstv %s791
        %v793 = vadd.f32 %v790, %v792
        %vm794 = vcmp.gt.f32.partialorder %v793, 0.0
        %v795 = vmul.f32 %v793, 0.01
        %v796 = vsel %vm794, %v793, %v795
        %v797 = vmul.f32 %v565, %v346
        %798 = vadd.xlane.f32.xlu0 %v797
        %v799 = vpop.xlane.xlu0 %798
        %s800 = sld [smem:[#allocation2 + $0x33]]
        %v801 = vstv %s800
        %v802 = vmul.f32 %v801, %v799
        %v803 = vsub.f32 %v565, %v802
        %v804 = vmul.f32 %v803, %v803
        %v805 = vmul.f32 %v804, %v346
        %806 = vadd.xlane.f32.xlu0 %v805
        %v807 = vpop.xlane.xlu0 %806
        %s808 = sld [smem:[#allocation2 + $0x21]]
        %v809 = vadd.f32 %v807, 1e-05
        %v810 = vrsqrt.pop %v809
        %v811 = vmul.f32 %v803, %v810
        %v812 = vstv %s808
        %v813 = vmul.f32 %v812, %v811
        %s814 = sld [smem:[#allocation2 + $0x2a]]
        %v815 = vstv %s814
        %v816 = vadd.f32 %v813, %v815
        %vm817 = vcmp.gt.f32.partialorder %v816, 0.0
        %v818 = vmul.f32 %v816, 0.01
        %v819 = vsel %vm817, %v816, %v818
        %v820 = vmul.f32 %v641, %v346
        %821 = vadd.xlane.f32.xlu0 %v820
        %v822 = vpop.xlane.xlu0 %821
        %s823 = sld [smem:[#allocation2 + $0x34]]
        %v824 = vstv %s823
        %v825 = vmul.f32 %v824, %v822
        %v826 = vsub.f32 %v641, %v825
        %v827 = vmul.f32 %v826, %v826
        %v828 = vmul.f32 %v827, %v346
        %829 = vadd.xlane.f32.xlu0 %v828
        %v830 = vpop.xlane.xlu0 %829
        %s831 = sld [smem:[#allocation2 + $0x22]]
        %v832 = vadd.f32 %v830, 1e-05
        %v833 = vrsqrt.pop %v832
        %v834 = vmul.f32 %v826, %v833
        %v835 = vstv %s831
        %v836 = vmul.f32 %v835, %v834
        %s837 = sld [smem:[#allocation2 + $0x2b]]
        %v838 = vstv %s837
        %v839 = vadd.f32 %v836, %v838
        %vm840 = vcmp.gt.f32.partialorder %v839, 0.0
        %v841 = vmul.f32 %v839, 0.01
        %v842 = vsel %vm840, %v839, %v841
        %v843 = vmul.f32 %v645, %v346
        %844 = vadd.xlane.f32.xlu0 %v843
        %v845 = vpop.xlane.xlu0 %844
        %s846 = sld [smem:[#allocation2 + $0x35]]
        %v847 = vstv %s846
        %v848 = vmul.f32 %v847, %v845
        %v849 = vsub.f32 %v645, %v848
        %v850 = vmul.f32 %v849, %v849
        %v851 = vmul.f32 %v850, %v346
        %852 = vadd.xlane.f32.xlu0 %v851
        %v853 = vpop.xlane.xlu0 %852
        %s854 = sld [smem:[#allocation2 + $0x23]]
        %v855 = vadd.f32 %v853, 1e-05
        %v856 = vrsqrt.pop %v855
        %v857 = vmul.f32 %v849, %v856
        %v858 = vstv %s854
        %v859 = vmul.f32 %v858, %v857
        %s860 = sld [smem:[#allocation2 + $0x2c]]
        %v861 = vstv %s860
        %v862 = vadd.f32 %v859, %v861
        %vm863 = vcmp.gt.f32.partialorder %v862, 0.0
        %v864 = vmul.f32 %v862, 0.01
        %v865 = vsel %vm863, %v862, %v864
        %v866 = vmul.f32 %v721, %v346
        %867 = vadd.xlane.f32.xlu0 %v866
        %v868 = vpop.xlane.xlu0 %867
        %s869 = sld [smem:[#allocation2 + $0x36]]
        %v870 = vstv %s869
        %v871 = vmul.f32 %v870, %v868
        %v872 = vsub.f32 %v721, %v871
        %v873 = vmul.f32 %v872, %v872
        %v874 = vmul.f32 %v873, %v346
        %875 = vadd.xlane.f32.xlu0 %v874
        %v876 = vpop.xlane.xlu0 %875
        %s877 = sld [smem:[#allocation2 + $0x24]]
        %v878 = vadd.f32 %v876, 1e-05
        %v879 = vrsqrt.pop %v878
        %v880 = vmul.f32 %v872, %v879
        %v881 = vstv %s877
        %v882 = vmul.f32 %v881, %v880
        %s883 = sld [smem:[#allocation2 + $0x2d]]
        %v884 = vstv %s883
        %v885 = vadd.f32 %v882, %v884
        %vm886 = vcmp.gt.f32.partialorder %v885, 0.0
        %v887 = vmul.f32 %v885, 0.01
        %v888 = vsel %vm886, %v885, %v887
        %v889 = vmul.f32 %v725, %v346
        %890 = vadd.xlane.f32.xlu0 %v889
        %v891 = vpop.xlane.xlu0 %890
        %s892 = sld [smem:[#allocation2 + $0x37]]
        %v893 = vstv %s892
        %v894 = vmul.f32 %v893, %v891
        %v895 = vsub.f32 %v725, %v894
        %v896 = vmul.f32 %v895, %v895
        %v897 = vmul.f32 %v896, %v346
        %898 = vadd.xlane.f32.xlu0 %v897
        %v899 = vpop.xlane.xlu0 %898
        %s900 = sld [smem:[#allocation2 + $0x25]]
        %v901 = vadd.f32 %v899, 1e-05
        %v902 = vrsqrt.pop %v901
        %v903 = vmul.f32 %v895, %v902
        %v904 = vstv %s900
        %v905 = vmul.f32 %v904, %v903
        %s906 = sld [smem:[#allocation2 + $0x2e]]
        %v907 = vstv %s906
        %v908 = vadd.f32 %v905, %v907
        %vm909 = vcmp.gt.f32.partialorder %v908, 0.0
        %v910 = vmul.f32 %v908, 0.01
        %v911 = vsel %vm909, %v908, %v910
        %v912 = vmul.f32 %v727, %v346
        %913 = vadd.xlane.f32.xlu0 %v912
        %v914 = vpop.xlane.xlu0 %913
        %s915 = sld [smem:[#allocation2 + $0x38]]
        %v916 = vstv %s915
        %v917 = vmul.f32 %v916, %v914
        %v918 = vsub.f32 %v727, %v917
        %v919 = vmul.f32 %v918, %v918
        %v920 = vmul.f32 %v919, %v346
        %921 = vadd.xlane.f32.xlu0 %v920
        %v922 = vpop.xlane.xlu0 %921
        %s923 = sld [smem:[#allocation2 + $0x26]]
        %v924 = vadd.f32 %v922, 1e-05
        %v925 = vrsqrt.pop %v924
        %v926 = vmul.f32 %v918, %v925
        %v927 = vstv %s923
        %v928 = vmul.f32 %v927, %v926
        %s929 = sld [smem:[#allocation2 + $0x2f]]
        %v930 = vstv %s929
        %v931 = vadd.f32 %v928, %v930
        %vm932 = vcmp.gt.f32.partialorder %v931, 0.0
        %v933 = vmul.f32 %v931, 0.01
        %v934 = vsel %vm932, %v931, %v933
        %s935 = sld [smem:[#allocation2 + $0x39]]
        %v936 = vstv %s935
        %v937 = vmul.f32 %v936, %v750
        %s938 = sld [smem:[#allocation2 + $0x41]]
        %v939 = vstv %s938
        %v940 = vmul.f32 %v939, %v773
        %v941 = vadd.f32 %v937, %v940
        %s942 = sld [smem:[#allocation2 + $0x49]]
        %v943 = vstv %s942
        %v944 = vmul.f32 %v943, %v796
        %v945 = vadd.f32 %v941, %v944
        %s946 = sld [smem:[#allocation2 + $0x51]]
        %v947 = vstv %s946
        %v948 = vmul.f32 %v947, %v819
        %v949 = vadd.f32 %v945, %v948
        %s950 = sld [smem:[#allocation2 + $0x59]]
        %v951 = vstv %s950
        %v952 = vmul.f32 %v951, %v842
        %v953 = vadd.f32 %v949, %v952
        %s954 = sld [smem:[#allocation2 + $0x61]]
        %v955 = vstv %s954
        %v956 = vmul.f32 %v955, %v865
        %v957 = vadd.f32 %v953, %v956
        %s958 = sld [smem:[#allocation2 + $0x69]]
        %v959 = vstv %s958
        %v960 = vmul.f32 %v959, %v888
        %v961 = vadd.f32 %v957, %v960
        %s962 = sld [smem:[#allocation2 + $0x71]]
        %v963 = vstv %s962
        %v964 = vmul.f32 %v963, %v911
        %v965 = vadd.f32 %v961, %v964
        %s966 = sld [smem:[#allocation2 + $0x79]]
        %v967 = vstv %s966
        %v968 = vmul.f32 %v967, %v934
        %v969 = vadd.f32 %v965, %v968
        %s970 = sld [smem:[#allocation2 + $0x3a]]
        %v971 = vstv %s970
        %v972 = vmul.f32 %v971, %v750
        %s973 = sld [smem:[#allocation2 + $0x42]]
        %v974 = vstv %s973
        %v975 = vmul.f32 %v974, %v773
        %v976 = vadd.f32 %v972, %v975
        %s977 = sld [smem:[#allocation2 + $0x4a]]
        %v978 = vstv %s977
        %v979 = vmul.f32 %v978, %v796
        %v980 = vadd.f32 %v976, %v979
        %s981 = sld [smem:[#allocation2 + $0x52]]
        %v982 = vstv %s981
        %v983 = vmul.f32 %v982, %v819
        %v984 = vadd.f32 %v980, %v983
        %s985 = sld [smem:[#allocation2 + $0x5a]]
        %v986 = vstv %s985
        %v987 = vmul.f32 %v986, %v842
        %v988 = vadd.f32 %v984, %v987
        %s989 = sld [smem:[#allocation2 + $0x62]]
        %v990 = vstv %s989
        %v991 = vmul.f32 %v990, %v865
        %v992 = vadd.f32 %v988, %v991
        %s993 = sld [smem:[#allocation2 + $0x6a]]
        %v994 = vstv %s993
        %v995 = vmul.f32 %v994, %v888
        %v996 = vadd.f32 %v992, %v995
        %s997 = sld [smem:[#allocation2 + $0x72]]
        %v998 = vstv %s997
        %v999 = vmul.f32 %v998, %v911
        %v1000 = vadd.f32 %v996, %v999
        %s1001 = sld [smem:[#allocation2 + $0x7a]]
        %v1002 = vstv %s1001
        %v1003 = vmul.f32 %v1002, %v934
        %v1004 = vadd.f32 %v1000, %v1003
        %s1005 = sld [smem:[#allocation2 + $0x3b]]
        %v1006 = vstv %s1005
        %v1007 = vmul.f32 %v1006, %v750
        %s1008 = sld [smem:[#allocation2 + $0x43]]
        %v1009 = vstv %s1008
        %v1010 = vmul.f32 %v1009, %v773
        %v1011 = vadd.f32 %v1007, %v1010
        %s1012 = sld [smem:[#allocation2 + $0x4b]]
        %v1013 = vstv %s1012
        %v1014 = vmul.f32 %v1013, %v796
        %v1015 = vadd.f32 %v1011, %v1014
        %s1016 = sld [smem:[#allocation2 + $0x53]]
        %v1017 = vstv %s1016
        %v1018 = vmul.f32 %v1017, %v819
        %v1019 = vadd.f32 %v1015, %v1018
        %s1020 = sld [smem:[#allocation2 + $0x5b]]
        %v1021 = vstv %s1020
        %v1022 = vmul.f32 %v1021, %v842
        %v1023 = vadd.f32 %v1019, %v1022
        %s1024 = sld [smem:[#allocation2 + $0x63]]
        %v1025 = vstv %s1024
        %v1026 = vmul.f32 %v1025, %v865
        %v1027 = vadd.f32 %v1023, %v1026
        %s1028 = sld [smem:[#allocation2 + $0x6b]]
        %v1029 = vstv %s1028
        %v1030 = vmul.f32 %v1029, %v888
        %v1031 = vadd.f32 %v1027, %v1030
        %s1032 = sld [smem:[#allocation2 + $0x73]]
        %v1033 = vstv %s1032
        %v1034 = vmul.f32 %v1033, %v911
        %v1035 = vadd.f32 %v1031, %v1034
        %s1036 = sld [smem:[#allocation2 + $0x7b]]
        %v1037 = vstv %s1036
        %v1038 = vmul.f32 %v1037, %v934
        %v1039 = vadd.f32 %v1035, %v1038
        %s1040 = sld [smem:[#allocation2 + $0x3c]]
        %v1041 = vstv %s1040
        %v1042 = vmul.f32 %v1041, %v750
        %s1043 = sld [smem:[#allocation2 + $0x44]]
        %v1044 = vstv %s1043
        %v1045 = vmul.f32 %v1044, %v773
        %v1046 = vadd.f32 %v1042, %v1045
        %s1047 = sld [smem:[#allocation2 + $0x4c]]
        %v1048 = vstv %s1047
        %v1049 = vmul.f32 %v1048, %v796
        %v1050 = vadd.f32 %v1046, %v1049
        %s1051 = sld [smem:[#allocation2 + $0x54]]
        %v1052 = vstv %s1051
        %v1053 = vmul.f32 %v1052, %v819
        %v1054 = vadd.f32 %v1050, %v1053
        %s1055 = sld [smem:[#allocation2 + $0x5c]]
        %v1056 = vstv %s1055
        %v1057 = vmul.f32 %v1056, %v842
        %v1058 = vadd.f32 %v1054, %v1057
        %s1059 = sld [smem:[#allocation2 + $0x64]]
        %v1060 = vstv %s1059
        %v1061 = vmul.f32 %v1060, %v865
        %v1062 = vadd.f32 %v1058, %v1061
        %s1063 = sld [smem:[#allocation2 + $0x6c]]
        %v1064 = vstv %s1063
        %v1065 = vmul.f32 %v1064, %v888
        %v1066 = vadd.f32 %v1062, %v1065
        %s1067 = sld [smem:[#allocation2 + $0x74]]
        %v1068 = vstv %s1067
        %v1069 = vmul.f32 %v1068, %v911
        %v1070 = vadd.f32 %v1066, %v1069
        %s1071 = sld [smem:[#allocation2 + $0x7c]]
        %v1072 = vstv %s1071
        %v1073 = vmul.f32 %v1072, %v934
        %v1074 = vadd.f32 %v1070, %v1073
        %s1075 = sld [smem:[#allocation2 + $0x3d]]
        %v1076 = vstv %s1075
        %v1077 = vmul.f32 %v1076, %v750
        %s1078 = sld [smem:[#allocation2 + $0x45]]
        %v1079 = vstv %s1078
        %v1080 = vmul.f32 %v1079, %v773
        %v1081 = vadd.f32 %v1077, %v1080
        %s1082 = sld [smem:[#allocation2 + $0x4d]]
        %v1083 = vstv %s1082
        %v1084 = vmul.f32 %v1083, %v796
        %v1085 = vadd.f32 %v1081, %v1084
        %s1086 = sld [smem:[#allocation2 + $0x55]]
        %v1087 = vstv %s1086
        %v1088 = vmul.f32 %v1087, %v819
        %v1089 = vadd.f32 %v1085, %v1088
        %s1090 = sld [smem:[#allocation2 + $0x5d]]
        %v1091 = vstv %s1090
        %v1092 = vmul.f32 %v1091, %v842
        %v1093 = vadd.f32 %v1089, %v1092
        %s1094 = sld [smem:[#allocation2 + $0x65]]
        %v1095 = vstv %s1094
        %v1096 = vmul.f32 %v1095, %v865
        %v1097 = vadd.f32 %v1093, %v1096
        %s1098 = sld [smem:[#allocation2 + $0x6d]]
        %v1099 = vstv %s1098
        %v1100 = vmul.f32 %v1099, %v888
        %v1101 = vadd.f32 %v1097, %v1100
        %s1102 = sld [smem:[#allocation2 + $0x75]]
        %v1103 = vstv %s1102
        %v1104 = vmul.f32 %v1103, %v911
        %v1105 = vadd.f32 %v1101, %v1104
        %s1106 = sld [smem:[#allocation2 + $0x7d]]
        %v1107 = vstv %s1106
        %v1108 = vmul.f32 %v1107, %v934
        %v1109 = vadd.f32 %v1105, %v1108
        %s1110 = sld [smem:[#allocation2 + $0x3e]]
        %v1111 = vstv %s1110
        %v1112 = vmul.f32 %v1111, %v750
        %s1113 = sld [smem:[#allocation2 + $0x46]]
        %v1114 = vstv %s1113
        %v1115 = vmul.f32 %v1114, %v773
        %v1116 = vadd.f32 %v1112, %v1115
        %s1117 = sld [smem:[#allocation2 + $0x4e]]
        %v1118 = vstv %s1117
        %v1119 = vmul.f32 %v1118, %v796
        %v1120 = vadd.f32 %v1116, %v1119
        %s1121 = sld [smem:[#allocation2 + $0x56]]
        %v1122 = vstv %s1121
        %v1123 = vmul.f32 %v1122, %v819
        %v1124 = vadd.f32 %v1120, %v1123
        %s1125 = sld [smem:[#allocation2 + $0x5e]]
        %v1126 = vstv %s1125
        %v1127 = vmul.f32 %v1126, %v842
        %v1128 = vadd.f32 %v1124, %v1127
        %s1129 = sld [smem:[#allocation2 + $0x66]]
        %v1130 = vstv %s1129
        %v1131 = vmul.f32 %v1130, %v865
        %v1132 = vadd.f32 %v1128, %v1131
        %s1133 = sld [smem:[#allocation2 + $0x6e]]
        %v1134 = vstv %s1133
        %v1135 = vmul.f32 %v1134, %v888
        %v1136 = vadd.f32 %v1132, %v1135
        %s1137 = sld [smem:[#allocation2 + $0x76]]
        %v1138 = vstv %s1137
        %v1139 = vmul.f32 %v1138, %v911
        %v1140 = vadd.f32 %v1136, %v1139
        %s1141 = sld [smem:[#allocation2 + $0x7e]]
        %v1142 = vstv %s1141
        %v1143 = vmul.f32 %v1142, %v934
        %v1144 = vadd.f32 %v1140, %v1143
        %s1145 = sld [smem:[#allocation2 + $0x3f]]
        %v1146 = vstv %s1145
        %v1147 = vmul.f32 %v1146, %v750
        %s1148 = sld [smem:[#allocation2 + $0x47]]
        %v1149 = vstv %s1148
        %v1150 = vmul.f32 %v1149, %v773
        %v1151 = vadd.f32 %v1147, %v1150
        %s1152 = sld [smem:[#allocation2 + $0x4f]]
        %v1153 = vstv %s1152
        %v1154 = vmul.f32 %v1153, %v796
        %v1155 = vadd.f32 %v1151, %v1154
        %s1156 = sld [smem:[#allocation2 + $0x57]]
        %v1157 = vstv %s1156
        %v1158 = vmul.f32 %v1157, %v819
        %v1159 = vadd.f32 %v1155, %v1158
        %s1160 = sld [smem:[#allocation2 + $0x5f]]
        %v1161 = vstv %s1160
        %v1162 = vmul.f32 %v1161, %v842
        %v1163 = vadd.f32 %v1159, %v1162
        %s1164 = sld [smem:[#allocation2 + $0x67]]
        %v1165 = vstv %s1164
        %v1166 = vmul.f32 %v1165, %v865
        %v1167 = vadd.f32 %v1163, %v1166
        %s1168 = sld [smem:[#allocation2 + $0x6f]]
        %v1169 = vstv %s1168
        %v1170 = vmul.f32 %v1169, %v888
        %v1171 = vadd.f32 %v1167, %v1170
        %s1172 = sld [smem:[#allocation2 + $0x77]]
        %v1173 = vstv %s1172
        %v1174 = vmul.f32 %v1173, %v911
        %v1175 = vadd.f32 %v1171, %v1174
        %s1176 = sld [smem:[#allocation2 + $0x7f]]
        %v1177 = vstv %s1176
        %v1178 = vmul.f32 %v1177, %v934
        %v1179 = vadd.f32 %v1175, %v1178
        %s1180 = sld [smem:[#allocation2 + $0x40]]
        %v1181 = vstv %s1180
        %v1182 = vmul.f32 %v1181, %v750
        %s1183 = sld [smem:[#allocation2 + $0x48]]
        %v1184 = vstv %s1183
        %v1185 = vmul.f32 %v1184, %v773
        %v1186 = vadd.f32 %v1182, %v1185
        %s1187 = sld [smem:[#allocation2 + $0x50]]
        %v1188 = vstv %s1187
        %v1189 = vmul.f32 %v1188, %v796
        %v1190 = vadd.f32 %v1186, %v1189
        %s1191 = sld [smem:[#allocation2 + $0x58]]
        %v1192 = vstv %s1191
        %v1193 = vmul.f32 %v1192, %v819
        %v1194 = vadd.f32 %v1190, %v1193
        %s1195 = sld [smem:[#allocation2 + $0x60]]
        %v1196 = vstv %s1195
        %v1197 = vmul.f32 %v1196, %v842
        %v1198 = vadd.f32 %v1194, %v1197
        %s1199 = sld [smem:[#allocation2 + $0x68]]
        %v1200 = vstv %s1199
        %v1201 = vmul.f32 %v1200, %v865
        %v1202 = vadd.f32 %v1198, %v1201
        %s1203 = sld [smem:[#allocation2 + $0x70]]
        %v1204 = vstv %s1203
        %v1205 = vmul.f32 %v1204, %v888
        %v1206 = vadd.f32 %v1202, %v1205
        %s1207 = sld [smem:[#allocation2 + $0x78]]
        %v1208 = vstv %s1207
        %v1209 = vmul.f32 %v1208, %v911
        %v1210 = vadd.f32 %v1206, %v1209
        %s1211 = sld [smem:[#allocation2 + $0x80]]
        %v1212 = vstv %s1211
        %v1213 = vmul.f32 %v1212, %v934
        %v1214 = vadd.f32 %v1210, %v1213
        %v1215 = vld [vmem:[#allocation10] sm:$0xff]
        %v1216 = vld [vmem:[#allocation10 + $0x8] sm:$0xff]
        %v1217 = vld [vmem:[#allocation10 + $0x10] sm:$0xff]
        %v1218 = vld [vmem:[#allocation10 + $0x18] sm:$0xff]
        %v1219 = vld [vmem:[#allocation10 + $0x20] sm:$0xff]
        %s1220 = sld [smem:[#allocation2 + $0x81]]
        %v1222 = vrot.slane %v1004, 7
        %v1225 = vrot.slane %v1039, 6
        %v1228 = vrot.slane %v1074, 5
        %v1231 = vrot.slane %v1109, 4
        %v1234 = vrot.slane %v1144, 3
        %v1237 = vrot.slane %v1179, 2
        %v1240 = vrot.slane %v1214, 1
        %vm1242 = vcmask 1040384
        %v1243 = vsel %vm1242, %v969, %v1222
        %vm1244 = vcmask 1041408
        %v1245 = vsel %vm1244, %v1243, %v1225
        %vm1246 = vcmask 1042432
        %v1247 = vsel %vm1246, %v1245, %v1228
        %vm1248 = vcmask 1043456
        %v1249 = vsel %vm1248, %v1247, %v1231
        %vm1250 = vcmask 1044480
        %v1251 = vsel %vm1250, %v1249, %v1234
        %vm1252 = vcmask 1045504
        %v1253 = vsel %vm1252, %v1251, %v1237
        %vm1254 = vcmask 1046528
        %v1255 = vsel %vm1254, %v1253, %v1240
        %v1256 = vpack.c.bf16 %v1255, %v1255
        %v1257 = vld [vmem:[%s293] sm:$0xf]
        %v1258 = vld [vmem:[%s293 + $0x4] sm:$0xf]
        %v1259 = vld [vmem:[%s293 + $0x8] sm:$0xf]
        %v1260 = vld [vmem:[%s293 + $0xc] sm:$0xf]
        %v1261 = vld [vmem:[%s293 + $0x10] sm:$0xf]
        %v1262 = vld [vmem:[%s293 + $0x14] sm:$0xf]
        %v1263 = vld [vmem:[%s293 + $0x18] sm:$0xf]
        %v1264 = vld [vmem:[%s293 + $0x1c] sm:$0xf]
        %v1265 = vld [vmem:[%s293 + $0x20] sm:$0xf]
        %v1266 = vld [vmem:[%s293 + $0x24] sm:$0xf]
        %v1267 = vld [vmem:[%s293 + $0x28] sm:$0xf]
        %v1268 = vld [vmem:[%s293 + $0x2c] sm:$0xf]
        %v1269 = vld [vmem:[%s293 + $0x30] sm:$0xf]
        %v1270 = vld [vmem:[%s293 + $0x34] sm:$0xf]
        %v1271 = vld [vmem:[%s293 + $0x38] sm:$0xf]
        %v1272 = vld [vmem:[%s293 + $0x3c] sm:$0xf]
        %v1289 = vunpack.c.l.b16 %v1257
        %v1290 = vunpack.c.l.b16 %v1258
        %v1291 = vunpack.c.l.b16 %v1259
        %v1292 = vunpack.c.l.b16 %v1260
        %v1293 = vunpack.c.l.b16 %v1261
        %v1294 = vunpack.c.l.b16 %v1262
        %v1295 = vunpack.c.l.b16 %v1263
        %v1296 = vunpack.c.l.b16 %v1264
        %v1297 = vunpack.c.l.b16 %v1265
        %v1298 = vunpack.c.l.b16 %v1266
        %v1299 = vunpack.c.l.b16 %v1267
        %v1300 = vunpack.c.l.b16 %v1268
        %v1301 = vunpack.c.l.b16 %v1269
        %v1302 = vunpack.c.l.b16 %v1270
        %v1303 = vunpack.c.l.b16 %v1271
        %v1304 = vunpack.c.l.b16 %v1272
        %v1305 = vpack.c.b16 %v1290, %v1289
        %v1306 = vpack.c.b16 %v1292, %v1291
        %v1307 = vpack.c.b16 %v1294, %v1293
        %v1308 = vpack.c.b16 %v1296, %v1295
        %v1309 = vpack.c.b16 %v1298, %v1297
        %v1310 = vpack.c.b16 %v1300, %v1299
        %v1311 = vpack.c.b16 %v1302, %v1301
        %v1312 = vpack.c.b16 %v1304, %v1303
        %1321 = vmatprep.subr.bf16.mxu0 0
        %1322 = vmatpush1.bf16.msra.mxu0 %v1305
        %1323 = vmatprep.subr.bf16.mxu0 0
        %1324 = vmatpush1.bf16.msra.mxu0 %v1306
        %1325 = vmatprep.subr.bf16.mxu0 0
        %1326 = vmatpush1.bf16.msra.mxu0 %v1307
        %1327 = vmatprep.subr.bf16.mxu0 0
        %1328 = vmatpush1.bf16.msra.mxu0 %v1308
        %1329 = vmatprep.subr.bf16.mxu0 0
        %1330 = vmatpush1.bf16.msra.mxu0 %v1309
        %1331 = vmatprep.subr.bf16.mxu0 0
        %1332 = vmatpush1.bf16.msra.mxu0 %v1310
        %1333 = vmatprep.subr.bf16.mxu0 0
        %1334 = vmatpush1.bf16.msra.mxu0 %v1311
        %1335 = vmatprep.subr.bf16.mxu0 0
        %1336 = vmatpush1.bf16.msra.mxu0 %v1312
        %1337 = vmatprep.subr.bf16.mxu0 0
        %1338 = vmatpush1.bf16.msra.mxu0 0
        %1339 = vmatprep.subr.bf16.mxu0 0
        %1340 = vmatpush1.bf16.msra.mxu0 0
        %1341 = vmatprep.subr.bf16.mxu0 0
        %1342 = vmatpush1.bf16.msra.mxu0 0
        %1343 = vmatprep.subr.bf16.mxu0 0
        %1344 = vmatpush1.bf16.msra.mxu0 0
        %1345 = vmatprep.subr.bf16.mxu0 0
        %1346 = vmatpush1.bf16.msra.mxu0 0
        %1347 = vmatprep.subr.bf16.mxu0 0
        %1348 = vmatpush1.bf16.msra.mxu0 0
        %1349 = vmatprep.subr.bf16.mxu0 0
        %1350 = vmatpush1.bf16.msra.mxu0 0
        %1351 = vmatprep.subr.bf16.mxu0 0
        %1352 = vmatpush1.bf16.msra.mxu0 0
        %1353 = vmatprep.mubr.bf16.mxu0 0
        %1354 = vmatmul.mubr.bf16.gmra.mrb[0].mxu0 %v1256
        %v1355 = vpop.f32.mrb[0].mxu0
        %v1356 = vadd.f32 %v1215, %v1355
        %v1357 = vpop.f32.mrb[0].mxu0
        %v1358 = vpop.f32.mrb[0].mxu0
        %v1359 = vpop.f32.mrb[0].mxu0
        %1360 = vdwg.mxu0
        %v1361 = vlaneseq
        %v1362 = vshrl.u32 %v1361, 7
        %v1363 = vsub.s32 0, %v1362
        %v1364 = vrot.slane %v346, %v1363
        %v1365 = vmul.f32 %v1356, %v1364
        %1366 = vadd.xlane.f32.xlu0 %v1365
        %v1367 = vpop.xlane.xlu0 %1366
        %v1368 = vmul.f32 %v1218, %v1367
        %v1369 = vsub.f32 %v1356, %v1368
        %v1370 = vmul.f32 %v1369, %v1369
        %v1371 = vmul.f32 %v1370, %v1364
        %1372 = vadd.xlane.f32.xlu0 %v1371
        %v1373 = vpop.xlane.xlu0 %1372
        %v1374 = vadd.f32 %v1373, 1e-05
        %v1375 = vrsqrt.pop %v1374
        %v1376 = vmul.f32 %v1369, %v1375
        %v1377 = vmul.f32 %v1216, %v1376
        %v1378 = vadd.f32 %v1377, %v1217
        %vm1379 = vcmp.gt.f32.partialorder %v1378, 0.0
        %v1380 = vmul.f32 %v1378, 0.01
        %v1381 = vsel %vm1379, %v1378, %v1380
        %v1382 = vmul.f32 %v1381, %v1219
        %v1383 = vrot.slane %v1382, 4
        %v1384 = vadd.f32 %v1382, %v1383
        %v1385 = vrot.slane %v1384, 2
        %v1386 = vadd.f32 %v1384, %v1385
        %v1387 = vrot.slane %v1386, 1
        %v1388 = vadd.f32 %v1386, %v1387
        %v1389 = vstv %s1220
        %v1390 = vadd.f32 %v1388, %v1389
        %v1392 = vrot.slane %v969, 1
        %v1394 = vrot.slane %v1039, 7
        %v1396 = vrot.slane %v1074, 6
        %v1398 = vrot.slane %v1109, 5
        %v1400 = vrot.slane %v1144, 4
        %v1402 = vrot.slane %v1179, 3
        %v1404 = vrot.slane %v1214, 2
        %v1406 = vsel %vm1242, %v1392, %v1004
        %v1407 = vsel %vm1244, %v1406, %v1394
        %v1408 = vsel %vm1246, %v1407, %v1396
        %v1409 = vsel %vm1248, %v1408, %v1398
        %v1410 = vsel %vm1250, %v1409, %v1400
        %v1411 = vsel %vm1252, %v1410, %v1402
        %v1412 = vsel %vm1254, %v1411, %v1404
        %v1413 = vpack.c.bf16 %v1412, %v1412
        %s1414 = scalar_lea.vmem %s293, 64 [#allocation7]
        %v1415 = vld [vmem:[%s1414] sm:$0xf]
        %v1416 = vld [vmem:[%s1414 + $0x4] sm:$0xf]
        %v1417 = vld [vmem:[%s1414 + $0x8] sm:$0xf]
        %v1418 = vld [vmem:[%s1414 + $0xc] sm:$0xf]
        %v1419 = vld [vmem:[%s1414 + $0x10] sm:$0xf]
        %v1420 = vld [vmem:[%s1414 + $0x14] sm:$0xf]
        %v1421 = vld [vmem:[%s1414 + $0x18] sm:$0xf]
        %v1422 = vld [vmem:[%s1414 + $0x1c] sm:$0xf]
        %v1423 = vld [vmem:[%s1414 + $0x20] sm:$0xf]
        %v1424 = vld [vmem:[%s1414 + $0x24] sm:$0xf]
        %v1425 = vld [vmem:[%s1414 + $0x28] sm:$0xf]
        %v1426 = vld [vmem:[%s1414 + $0x2c] sm:$0xf]
        %v1427 = vld [vmem:[%s1414 + $0x30] sm:$0xf]
        %v1428 = vld [vmem:[%s1414 + $0x34] sm:$0xf]
        %v1429 = vld [vmem:[%s1414 + $0x38] sm:$0xf]
        %v1430 = vld [vmem:[%s1414 + $0x3c] sm:$0xf]
        %v1447 = vunpack.c.l.b16 %v1415
        %v1448 = vunpack.c.l.b16 %v1416
        %v1449 = vunpack.c.l.b16 %v1417
        %v1450 = vunpack.c.l.b16 %v1418
        %v1451 = vunpack.c.l.b16 %v1419
        %v1452 = vunpack.c.l.b16 %v1420
        %v1453 = vunpack.c.l.b16 %v1421
        %v1454 = vunpack.c.l.b16 %v1422
        %v1455 = vunpack.c.l.b16 %v1423
        %v1456 = vunpack.c.l.b16 %v1424
        %v1457 = vunpack.c.l.b16 %v1425
        %v1458 = vunpack.c.l.b16 %v1426
        %v1459 = vunpack.c.l.b16 %v1427
        %v1460 = vunpack.c.l.b16 %v1428
        %v1461 = vunpack.c.l.b16 %v1429
        %v1462 = vunpack.c.l.b16 %v1430
        %v1463 = vpack.c.b16 %v1448, %v1447
        %v1464 = vpack.c.b16 %v1450, %v1449
        %v1465 = vpack.c.b16 %v1452, %v1451
        %v1466 = vpack.c.b16 %v1454, %v1453
        %v1467 = vpack.c.b16 %v1456, %v1455
        %v1468 = vpack.c.b16 %v1458, %v1457
        %v1469 = vpack.c.b16 %v1460, %v1459
        %v1470 = vpack.c.b16 %v1462, %v1461
        %1479 = vmatprep.subr.bf16.mxu0 0
        %1480 = vmatpush1.bf16.msra.mxu0 %v1463
        %1481 = vmatprep.subr.bf16.mxu0 0
        %1482 = vmatpush1.bf16.msra.mxu0 %v1464
        %1483 = vmatprep.subr.bf16.mxu0 0
        %1484 = vmatpush1.bf16.msra.mxu0 %v1465
        %1485 = vmatprep.subr.bf16.mxu0 0
        %1486 = vmatpush1.bf16.msra.mxu0 %v1466
        %1487 = vmatprep.subr.bf16.mxu0 0
        %1488 = vmatpush1.bf16.msra.mxu0 %v1467
        %1489 = vmatprep.subr.bf16.mxu0 0
        %1490 = vmatpush1.bf16.msra.mxu0 %v1468
        %1491 = vmatprep.subr.bf16.mxu0 0
        %1492 = vmatpush1.bf16.msra.mxu0 %v1469
        %1493 = vmatprep.subr.bf16.mxu0 0
        %1494 = vmatpush1.bf16.msra.mxu0 %v1470
        %1495 = vmatprep.subr.bf16.mxu0 0
        %1496 = vmatpush1.bf16.msra.mxu0 0
        %1497 = vmatprep.subr.bf16.mxu0 0
        %1498 = vmatpush1.bf16.msra.mxu0 0
        %1499 = vmatprep.subr.bf16.mxu0 0
        %1500 = vmatpush1.bf16.msra.mxu0 0
        %1501 = vmatprep.subr.bf16.mxu0 0
        %1502 = vmatpush1.bf16.msra.mxu0 0
        %1503 = vmatprep.subr.bf16.mxu0 0
        %1504 = vmatpush1.bf16.msra.mxu0 0
        %1505 = vmatprep.subr.bf16.mxu0 0
        %1506 = vmatpush1.bf16.msra.mxu0 0
        %1507 = vmatprep.subr.bf16.mxu0 0
        %1508 = vmatpush1.bf16.msra.mxu0 0
        %1509 = vmatprep.subr.bf16.mxu0 0
        %1510 = vmatpush1.bf16.msra.mxu0 0
        %1511 = vmatprep.mubr.bf16.mxu0 0
        %1512 = vmatmul.mubr.bf16.gmra.mrb[0].mxu0 %v1413
        %v1513 = vpop.f32.mrb[0].mxu0
        %v1514 = vadd.f32 %v1215, %v1513
        %v1515 = vpop.f32.mrb[0].mxu0
        %v1516 = vpop.f32.mrb[0].mxu0
        %v1517 = vpop.f32.mrb[0].mxu0
        %1518 = vdwg.mxu0
        %v1519 = vlaneseq
        %v1520 = vshrl.u32 %v1519, 7
        %v1521 = vsub.s32 1, %v1520
        %v1522 = vrot.slane %v346, %v1521
        %v1523 = vmul.f32 %v1514, %v1522
        %1524 = vadd.xlane.f32.xlu0 %v1523
        %v1525 = vpop.xlane.xlu0 %1524
        %v1526 = vmul.f32 %v1218, %v1525
        %v1527 = vsub.f32 %v1514, %v1526
        %v1528 = vmul.f32 %v1527, %v1527
        %v1529 = vmul.f32 %v1528, %v1522
        %1530 = vadd.xlane.f32.xlu0 %v1529
        %v1531 = vpop.xlane.xlu0 %1530
        %v1532 = vadd.f32 %v1531, 1e-05
        %v1533 = vrsqrt.pop %v1532
        %v1534 = vmul.f32 %v1527, %v1533
        %v1535 = vmul.f32 %v1216, %v1534
        %v1536 = vadd.f32 %v1535, %v1217
        %vm1537 = vcmp.gt.f32.partialorder %v1536, 0.0
        %v1538 = vmul.f32 %v1536, 0.01
        %v1539 = vsel %vm1537, %v1536, %v1538
        %v1540 = vmul.f32 %v1539, %v1219
        %v1541 = vrot.slane %v1540, 4
        %v1542 = vadd.f32 %v1540, %v1541
        %v1543 = vrot.slane %v1542, 2
        %v1544 = vadd.f32 %v1542, %v1543
        %v1545 = vrot.slane %v1544, 1
        %v1546 = vadd.f32 %v1544, %v1545
        %v1547 = vadd.f32 %v1546, %v1389
        %v1548 = vrot.slane %v969, 2
        %v1550 = vrot.slane %v1004, 1
        %v1552 = vrot.slane %v1074, 7
        %v1554 = vrot.slane %v1109, 6
        %v1556 = vrot.slane %v1144, 5
        %v1558 = vrot.slane %v1179, 4
        %v1560 = vrot.slane %v1214, 3
        %v1562 = vsel %vm1242, %v1548, %v1550
        %v1563 = vsel %vm1244, %v1562, %v1039
        %v1564 = vsel %vm1246, %v1563, %v1552
        %v1565 = vsel %vm1248, %v1564, %v1554
        %v1566 = vsel %vm1250, %v1565, %v1556
        %v1567 = vsel %vm1252, %v1566, %v1558
        %v1568 = vsel %vm1254, %v1567, %v1560
        %v1569 = vpack.c.bf16 %v1568, %v1568
        %s1570 = scalar_lea.vmem %s293, 128 [#allocation7]
        %v1571 = vld [vmem:[%s1570] sm:$0xf]
        %v1572 = vld [vmem:[%s1570 + $0x4] sm:$0xf]
        %v1573 = vld [vmem:[%s1570 + $0x8] sm:$0xf]
        %v1574 = vld [vmem:[%s1570 + $0xc] sm:$0xf]
        %v1575 = vld [vmem:[%s1570 + $0x10] sm:$0xf]
        %v1576 = vld [vmem:[%s1570 + $0x14] sm:$0xf]
        %v1577 = vld [vmem:[%s1570 + $0x18] sm:$0xf]
        %v1578 = vld [vmem:[%s1570 + $0x1c] sm:$0xf]
        %v1579 = vld [vmem:[%s1570 + $0x20] sm:$0xf]
        %v1580 = vld [vmem:[%s1570 + $0x24] sm:$0xf]
        %v1581 = vld [vmem:[%s1570 + $0x28] sm:$0xf]
        %v1582 = vld [vmem:[%s1570 + $0x2c] sm:$0xf]
        %v1583 = vld [vmem:[%s1570 + $0x30] sm:$0xf]
        %v1584 = vld [vmem:[%s1570 + $0x34] sm:$0xf]
        %v1585 = vld [vmem:[%s1570 + $0x38] sm:$0xf]
        %v1586 = vld [vmem:[%s1570 + $0x3c] sm:$0xf]
        %v1603 = vunpack.c.l.b16 %v1571
        %v1604 = vunpack.c.l.b16 %v1572
        %v1605 = vunpack.c.l.b16 %v1573
        %v1606 = vunpack.c.l.b16 %v1574
        %v1607 = vunpack.c.l.b16 %v1575
        %v1608 = vunpack.c.l.b16 %v1576
        %v1609 = vunpack.c.l.b16 %v1577
        %v1610 = vunpack.c.l.b16 %v1578
        %v1611 = vunpack.c.l.b16 %v1579
        %v1612 = vunpack.c.l.b16 %v1580
        %v1613 = vunpack.c.l.b16 %v1581
        %v1614 = vunpack.c.l.b16 %v1582
        %v1615 = vunpack.c.l.b16 %v1583
        %v1616 = vunpack.c.l.b16 %v1584
        %v1617 = vunpack.c.l.b16 %v1585
        %v1618 = vunpack.c.l.b16 %v1586
        %v1619 = vpack.c.b16 %v1604, %v1603
        %v1620 = vpack.c.b16 %v1606, %v1605
        %v1621 = vpack.c.b16 %v1608, %v1607
        %v1622 = vpack.c.b16 %v1610, %v1609
        %v1623 = vpack.c.b16 %v1612, %v1611
        %v1624 = vpack.c.b16 %v1614, %v1613
        %v1625 = vpack.c.b16 %v1616, %v1615
        %v1626 = vpack.c.b16 %v1618, %v1617
        %1635 = vmatprep.subr.bf16.mxu0 0
        %1636 = vmatpush1.bf16.msra.mxu0 %v1619
        %1637 = vmatprep.subr.bf16.mxu0 0
        %1638 = vmatpush1.bf16.msra.mxu0 %v1620
        %1639 = vmatprep.subr.bf16.mxu0 0
        %1640 = vmatpush1.bf16.msra.mxu0 %v1621
        %1641 = vmatprep.subr.bf16.mxu0 0
        %1642 = vmatpush1.bf16.msra.mxu0 %v1622
        %1643 = vmatprep.subr.bf16.mxu0 0
        %1644 = vmatpush1.bf16.msra.mxu0 %v1623
        %1645 = vmatprep.subr.bf16.mxu0 0
        %1646 = vmatpush1.bf16.msra.mxu0 %v1624
        %1647 = vmatprep.subr.bf16.mxu0 0
        %1648 = vmatpush1.bf16.msra.mxu0 %v1625
        %1649 = vmatprep.subr.bf16.mxu0 0
        %1650 = vmatpush1.bf16.msra.mxu0 %v1626
        %1651 = vmatprep.subr.bf16.mxu0 0
        %1652 = vmatpush1.bf16.msra.mxu0 0
        %1653 = vmatprep.subr.bf16.mxu0 0
        %1654 = vmatpush1.bf16.msra.mxu0 0
        %1655 = vmatprep.subr.bf16.mxu0 0
        %1656 = vmatpush1.bf16.msra.mxu0 0
        %1657 = vmatprep.subr.bf16.mxu0 0
        %1658 = vmatpush1.bf16.msra.mxu0 0
        %1659 = vmatprep.subr.bf16.mxu0 0
        %1660 = vmatpush1.bf16.msra.mxu0 0
        %1661 = vmatprep.subr.bf16.mxu0 0
        %1662 = vmatpush1.bf16.msra.mxu0 0
        %1663 = vmatprep.subr.bf16.mxu0 0
        %1664 = vmatpush1.bf16.msra.mxu0 0
        %1665 = vmatprep.subr.bf16.mxu0 0
        %1666 = vmatpush1.bf16.msra.mxu0 0
        %1667 = vmatprep.mubr.bf16.mxu0 0
        %1668 = vmatmul.mubr.bf16.gmra.mrb[0].mxu0 %v1569
        %v1669 = vpop.f32.mrb[0].mxu0
        %v1670 = vadd.f32 %v1215, %v1669
        %v1671 = vpop.f32.mrb[0].mxu0
        %v1672 = vpop.f32.mrb[0].mxu0
        %v1673 = vpop.f32.mrb[0].mxu0
        %1674 = vdwg.mxu0
        %v1675 = vlaneseq
        %v1676 = vshrl.u32 %v1675, 7
        %v1677 = vsub.s32 2, %v1676
        %v1678 = vrot.slane %v346, %v1677
        %v1679 = vmul.f32 %v1670, %v1678
        %1680 = vadd.xlane.f32.xlu0 %v1679
        %v1681 = vpop.xlane.xlu0 %1680
        %v1682 = vmul.f32 %v1218, %v1681
        %v1683 = vsub.f32 %v1670, %v1682
        %v1684 = vmul.f32 %v1683, %v1683
        %v1685 = vmul.f32 %v1684, %v1678
        %1686 = vadd.xlane.f32.xlu0 %v1685
        %v1687 = vpop.xlane.xlu0 %1686
        %v1688 = vadd.f32 %v1687, 1e-05
        %v1689 = vrsqrt.pop %v1688
        %v1690 = vmul.f32 %v1683, %v1689
        %v1691 = vmul.f32 %v1216, %v1690
        %v1692 = vadd.f32 %v1691, %v1217
        %vm1693 = vcmp.gt.f32.partialorder %v1692, 0.0
        %v1694 = vmul.f32 %v1692, 0.01
        %v1695 = vsel %vm1693, %v1692, %v1694
        %v1696 = vmul.f32 %v1695, %v1219
        %v1697 = vrot.slane %v1696, 4
        %v1698 = vadd.f32 %v1696, %v1697
        %v1699 = vrot.slane %v1698, 2
        %v1700 = vadd.f32 %v1698, %v1699
        %v1701 = vrot.slane %v1700, 1
        %v1702 = vadd.f32 %v1700, %v1701
        %v1703 = vadd.f32 %v1702, %v1389
        %v1704 = vrot.slane %v969, 3
        %v1706 = vrot.slane %v1004, 2
        %v1708 = vrot.slane %v1039, 1
        %v1710 = vrot.slane %v1109, 7
        %v1712 = vrot.slane %v1144, 6
        %v1714 = vrot.slane %v1179, 5
        %v1716 = vrot.slane %v1214, 4
        %v1718 = vsel %vm1242, %v1704, %v1706
        %v1719 = vsel %vm1244, %v1718, %v1708
        %v1720 = vsel %vm1246, %v1719, %v1074
        %v1721 = vsel %vm1248, %v1720, %v1710
        %v1722 = vsel %vm1250, %v1721, %v1712
        %v1723 = vsel %vm1252, %v1722, %v1714
        %v1724 = vsel %vm1254, %v1723, %v1716
        %v1725 = vpack.c.bf16 %v1724, %v1724
        %s1726 = scalar_lea.vmem %s293, 192 [#allocation7]
        %v1727 = vld [vmem:[%s1726] sm:$0xf]
        %v1728 = vld [vmem:[%s1726 + $0x4] sm:$0xf]
        %v1729 = vld [vmem:[%s1726 + $0x8] sm:$0xf]
        %v1730 = vld [vmem:[%s1726 + $0xc] sm:$0xf]
        %v1731 = vld [vmem:[%s1726 + $0x10] sm:$0xf]
        %v1732 = vld [vmem:[%s1726 + $0x14] sm:$0xf]
        %v1733 = vld [vmem:[%s1726 + $0x18] sm:$0xf]
        %v1734 = vld [vmem:[%s1726 + $0x1c] sm:$0xf]
        %v1735 = vld [vmem:[%s1726 + $0x20] sm:$0xf]
        %v1736 = vld [vmem:[%s1726 + $0x24] sm:$0xf]
        %v1737 = vld [vmem:[%s1726 + $0x28] sm:$0xf]
        %v1738 = vld [vmem:[%s1726 + $0x2c] sm:$0xf]
        %v1739 = vld [vmem:[%s1726 + $0x30] sm:$0xf]
        %v1740 = vld [vmem:[%s1726 + $0x34] sm:$0xf]
        %v1741 = vld [vmem:[%s1726 + $0x38] sm:$0xf]
        %v1742 = vld [vmem:[%s1726 + $0x3c] sm:$0xf]
        %v1759 = vunpack.c.l.b16 %v1727
        %v1760 = vunpack.c.l.b16 %v1728
        %v1761 = vunpack.c.l.b16 %v1729
        %v1762 = vunpack.c.l.b16 %v1730
        %v1763 = vunpack.c.l.b16 %v1731
        %v1764 = vunpack.c.l.b16 %v1732
        %v1765 = vunpack.c.l.b16 %v1733
        %v1766 = vunpack.c.l.b16 %v1734
        %v1767 = vunpack.c.l.b16 %v1735
        %v1768 = vunpack.c.l.b16 %v1736
        %v1769 = vunpack.c.l.b16 %v1737
        %v1770 = vunpack.c.l.b16 %v1738
        %v1771 = vunpack.c.l.b16 %v1739
        %v1772 = vunpack.c.l.b16 %v1740
        %v1773 = vunpack.c.l.b16 %v1741
        %v1774 = vunpack.c.l.b16 %v1742
        %v1775 = vpack.c.b16 %v1760, %v1759
        %v1776 = vpack.c.b16 %v1762, %v1761
        %v1777 = vpack.c.b16 %v1764, %v1763
        %v1778 = vpack.c.b16 %v1766, %v1765
        %v1779 = vpack.c.b16 %v1768, %v1767
        %v1780 = vpack.c.b16 %v1770, %v1769
        %v1781 = vpack.c.b16 %v1772, %v1771
        %v1782 = vpack.c.b16 %v1774, %v1773
        %1791 = vmatprep.subr.bf16.mxu0 0
        %1792 = vmatpush1.bf16.msra.mxu0 %v1775
        %1793 = vmatprep.subr.bf16.mxu0 0
        %1794 = vmatpush1.bf16.msra.mxu0 %v1776
        %1795 = vmatprep.subr.bf16.mxu0 0
        %1796 = vmatpush1.bf16.msra.mxu0 %v1777
        %1797 = vmatprep.subr.bf16.mxu0 0
        %1798 = vmatpush1.bf16.msra.mxu0 %v1778
        %1799 = vmatprep.subr.bf16.mxu0 0
        %1800 = vmatpush1.bf16.msra.mxu0 %v1779
        %1801 = vmatprep.subr.bf16.mxu0 0
        %1802 = vmatpush1.bf16.msra.mxu0 %v1780
        %1803 = vmatprep.subr.bf16.mxu0 0
        %1804 = vmatpush1.bf16.msra.mxu0 %v1781
        %1805 = vmatprep.subr.bf16.mxu0 0
        %1806 = vmatpush1.bf16.msra.mxu0 %v1782
        %1807 = vmatprep.subr.bf16.mxu0 0
        %1808 = vmatpush1.bf16.msra.mxu0 0
        %1809 = vmatprep.subr.bf16.mxu0 0
        %1810 = vmatpush1.bf16.msra.mxu0 0
        %1811 = vmatprep.subr.bf16.mxu0 0
        %1812 = vmatpush1.bf16.msra.mxu0 0
        %1813 = vmatprep.subr.bf16.mxu0 0
        %1814 = vmatpush1.bf16.msra.mxu0 0
        %1815 = vmatprep.subr.bf16.mxu0 0
        %1816 = vmatpush1.bf16.msra.mxu0 0
        %1817 = vmatprep.subr.bf16.mxu0 0
        %1818 = vmatpush1.bf16.msra.mxu0 0
        %1819 = vmatprep.subr.bf16.mxu0 0
        %1820 = vmatpush1.bf16.msra.mxu0 0
        %1821 = vmatprep.subr.bf16.mxu0 0
        %1822 = vmatpush1.bf16.msra.mxu0 0
        %1823 = vmatprep.mubr.bf16.mxu0 0
        %1824 = vmatmul.mubr.bf16.gmra.mrb[0].mxu0 %v1725
        %v1825 = vpop.f32.mrb[0].mxu0
        %v1826 = vadd.f32 %v1215, %v1825
        %v1827 = vpop.f32.mrb[0].mxu0
        %v1828 = vpop.f32.mrb[0].mxu0
        %v1829 = vpop.f32.mrb[0].mxu0
        %1830 = vdwg.mxu0
        %v1831 = vlaneseq
        %v1832 = vshrl.u32 %v1831, 7
        %v1833 = vsub.s32 3, %v1832
        %v1834 = vrot.slane %v346, %v1833
        %v1835 = vmul.f32 %v1826, %v1834
        %1836 = vadd.xlane.f32.xlu0 %v1835
        %v1837 = vpop.xlane.xlu0 %1836
        %v1838 = vmul.f32 %v1218, %v1837
        %v1839 = vsub.f32 %v1826, %v1838
        %v1840 = vmul.f32 %v1839, %v1839
        %v1841 = vmul.f32 %v1840, %v1834
        %1842 = vadd.xlane.f32.xlu0 %v1841
        %v1843 = vpop.xlane.xlu0 %1842
        %v1844 = vadd.f32 %v1843, 1e-05
        %v1845 = vrsqrt.pop %v1844
        %v1846 = vmul.f32 %v1839, %v1845
        %v1847 = vmul.f32 %v1216, %v1846
        %v1848 = vadd.f32 %v1847, %v1217
        %vm1849 = vcmp.gt.f32.partialorder %v1848, 0.0
        %v1850 = vmul.f32 %v1848, 0.01
        %v1851 = vsel %vm1849, %v1848, %v1850
        %v1852 = vmul.f32 %v1851, %v1219
        %v1853 = vrot.slane %v1852, 4
        %v1854 = vadd.f32 %v1852, %v1853
        %v1855 = vrot.slane %v1854, 2
        %v1856 = vadd.f32 %v1854, %v1855
        %v1857 = vrot.slane %v1856, 1
        %v1858 = vadd.f32 %v1856, %v1857
        %v1859 = vadd.f32 %v1858, %v1389
        %v1860 = vrot.slane %v969, 4
        %v1862 = vrot.slane %v1004, 3
        %v1864 = vrot.slane %v1039, 2
        %v1866 = vrot.slane %v1074, 1
        %v1868 = vrot.slane %v1144, 7
        %v1870 = vrot.slane %v1179, 6
        %v1872 = vrot.slane %v1214, 5
        %v1874 = vsel %vm1242, %v1860, %v1862
        %v1875 = vsel %vm1244, %v1874, %v1864
        %v1876 = vsel %vm1246, %v1875, %v1866
        %v1877 = vsel %vm1248, %v1876, %v1109
        %v1878 = vsel %vm1250, %v1877, %v1868
        %v1879 = vsel %vm1252, %v1878, %v1870
        %v1880 = vsel %vm1254, %v1879, %v1872
        %v1881 = vpack.c.bf16 %v1880, %v1880
        %s1882 = scalar_lea.vmem %s293, 256 [#allocation7]
        %v1883 = vld [vmem:[%s1882] sm:$0xf]
        %v1884 = vld [vmem:[%s1882 + $0x4] sm:$0xf]
        %v1885 = vld [vmem:[%s1882 + $0x8] sm:$0xf]
        %v1886 = vld [vmem:[%s1882 + $0xc] sm:$0xf]
        %v1887 = vld [vmem:[%s1882 + $0x10] sm:$0xf]
        %v1888 = vld [vmem:[%s1882 + $0x14] sm:$0xf]
        %v1889 = vld [vmem:[%s1882 + $0x18] sm:$0xf]
        %v1890 = vld [vmem:[%s1882 + $0x1c] sm:$0xf]
        %v1891 = vld [vmem:[%s1882 + $0x20] sm:$0xf]
        %v1892 = vld [vmem:[%s1882 + $0x24] sm:$0xf]
        %v1893 = vld [vmem:[%s1882 + $0x28] sm:$0xf]
        %v1894 = vld [vmem:[%s1882 + $0x2c] sm:$0xf]
        %v1895 = vld [vmem:[%s1882 + $0x30] sm:$0xf]
        %v1896 = vld [vmem:[%s1882 + $0x34] sm:$0xf]
        %v1897 = vld [vmem:[%s1882 + $0x38] sm:$0xf]
        %v1898 = vld [vmem:[%s1882 + $0x3c] sm:$0xf]
        %v1915 = vunpack.c.l.b16 %v1883
        %v1916 = vunpack.c.l.b16 %v1884
        %v1917 = vunpack.c.l.b16 %v1885
        %v1918 = vunpack.c.l.b16 %v1886
        %v1919 = vunpack.c.l.b16 %v1887
        %v1920 = vunpack.c.l.b16 %v1888
        %v1921 = vunpack.c.l.b16 %v1889
        %v1922 = vunpack.c.l.b16 %v1890
        %v1923 = vunpack.c.l.b16 %v1891
        %v1924 = vunpack.c.l.b16 %v1892
        %v1925 = vunpack.c.l.b16 %v1893
        %v1926 = vunpack.c.l.b16 %v1894
        %v1927 = vunpack.c.l.b16 %v1895
        %v1928 = vunpack.c.l.b16 %v1896
        %v1929 = vunpack.c.l.b16 %v1897
        %v1930 = vunpack.c.l.b16 %v1898
        %v1931 = vpack.c.b16 %v1916, %v1915
        %v1932 = vpack.c.b16 %v1918, %v1917
        %v1933 = vpack.c.b16 %v1920, %v1919
        %v1934 = vpack.c.b16 %v1922, %v1921
        %v1935 = vpack.c.b16 %v1924, %v1923
        %v1936 = vpack.c.b16 %v1926, %v1925
        %v1937 = vpack.c.b16 %v1928, %v1927
        %v1938 = vpack.c.b16 %v1930, %v1929
        %1947 = vmatprep.subr.bf16.mxu0 0
        %1948 = vmatpush1.bf16.msra.mxu0 %v1931
        %1949 = vmatprep.subr.bf16.mxu0 0
        %1950 = vmatpush1.bf16.msra.mxu0 %v1932
        %1951 = vmatprep.subr.bf16.mxu0 0
        %1952 = vmatpush1.bf16.msra.mxu0 %v1933
        %1953 = vmatprep.subr.bf16.mxu0 0
        %1954 = vmatpush1.bf16.msra.mxu0 %v1934
        %1955 = vmatprep.subr.bf16.mxu0 0
        %1956 = vmatpush1.bf16.msra.mxu0 %v1935
        %1957 = vmatprep.subr.bf16.mxu0 0
        %1958 = vmatpush1.bf16.msra.mxu0 %v1936
        %1959 = vmatprep.subr.bf16.mxu0 0
        %1960 = vmatpush1.bf16.msra.mxu0 %v1937
        %1961 = vmatprep.subr.bf16.mxu0 0
        %1962 = vmatpush1.bf16.msra.mxu0 %v1938
        %1963 = vmatprep.subr.bf16.mxu0 0
        %1964 = vmatpush1.bf16.msra.mxu0 0
        %1965 = vmatprep.subr.bf16.mxu0 0
        %1966 = vmatpush1.bf16.msra.mxu0 0
        %1967 = vmatprep.subr.bf16.mxu0 0
        %1968 = vmatpush1.bf16.msra.mxu0 0
        %1969 = vmatprep.subr.bf16.mxu0 0
        %1970 = vmatpush1.bf16.msra.mxu0 0
        %1971 = vmatprep.subr.bf16.mxu0 0
        %1972 = vmatpush1.bf16.msra.mxu0 0
        %1973 = vmatprep.subr.bf16.mxu0 0
        %1974 = vmatpush1.bf16.msra.mxu0 0
        %1975 = vmatprep.subr.bf16.mxu0 0
        %1976 = vmatpush1.bf16.msra.mxu0 0
        %1977 = vmatprep.subr.bf16.mxu0 0
        %1978 = vmatpush1.bf16.msra.mxu0 0
        %1979 = vmatprep.mubr.bf16.mxu0 0
        %1980 = vmatmul.mubr.bf16.gmra.mrb[0].mxu0 %v1881
        %v1981 = vpop.f32.mrb[0].mxu0
        %v1982 = vadd.f32 %v1215, %v1981
        %v1983 = vpop.f32.mrb[0].mxu0
        %v1984 = vpop.f32.mrb[0].mxu0
        %v1985 = vpop.f32.mrb[0].mxu0
        %1986 = vdwg.mxu0
        %v1987 = vlaneseq
        %v1988 = vshrl.u32 %v1987, 7
        %v1989 = vsub.s32 4, %v1988
        %v1990 = vrot.slane %v346, %v1989
        %v1991 = vmul.f32 %v1982, %v1990
        %1992 = vadd.xlane.f32.xlu0 %v1991
        %v1993 = vpop.xlane.xlu0 %1992
        %v1994 = vmul.f32 %v1218, %v1993
        %v1995 = vsub.f32 %v1982, %v1994
        %v1996 = vmul.f32 %v1995, %v1995
        %v1997 = vmul.f32 %v1996, %v1990
        %1998 = vadd.xlane.f32.xlu0 %v1997
        %v1999 = vpop.xlane.xlu0 %1998
        %v2000 = vadd.f32 %v1999, 1e-05
        %v2001 = vrsqrt.pop %v2000
        %v2002 = vmul.f32 %v1995, %v2001
        %v2003 = vmul.f32 %v1216, %v2002
        %v2004 = vadd.f32 %v2003, %v1217
        %vm2005 = vcmp.gt.f32.partialorder %v2004, 0.0
        %v2006 = vmul.f32 %v2004, 0.01
        %v2007 = vsel %vm2005, %v2004, %v2006
        %v2008 = vmul.f32 %v2007, %v1219
        %v2009 = vrot.slane %v2008, 4
        %v2010 = vadd.f32 %v2008, %v2009
        %v2011 = vrot.slane %v2010, 2
        %v2012 = vadd.f32 %v2010, %v2011
        %v2013 = vrot.slane %v2012, 1
        %v2014 = vadd.f32 %v2012, %v2013
        %v2015 = vadd.f32 %v2014, %v1389
        %v2016 = vrot.slane %v969, 5
        %v2018 = vrot.slane %v1004, 4
        %v2020 = vrot.slane %v1039, 3
        %v2022 = vrot.slane %v1074, 2
        %v2024 = vrot.slane %v1109, 1
        %v2026 = vrot.slane %v1179, 7
        %v2028 = vrot.slane %v1214, 6
        %v2030 = vsel %vm1242, %v2016, %v2018
        %v2031 = vsel %vm1244, %v2030, %v2020
        %v2032 = vsel %vm1246, %v2031, %v2022
        %v2033 = vsel %vm1248, %v2032, %v2024
        %v2034 = vsel %vm1250, %v2033, %v1144
        %v2035 = vsel %vm1252, %v2034, %v2026
        %v2036 = vsel %vm1254, %v2035, %v2028
        %v2037 = vpack.c.bf16 %v2036, %v2036
        %s2038 = scalar_lea.vmem %s293, 320 [#allocation7]
        %v2039 = vld [vmem:[%s2038] sm:$0xf]
        %v2040 = vld [vmem:[%s2038 + $0x4] sm:$0xf]
        %v2041 = vld [vmem:[%s2038 + $0x8] sm:$0xf]
        %v2042 = vld [vmem:[%s2038 + $0xc] sm:$0xf]
        %v2043 = vld [vmem:[%s2038 + $0x10] sm:$0xf]
        %v2044 = vld [vmem:[%s2038 + $0x14] sm:$0xf]
        %v2045 = vld [vmem:[%s2038 + $0x18] sm:$0xf]
        %v2046 = vld [vmem:[%s2038 + $0x1c] sm:$0xf]
        %v2047 = vld [vmem:[%s2038 + $0x20] sm:$0xf]
        %v2048 = vld [vmem:[%s2038 + $0x24] sm:$0xf]
        %v2049 = vld [vmem:[%s2038 + $0x28] sm:$0xf]
        %v2050 = vld [vmem:[%s2038 + $0x2c] sm:$0xf]
        %v2051 = vld [vmem:[%s2038 + $0x30] sm:$0xf]
        %v2052 = vld [vmem:[%s2038 + $0x34] sm:$0xf]
        %v2053 = vld [vmem:[%s2038 + $0x38] sm:$0xf]
        %v2054 = vld [vmem:[%s2038 + $0x3c] sm:$0xf]
        %v2071 = vunpack.c.l.b16 %v2039
        %v2072 = vunpack.c.l.b16 %v2040
        %v2073 = vunpack.c.l.b16 %v2041
        %v2074 = vunpack.c.l.b16 %v2042
        %v2075 = vunpack.c.l.b16 %v2043
        %v2076 = vunpack.c.l.b16 %v2044
        %v2077 = vunpack.c.l.b16 %v2045
        %v2078 = vunpack.c.l.b16 %v2046
        %v2079 = vunpack.c.l.b16 %v2047
        %v2080 = vunpack.c.l.b16 %v2048
        %v2081 = vunpack.c.l.b16 %v2049
        %v2082 = vunpack.c.l.b16 %v2050
        %v2083 = vunpack.c.l.b16 %v2051
        %v2084 = vunpack.c.l.b16 %v2052
        %v2085 = vunpack.c.l.b16 %v2053
        %v2086 = vunpack.c.l.b16 %v2054
        %v2087 = vpack.c.b16 %v2072, %v2071
        %v2088 = vpack.c.b16 %v2074, %v2073
        %v2089 = vpack.c.b16 %v2076, %v2075
        %v2090 = vpack.c.b16 %v2078, %v2077
        %v2091 = vpack.c.b16 %v2080, %v2079
        %v2092 = vpack.c.b16 %v2082, %v2081
        %v2093 = vpack.c.b16 %v2084, %v2083
        %v2094 = vpack.c.b16 %v2086, %v2085
        %2103 = vmatprep.subr.bf16.mxu0 0
        %2104 = vmatpush1.bf16.msra.mxu0 %v2087
        %2105 = vmatprep.subr.bf16.mxu0 0
        %2106 = vmatpush1.bf16.msra.mxu0 %v2088
        %2107 = vmatprep.subr.bf16.mxu0 0
        %2108 = vmatpush1.bf16.msra.mxu0 %v2089
        %2109 = vmatprep.subr.bf16.mxu0 0
        %2110 = vmatpush1.bf16.msra.mxu0 %v2090
        %2111 = vmatprep.subr.bf16.mxu0 0
        %2112 = vmatpush1.bf16.msra.mxu0 %v2091
        %2113 = vmatprep.subr.bf16.mxu0 0
        %2114 = vmatpush1.bf16.msra.mxu0 %v2092
        %2115 = vmatprep.subr.bf16.mxu0 0
        %2116 = vmatpush1.bf16.msra.mxu0 %v2093
        %2117 = vmatprep.subr.bf16.mxu0 0
        %2118 = vmatpush1.bf16.msra.mxu0 %v2094
        %2119 = vmatprep.subr.bf16.mxu0 0
        %2120 = vmatpush1.bf16.msra.mxu0 0
        %2121 = vmatprep.subr.bf16.mxu0 0
        %2122 = vmatpush1.bf16.msra.mxu0 0
        %2123 = vmatprep.subr.bf16.mxu0 0
        %2124 = vmatpush1.bf16.msra.mxu0 0
        %2125 = vmatprep.subr.bf16.mxu0 0
        %2126 = vmatpush1.bf16.msra.mxu0 0
        %2127 = vmatprep.subr.bf16.mxu0 0
        %2128 = vmatpush1.bf16.msra.mxu0 0
        %2129 = vmatprep.subr.bf16.mxu0 0
        %2130 = vmatpush1.bf16.msra.mxu0 0
        %2131 = vmatprep.subr.bf16.mxu0 0
        %2132 = vmatpush1.bf16.msra.mxu0 0
        %2133 = vmatprep.subr.bf16.mxu0 0
        %2134 = vmatpush1.bf16.msra.mxu0 0
        %2135 = vmatprep.mubr.bf16.mxu0 0
        %2136 = vmatmul.mubr.bf16.gmra.mrb[0].mxu0 %v2037
        %v2137 = vpop.f32.mrb[0].mxu0
        %v2138 = vadd.f32 %v1215, %v2137
        %v2139 = vpop.f32.mrb[0].mxu0
        %v2140 = vpop.f32.mrb[0].mxu0
        %v2141 = vpop.f32.mrb[0].mxu0
        %2142 = vdwg.mxu0
        %v2143 = vlaneseq
        %v2144 = vshrl.u32 %v2143, 7
        %v2145 = vsub.s32 5, %v2144
        %v2146 = vrot.slane %v346, %v2145
        %v2147 = vmul.f32 %v2138, %v2146
        %2148 = vadd.xlane.f32.xlu0 %v2147
        %v2149 = vpop.xlane.xlu0 %2148
        %v2150 = vmul.f32 %v1218, %v2149
        %v2151 = vsub.f32 %v2138, %v2150
        %v2152 = vmul.f32 %v2151, %v2151
        %v2153 = vmul.f32 %v2152, %v2146
        %2154 = vadd.xlane.f32.xlu0 %v2153
        %v2155 = vpop.xlane.xlu0 %2154
        %v2156 = vadd.f32 %v2155, 1e-05
        %v2157 = vrsqrt.pop %v2156
        %v2158 = vmul.f32 %v2151, %v2157
        %v2159 = vmul.f32 %v1216, %v2158
        %v2160 = vadd.f32 %v2159, %v1217
        %vm2161 = vcmp.gt.f32.partialorder %v2160, 0.0
        %v2162 = vmul.f32 %v2160, 0.01
        %v2163 = vsel %vm2161, %v2160, %v2162
        %v2164 = vmul.f32 %v2163, %v1219
        %v2165 = vrot.slane %v2164, 4
        %v2166 = vadd.f32 %v2164, %v2165
        %v2167 = vrot.slane %v2166, 2
        %v2168 = vadd.f32 %v2166, %v2167
        %v2169 = vrot.slane %v2168, 1
        %v2170 = vadd.f32 %v2168, %v2169
        %v2171 = vadd.f32 %v2170, %v1389
        %v2172 = vrot.slane %v969, 6
        %v2174 = vrot.slane %v1004, 5
        %v2176 = vrot.slane %v1039, 4
        %v2178 = vrot.slane %v1074, 3
        %v2180 = vrot.slane %v1109, 2
        %v2182 = vrot.slane %v1144, 1
        %v2184 = vrot.slane %v1214, 7
        %v2186 = vsel %vm1242, %v2172, %v2174
        %v2187 = vsel %vm1244, %v2186, %v2176
        %v2188 = vsel %vm1246, %v2187, %v2178
        %v2189 = vsel %vm1248, %v2188, %v2180
        %v2190 = vsel %vm1250, %v2189, %v2182
        %v2191 = vsel %vm1252, %v2190, %v1179
        %v2192 = vsel %vm1254, %v2191, %v2184
        %v2193 = vpack.c.bf16 %v2192, %v2192
        %s2194 = scalar_lea.vmem %s293, 384 [#allocation7]
        %v2195 = vld [vmem:[%s2194] sm:$0xf]
        %v2196 = vld [vmem:[%s2194 + $0x4] sm:$0xf]
        %v2197 = vld [vmem:[%s2194 + $0x8] sm:$0xf]
        %v2198 = vld [vmem:[%s2194 + $0xc] sm:$0xf]
        %v2199 = vld [vmem:[%s2194 + $0x10] sm:$0xf]
        %v2200 = vld [vmem:[%s2194 + $0x14] sm:$0xf]
        %v2201 = vld [vmem:[%s2194 + $0x18] sm:$0xf]
        %v2202 = vld [vmem:[%s2194 + $0x1c] sm:$0xf]
        %v2203 = vld [vmem:[%s2194 + $0x20] sm:$0xf]
        %v2204 = vld [vmem:[%s2194 + $0x24] sm:$0xf]
        %v2205 = vld [vmem:[%s2194 + $0x28] sm:$0xf]
        %v2206 = vld [vmem:[%s2194 + $0x2c] sm:$0xf]
        %v2207 = vld [vmem:[%s2194 + $0x30] sm:$0xf]
        %v2208 = vld [vmem:[%s2194 + $0x34] sm:$0xf]
        %v2209 = vld [vmem:[%s2194 + $0x38] sm:$0xf]
        %v2210 = vld [vmem:[%s2194 + $0x3c] sm:$0xf]
        %v2227 = vunpack.c.l.b16 %v2195
        %v2228 = vunpack.c.l.b16 %v2196
        %v2229 = vunpack.c.l.b16 %v2197
        %v2230 = vunpack.c.l.b16 %v2198
        %v2231 = vunpack.c.l.b16 %v2199
        %v2232 = vunpack.c.l.b16 %v2200
        %v2233 = vunpack.c.l.b16 %v2201
        %v2234 = vunpack.c.l.b16 %v2202
        %v2235 = vunpack.c.l.b16 %v2203
        %v2236 = vunpack.c.l.b16 %v2204
        %v2237 = vunpack.c.l.b16 %v2205
        %v2238 = vunpack.c.l.b16 %v2206
        %v2239 = vunpack.c.l.b16 %v2207
        %v2240 = vunpack.c.l.b16 %v2208
        %v2241 = vunpack.c.l.b16 %v2209
        %v2242 = vunpack.c.l.b16 %v2210
        %v2243 = vpack.c.b16 %v2228, %v2227
        %v2244 = vpack.c.b16 %v2230, %v2229
        %v2245 = vpack.c.b16 %v2232, %v2231
        %v2246 = vpack.c.b16 %v2234, %v2233
        %v2247 = vpack.c.b16 %v2236, %v2235
        %v2248 = vpack.c.b16 %v2238, %v2237
        %v2249 = vpack.c.b16 %v2240, %v2239
        %v2250 = vpack.c.b16 %v2242, %v2241
        %2259 = vmatprep.subr.bf16.mxu0 0
        %2260 = vmatpush1.bf16.msra.mxu0 %v2243
        %2261 = vmatprep.subr.bf16.mxu0 0
        %2262 = vmatpush1.bf16.msra.mxu0 %v2244
        %2263 = vmatprep.subr.bf16.mxu0 0
        %2264 = vmatpush1.bf16.msra.mxu0 %v2245
        %2265 = vmatprep.subr.bf16.mxu0 0
        %2266 = vmatpush1.bf16.msra.mxu0 %v2246
        %2267 = vmatprep.subr.bf16.mxu0 0
        %2268 = vmatpush1.bf16.msra.mxu0 %v2247
        %2269 = vmatprep.subr.bf16.mxu0 0
        %2270 = vmatpush1.bf16.msra.mxu0 %v2248
        %2271 = vmatprep.subr.bf16.mxu0 0
        %2272 = vmatpush1.bf16.msra.mxu0 %v2249
        %2273 = vmatprep.subr.bf16.mxu0 0
        %2274 = vmatpush1.bf16.msra.mxu0 %v2250
        %2275 = vmatprep.subr.bf16.mxu0 0
        %2276 = vmatpush1.bf16.msra.mxu0 0
        %2277 = vmatprep.subr.bf16.mxu0 0
        %2278 = vmatpush1.bf16.msra.mxu0 0
        %2279 = vmatprep.subr.bf16.mxu0 0
        %2280 = vmatpush1.bf16.msra.mxu0 0
        %2281 = vmatprep.subr.bf16.mxu0 0
        %2282 = vmatpush1.bf16.msra.mxu0 0
        %2283 = vmatprep.subr.bf16.mxu0 0
        %2284 = vmatpush1.bf16.msra.mxu0 0
        %2285 = vmatprep.subr.bf16.mxu0 0
        %2286 = vmatpush1.bf16.msra.mxu0 0
        %2287 = vmatprep.subr.bf16.mxu0 0
        %2288 = vmatpush1.bf16.msra.mxu0 0
        %2289 = vmatprep.subr.bf16.mxu0 0
        %2290 = vmatpush1.bf16.msra.mxu0 0
        %2291 = vmatprep.mubr.bf16.mxu0 0
        %2292 = vmatmul.mubr.bf16.gmra.mrb[0].mxu0 %v2193
        %v2293 = vpop.f32.mrb[0].mxu0
        %v2294 = vadd.f32 %v1215, %v2293
        %v2295 = vpop.f32.mrb[0].mxu0
        %v2296 = vpop.f32.mrb[0].mxu0
        %v2297 = vpop.f32.mrb[0].mxu0
        %2298 = vdwg.mxu0
        %v2299 = vlaneseq
        %v2300 = vshrl.u32 %v2299, 7
        %v2301 = vsub.s32 6, %v2300
        %v2302 = vrot.slane %v346, %v2301
        %v2303 = vmul.f32 %v2294, %v2302
        %2304 = vadd.xlane.f32.xlu0 %v2303
        %v2305 = vpop.xlane.xlu0 %2304
        %v2306 = vmul.f32 %v1218, %v2305
        %v2307 = vsub.f32 %v2294, %v2306
        %v2308 = vmul.f32 %v2307, %v2307
        %v2309 = vmul.f32 %v2308, %v2302
        %2310 = vadd.xlane.f32.xlu0 %v2309
        %v2311 = vpop.xlane.xlu0 %2310
        %v2312 = vadd.f32 %v2311, 1e-05
        %v2313 = vrsqrt.pop %v2312
        %v2314 = vmul.f32 %v2307, %v2313
        %v2315 = vmul.f32 %v1216, %v2314
        %v2316 = vadd.f32 %v2315, %v1217
        %vm2317 = vcmp.gt.f32.partialorder %v2316, 0.0
        %v2318 = vmul.f32 %v2316, 0.01
        %v2319 = vsel %vm2317, %v2316, %v2318
        %v2320 = vmul.f32 %v2319, %v1219
        %v2321 = vrot.slane %v2320, 4
        %v2322 = vadd.f32 %v2320, %v2321
        %v2323 = vrot.slane %v2322, 2
        %v2324 = vadd.f32 %v2322, %v2323
        %v2325 = vrot.slane %v2324, 1
        %v2326 = vadd.f32 %v2324, %v2325
        %v2327 = vadd.f32 %v2326, %v1389
        %v2328 = vrot.slane %v969, 7
        %v2330 = vrot.slane %v1004, 6
        %v2332 = vrot.slane %v1039, 5
        %v2334 = vrot.slane %v1074, 4
        %v2336 = vrot.slane %v1109, 3
        %v2338 = vrot.slane %v1144, 2
        %v2340 = vrot.slane %v1179, 1
        %v2342 = vsel %vm1242, %v2328, %v2330
        %v2343 = vsel %vm1244, %v2342, %v2332
        %v2344 = vsel %vm1246, %v2343, %v2334
        %v2345 = vsel %vm1248, %v2344, %v2336
        %v2346 = vsel %vm1250, %v2345, %v2338
        %v2347 = vsel %vm1252, %v2346, %v2340
        %v2348 = vsel %vm1254, %v2347, %v1214
        %v2349 = vpack.c.bf16 %v2348, %v2348
        %s2350 = scalar_lea.vmem %s293, 448 [#allocation7]
        %v2351 = vld [vmem:[%s2350] sm:$0xf]
        %v2352 = vld [vmem:[%s2350 + $0x4] sm:$0xf]
        %v2353 = vld [vmem:[%s2350 + $0x8] sm:$0xf]
        %v2354 = vld [vmem:[%s2350 + $0xc] sm:$0xf]
        %v2355 = vld [vmem:[%s2350 + $0x10] sm:$0xf]
        %v2356 = vld [vmem:[%s2350 + $0x14] sm:$0xf]
        %v2357 = vld [vmem:[%s2350 + $0x18] sm:$0xf]
        %v2358 = vld [vmem:[%s2350 + $0x1c] sm:$0xf]
        %v2359 = vld [vmem:[%s2350 + $0x20] sm:$0xf]
        %v2360 = vld [vmem:[%s2350 + $0x24] sm:$0xf]
        %v2361 = vld [vmem:[%s2350 + $0x28] sm:$0xf]
        %v2362 = vld [vmem:[%s2350 + $0x2c] sm:$0xf]
        %v2363 = vld [vmem:[%s2350 + $0x30] sm:$0xf]
        %v2364 = vld [vmem:[%s2350 + $0x34] sm:$0xf]
        %v2365 = vld [vmem:[%s2350 + $0x38] sm:$0xf]
        %v2366 = vld [vmem:[%s2350 + $0x3c] sm:$0xf]
        %v2383 = vunpack.c.l.b16 %v2351
        %v2384 = vunpack.c.l.b16 %v2352
        %v2385 = vunpack.c.l.b16 %v2353
        %v2386 = vunpack.c.l.b16 %v2354
        %v2387 = vunpack.c.l.b16 %v2355
        %v2388 = vunpack.c.l.b16 %v2356
        %v2389 = vunpack.c.l.b16 %v2357
        %v2390 = vunpack.c.l.b16 %v2358
        %v2391 = vunpack.c.l.b16 %v2359
        %v2392 = vunpack.c.l.b16 %v2360
        %v2393 = vunpack.c.l.b16 %v2361
        %v2394 = vunpack.c.l.b16 %v2362
        %v2395 = vunpack.c.l.b16 %v2363
        %v2396 = vunpack.c.l.b16 %v2364
        %v2397 = vunpack.c.l.b16 %v2365
        %v2398 = vunpack.c.l.b16 %v2366
        %v2399 = vpack.c.b16 %v2384, %v2383
        %v2400 = vpack.c.b16 %v2386, %v2385
        %v2401 = vpack.c.b16 %v2388, %v2387
        %v2402 = vpack.c.b16 %v2390, %v2389
        %v2403 = vpack.c.b16 %v2392, %v2391
        %v2404 = vpack.c.b16 %v2394, %v2393
        %v2405 = vpack.c.b16 %v2396, %v2395
        %v2406 = vpack.c.b16 %v2398, %v2397
        %2415 = vmatprep.subr.bf16.mxu0 0
        %2416 = vmatpush1.bf16.msra.mxu0 %v2399
        %2417 = vmatprep.subr.bf16.mxu0 0
        %2418 = vmatpush1.bf16.msra.mxu0 %v2400
        %2419 = vmatprep.subr.bf16.mxu0 0
        %2420 = vmatpush1.bf16.msra.mxu0 %v2401
        %2421 = vmatprep.subr.bf16.mxu0 0
        %2422 = vmatpush1.bf16.msra.mxu0 %v2402
        %2423 = vmatprep.subr.bf16.mxu0 0
        %2424 = vmatpush1.bf16.msra.mxu0 %v2403
        %2425 = vmatprep.subr.bf16.mxu0 0
        %2426 = vmatpush1.bf16.msra.mxu0 %v2404
        %2427 = vmatprep.subr.bf16.mxu0 0
        %2428 = vmatpush1.bf16.msra.mxu0 %v2405
        %2429 = vmatprep.subr.bf16.mxu0 0
        %2430 = vmatpush1.bf16.msra.mxu0 %v2406
        %2431 = vmatprep.subr.bf16.mxu0 0
        %2432 = vmatpush1.bf16.msra.mxu0 0
        %2433 = vmatprep.subr.bf16.mxu0 0
        %2434 = vmatpush1.bf16.msra.mxu0 0
        %2435 = vmatprep.subr.bf16.mxu0 0
        %2436 = vmatpush1.bf16.msra.mxu0 0
        %2437 = vmatprep.subr.bf16.mxu0 0
        %2438 = vmatpush1.bf16.msra.mxu0 0
        %2439 = vmatprep.subr.bf16.mxu0 0
        %2440 = vmatpush1.bf16.msra.mxu0 0
        %2441 = vmatprep.subr.bf16.mxu0 0
        %2442 = vmatpush1.bf16.msra.mxu0 0
        %2443 = vmatprep.subr.bf16.mxu0 0
        %2444 = vmatpush1.bf16.msra.mxu0 0
        %2445 = vmatprep.subr.bf16.mxu0 0
        %2446 = vmatpush1.bf16.msra.mxu0 0
        %2447 = vmatprep.mubr.bf16.mxu0 0
        %2448 = vmatmul.mubr.bf16.gmra.mrb[0].mxu0 %v2349
        %v2449 = vpop.f32.mrb[0].mxu0
        %v2450 = vadd.f32 %v1215, %v2449
        %v2451 = vpop.f32.mrb[0].mxu0
        %v2452 = vpop.f32.mrb[0].mxu0
        %v2453 = vpop.f32.mrb[0].mxu0
        %2454 = vdwg.mxu0
        %v2455 = vlaneseq
        %v2456 = vshrl.u32 %v2455, 7
        %v2457 = vsub.s32 7, %v2456
        %v2458 = vrot.slane %v346, %v2457
        %v2459 = vmul.f32 %v2450, %v2458
        %2460 = vadd.xlane.f32.xlu0 %v2459
        %v2461 = vpop.xlane.xlu0 %2460
        %v2462 = vmul.f32 %v1218, %v2461
        %v2463 = vsub.f32 %v2450, %v2462
        %v2464 = vmul.f32 %v2463, %v2463
        %v2465 = vmul.f32 %v2464, %v2458
        %2466 = vadd.xlane.f32.xlu0 %v2465
        %v2467 = vpop.xlane.xlu0 %2466
        %v2468 = vadd.f32 %v2467, 1e-05
        %v2469 = vrsqrt.pop %v2468
        %v2470 = vmul.f32 %v2463, %v2469
        %v2471 = vmul.f32 %v1216, %v2470
        %v2472 = vadd.f32 %v2471, %v1217
        %vm2473 = vcmp.gt.f32.partialorder %v2472, 0.0
        %v2474 = vmul.f32 %v2472, 0.01
        %v2475 = vsel %vm2473, %v2472, %v2474
        %v2476 = vmul.f32 %v2475, %v1219
        %v2477 = vrot.slane %v2476, 4
        %v2478 = vadd.f32 %v2476, %v2477
        %v2479 = vrot.slane %v2478, 2
        %v2480 = vadd.f32 %v2478, %v2479
        %v2481 = vrot.slane %v2480, 1
        %v2482 = vadd.f32 %v2480, %v2481
        %v2483 = vadd.f32 %v2482, %v1389
        %v2484 = vsel %vm1242, %v1390, %v1547
        %v2485 = vsel %vm1244, %v2484, %v1703
        %v2486 = vsel %vm1246, %v2485, %v1859
        %v2487 = vsel %vm1248, %v2486, %v2015
        %v2488 = vsel %vm1250, %v2487, %v2171
        %v2489 = vsel %vm1252, %v2488, %v2327
        %v2490 = vsel %vm1254, %v2489, %v2483
        %2491 = vst [vmem:[%s343] sm:$0xff] %v2490
        %s2492 = sand.u32 %s155, 1
        %s2493 = scalar_lea.sflag [#allocation4], %s2492
        %s2494 = sand.u32 %s155, 1
        %s2495 = smul.addr %s2494, 8
        %s2496 = scalar_lea.vmem [#allocation12], %s2495
        // Predicated region
        $region61: #{tpu_custom_call.1} parent=39 // pred_check
          %p2497 = pneg %p165
        $region62: #{tpu_custom_call.1} parent=39 // pred_check_branch
          %2499 = sbr.rel (%p2497) target = $region64
        $region63: #{tpu_custom_call.1} parent=39 // pred_region
          %s2501 = ssub.s32 128, 128
          %2502 = vsyncadd %s2493, %s2501
          %s2503 = smul.addr %s27, 128
          %s2504 = scalar_lea.hbm %s5, %s2503
          %s2506 = sshll.u32 %s2496, 4
          %s2507 = int_to_ptr.vmem [resolvable:$true] %s2506
          %2509 = dma.vmem_to_hbm [thread:$0]  %s2507, 128, %s2504, %s2493
        $region64: #{tpu_custom_call.1} parent=39 // pred_fallthru
          _
      $region40: #{tpu_custom_call.1} parent=5 // pred_fallthru
        _
      %p2510 = scmp.le.s32.totalorder 2, %s22
      // Predicated region
      $region65: #{tpu_custom_call.1} parent=5 // pred_check
        %p2511 = pneg %p2510
      $region66: #{tpu_custom_call.1} parent=5 // pred_check_branch
        %2513 = sbr.rel (%p2511) target = $region68
      $region67: #{tpu_custom_call.1} parent=5 // pred_region
        %s2514 = ssub.s32 %s22, 2
        // Predicated region
        $region69: #{tpu_custom_call.1} parent=67 // pred_check
          %p2515 = pneg %p171
        $region70: #{tpu_custom_call.1} parent=67 // pred_check_branch
          %2517 = sbr.rel (%p2515) target = $region72
        $region71: #{tpu_custom_call.1} parent=67 // pred_region
          %s2518 = sand.u32 %s156, 1
          %s2519 = scalar_lea.sflag [#allocation4], %s2518
          %s2520 = sand.u32 %s156, 1
          %s2521 = smul.addr %s2520, 8
          %s2522 = scalar_lea.vmem [#allocation12], %s2521
          %2523 = dma.done %s2519, 128
        $region72: #{tpu_custom_call.1} parent=67 // pred_fallthru
          _
      $region68: #{tpu_custom_call.1} parent=5 // pred_fallthru
        _
    $region6: #{tpu_custom_call.1} parent=1 // loop_footer
      %s26 = sadd.s32 1, %s22
    $region7: #{tpu_custom_call.1} parent=1 // loop_footer_branch
      %21 = sbr.rel target = $region3
    $region8: #{tpu_custom_call.1} parent=1 // loop_exit
      _
    %2524 = vsyncpa [#allocation3], 1
    %s2525 = scalar_lea.sflag [#allocation3], 1
    %2526 = vsyncpa %s2525, 1
    %2527 = vsyncpa [#allocation8], 1
    %s2528 = scalar_lea.sflag [#allocation8], 1
    %2529 = vsyncpa %s2528, 1
    %2530 = vsyncpa [#allocation11], 1
    %2531 = vsyncpa [#allocation4], 1
    %s2532 = scalar_lea.sflag [#allocation4], 1
    %2533 = vsyncpa %s2532, 1
    %2534 = vsyncpa [#allocation5], 1
    %s2535 = scalar_lea.sflag [#allocation5], 1
    %2536 = vsyncpa %s2535, 1

</llo_original>
